<compile_context>
chip_gen: v7x
topology: tpu7x:2x2x1
jax: 0.10.0
libtpu: 0.0.40
codegen_flags: <defaults>
</compile_context>

<pallas_src>
import jax
import jax.numpy as jnp
from jax import lax
from jax.experimental import pallas as pl
from jax.experimental.pallas import tpu as pltpu


# ----------------------------- model config --------------------------------
IMG = 64              # image size (scaled-down vit_small_patch32_224 structure)
PATCH = 32            # patch size (matches patch32)
IN_CH = 3
DIM = 64              # embed dim
HEADS = 2
HEAD_DIM = DIM // HEADS
DEPTH = 2
MLP_HIDDEN = DIM * 4                 # 256
NUM_CLASSES = 4
NUM_CLASSES_PAD = 128                # lane-dense classifier output
GRID_H = IMG // PATCH
NUM_PATCHES = GRID_H * GRID_H        # 4
SEQ = NUM_PATCHES + 1                # 5 (patches + cls token)
SEQ_PAD = 8                          # padded to a full sublane tile
PATCH_DIM = IN_CH * PATCH * PATCH    # 3072
LN_EPS = 1e-6
ATTN_SCALE = HEAD_DIM ** -0.5
NEG_INF = -1e30

# small-vector pack (svec) row layout, all rows DIM wide
_SV_EMB = 0                          # rows 0..SEQ_PAD-1: fused embed addend
_SV_BLK = SEQ_PAD                    # per block d: base = _SV_BLK + 6*d
#   +0 ln1_g  +1 ln1_b  +2 proj_b  +3 ln2_g  +4 ln2_b  +5 fc2_b
_SV_NORM = SEQ_PAD + 6 * DEPTH       # +0 norm_g, +1 norm_b
SVEC_ROWS = _SV_NORM + 2

# wide-vector pack (wvec) row layout, all rows MLP_HIDDEN wide
#   rows 0..DEPTH-1       : qkv_b (3*DIM, zero-padded to MLP_HIDDEN)
#   rows DEPTH..2*DEPTH-1 : fc1_b
#   row  2*DEPTH          : head_b (NUM_CLASSES_PAD, zero-padded to MLP_HIDDEN)
WVEC_ROWS = 2 * DEPTH + 1


# ----------------------------- fused kernel --------------------------------

def _layernorm(x, g, b):
    mu = jnp.mean(x, axis=-1, keepdims=True)
    xc = x - mu
    var = jnp.mean(xc * xc, axis=-1, keepdims=True)
    return xc * lax.rsqrt(var + LN_EPS) * g + b


def _erf(x):
    # Abramowitz & Stegun 7.1.26, |abs err| <= 1.5e-7 -> f32-exact for our use.
    # Built only from mul/add/exp/abs/where so it lowers on every TPU gen.
    a1, a2, a3, a4, a5 = (0.254829592, -0.284496736, 1.421413741,
                          -1.453152027, 1.061405429)
    pp = 0.3275911
    ax = jnp.abs(x)
    t = 1.0 / (1.0 + pp * ax)
    poly = ((((a5 * t + a4) * t + a3) * t + a2) * t + a1) * t
    y = 1.0 - poly * jnp.exp(-ax * ax)
    return jnp.where(x >= 0, y, -y)


def _gelu_exact(x):
    # timm nn.GELU (exact erf form)
    return 0.5 * x * (1.0 + _erf(x * 0.7071067811865476))


def _vit_fused_kernel(
    patches_ref,   # (B*SEQ_PAD, PATCH_DIM); per sample: row0 zero (cls slot),
                   #   rows 1..SEQ-1 patches, rows SEQ..SEQ_PAD-1 zero padding
    patch_w_ref,   # (PATCH_DIM, DIM)
    wqf_ref,       # (2*DEPTH, DIM, MLP_HIDDEN): rows [0..DEPTH) qkv_w (padded),
                   #   rows [DEPTH..2*DEPTH) fc1_w
    proj_w_ref,    # (DEPTH, DIM, DIM)
    fc2_w_ref,     # (DEPTH, MLP_HIDDEN, DIM)
    head_w_ref,    # (DIM, NUM_CLASSES_PAD)
    svec_ref,      # (SVEC_ROWS, DIM)
    wvec_ref,      # (WVEC_ROWS, MLP_HIDDEN)
    out_ref,       # (B, NUM_CLASSES_PAD)
):
    f32 = jnp.float32
    rows = patches_ref.shape[0]
    nb = rows // SEQ_PAD                      # batch size (static)

    def srow(i):                              # (1, DIM) row of the small pack
        return svec_ref[i:i + 1, :]

    # ---- patch embed over the folded batch: one (rows,3072)@(3072,64) ----
    x = jnp.dot(patches_ref[...], patch_w_ref[...], preferred_element_type=f32)
    # fused addend: per sample row0 = cls + pos[0]; rows 1..SEQ-1 = patch_b +
    # pos[i]; pad rows = 0 (folded into params at prep time).
    emb = svec_ref[_SV_EMB:_SV_EMB + SEQ_PAD, :]           # (SEQ_PAD, DIM)
    x = x + jnp.concatenate([emb] * nb, axis=0)            # (rows, DIM)

    # ---- static additive attention mask (built once):
    #   valid iff same sample block of SEQ_PAD rows AND key index < SEQ.
    row_id = lax.broadcasted_iota(jnp.int32, (rows, rows), 0)
    col_id = lax.broadcasted_iota(jnp.int32, (rows, rows), 1)
    same_sample = (row_id ^ col_id) < SEQ_PAD              # same block of 8
    key_valid = (col_id & (SEQ_PAD - 1)) < SEQ
    amask = jnp.where(same_sample & key_valid,
                      jnp.float32(0.0), jnp.float32(NEG_INF))

    # ---- transformer blocks, fully unrolled, everything stays in VMEM ----
    for d in range(DEPTH):
        base = _SV_BLK + 6 * d

        # ----- attention branch (pre-LN), fused QKV matmul -----
        y = _layernorm(x, srow(base + 0), srow(base + 1))
        qkv = (jnp.dot(y, wqf_ref[d], preferred_element_type=f32)
               + wvec_ref[d:d + 1, :])                     # (rows, 256)
        head_outs = []
        for h in range(HEADS):
            q = qkv[:, h * HEAD_DIM:(h + 1) * HEAD_DIM]
            k = qkv[:, DIM + h * HEAD_DIM: DIM + (h + 1) * HEAD_DIM]
            v = qkv[:, 2 * DIM + h * HEAD_DIM: 2 * DIM + (h + 1) * HEAD_DIM]
            # q*scale @ k^T over the whole folded batch, block-diagonal mask
            s = lax.dot_general(q * ATTN_SCALE, k, (((1,), (1,)), ((), ())),
                                preferred_element_type=f32) + amask
            s = s - jnp.max(s, axis=-1, keepdims=True)
            p = jnp.exp(s)                                 # masked cols -> 0
            p = p / jnp.sum(p, axis=-1, keepdims=True)
            head_outs.append(jnp.dot(p, v, preferred_element_type=f32))
        o = jnp.concatenate(head_outs, axis=1)             # (rows, DIM)
        x = x + jnp.dot(o, proj_w_ref[d], preferred_element_type=f32) \
              + srow(base + 2)

        # ----- MLP branch (pre-LN, exact-erf GELU as in timm nn.GELU) -----
        y = _layernorm(x, srow(base + 3), srow(base + 4))
        h1 = (jnp.dot(y, wqf_ref[DEPTH + d], preferred_element_type=f32)
              + wvec_ref[DEPTH + d:DEPTH + d + 1, :])      # (rows, 256)
        h1 = _gelu_exact(h1)
        x = x + jnp.dot(h1, fc2_w_ref[d], preferred_element_type=f32) \
              + srow(base + 5)

    # ---- final LN on cls rows only (row-wise op), padded classifier head ----
    cls_rows = jnp.concatenate(
        [x[b * SEQ_PAD:b * SEQ_PAD + 1, :] for b in range(nb)], axis=0)  # (nb,DIM)
    y = _layernorm(cls_rows, srow(_SV_NORM), srow(_SV_NORM + 1))
    head_b = wvec_ref[2 * DEPTH:2 * DEPTH + 1, :NUM_CLASSES_PAD]         # (1,128)
    out_ref[...] = (jnp.dot(y, head_w_ref[...], preferred_element_type=f32)
                    + head_b)


# ----------------------------- parameters ----------------------------------

def init_params(key):
    """Parameters in timm-like per-block layout (deterministic synthetic init)."""
    def nrm(k, shape, std=0.02):
        return std * jax.random.normal(k, shape, dtype=jnp.float32)

    keys = jax.random.split(key, 8 + DEPTH)
    p = {
        "patch_w": nrm(keys[0], (PATCH_DIM, DIM)),
        "patch_b": jnp.zeros((DIM,), jnp.float32),
        "cls": nrm(keys[1], (1, 1, DIM)),
        "pos": nrm(keys[2], (1, SEQ, DIM)),
        "norm_g": jnp.ones((DIM,), jnp.float32),
        "norm_b": jnp.zeros((DIM,), jnp.float32),
        "head_w": nrm(keys[3], (DIM, NUM_CLASSES)),
        "head_b": jnp.zeros((NUM_CLASSES,), jnp.float32),
        "blocks": [],
    }
    for d in range(DEPTH):
        bk = jax.random.split(keys[8 + d], 4)
        p["blocks"].append({
            "ln1_g": jnp.ones((DIM,), jnp.float32),
            "ln1_b": jnp.zeros((DIM,), jnp.float32),
            "qkv_w": nrm(bk[0], (DIM, 3 * DIM)),
            "qkv_b": jnp.zeros((3 * DIM,), jnp.float32),
            "proj_w": nrm(bk[1], (DIM, DIM)),
            "proj_b": jnp.zeros((DIM,), jnp.float32),
            "ln2_g": jnp.ones((DIM,), jnp.float32),
            "ln2_b": jnp.zeros((DIM,), jnp.float32),
            "fc1_w": nrm(bk[2], (DIM, MLP_HIDDEN)),
            "fc1_b": jnp.zeros((MLP_HIDDEN,), jnp.float32),
            "fc2_w": nrm(bk[3], (MLP_HIDDEN, DIM)),
            "fc2_b": jnp.zeros((DIM,), jnp.float32),
        })
    return p


def prepare_params(p):
    """One-time layout plumbing (outside the hot path): stack per-block weights
    over depth, fuse qkv+fc1 weight slabs, fold cls/pos/patch-bias into one
    per-row embed addend, and pack all small vectors into two arrays."""
    blks = p["blocks"]

    def stack(name):
        return jnp.stack([b[name] for b in blks], axis=0)

    # qkv weights padded along N from 3*DIM=192 to MLP_HIDDEN=256 (zero cols),
    # then stacked with fc1 weights into one (2*DEPTH, DIM, 256) slab.
    qkv_w = jnp.pad(stack("qkv_w"), ((0, 0), (0, 0), (0, MLP_HIDDEN - 3 * DIM)))
    wqf = jnp.concatenate([qkv_w, stack("fc1_w")], axis=0)

    proj_w = stack("proj_w")                       # (DEPTH, DIM, DIM)
    fc2_w = stack("fc2_w")                         # (DEPTH, MLP_HIDDEN, DIM)
    head_w = jnp.pad(p["head_w"], ((0, 0), (0, NUM_CLASSES_PAD - NUM_CLASSES)))

    # fused embed addend per padded-sequence row:
    #   row 0      -> cls + pos[0]
    #   rows 1..4  -> patch_b + pos[i]
    #   rows 5..7  -> 0 (pad rows)
    pos = p["pos"].reshape(SEQ, DIM)
    emb = jnp.zeros((SEQ_PAD, DIM), jnp.float32)
    emb = emb.at[0].set(p["cls"].reshape(DIM) + pos[0])
    emb = emb.at[1:SEQ].set(p["patch_b"][None, :] + pos[1:SEQ])

    sv_rows = [emb]
    for b in blks:
        sv_rows.append(jnp.stack([b["ln1_g"], b["ln1_b"], b["proj_b"],
                                  b["ln2_g"], b["ln2_b"], b["fc2_b"]], axis=0))
    sv_rows.append(jnp.stack([p["norm_g"], p["norm_b"]], axis=0))
    svec = jnp.concatenate(sv_rows, axis=0)        # (SVEC_ROWS, DIM)
    assert svec.shape == (SVEC_ROWS, DIM)

    qkv_b = jnp.pad(stack("qkv_b"), ((0, 0), (0, MLP_HIDDEN - 3 * DIM)))
    fc1_b = stack("fc1_b")
    head_b = jnp.pad(p["head_b"], (0, MLP_HIDDEN - NUM_CLASSES))[None, :]
    wvec = jnp.concatenate([qkv_b, fc1_b, head_b], axis=0)   # (WVEC_ROWS, 256)
    assert wvec.shape == (WVEC_ROWS, MLP_HIDDEN)

    return {
        "patch_w": p["patch_w"],
        "wqf": wqf,
        "proj_w": proj_w,
        "fc2_w": fc2_w,
        "head_w": head_w,
        "svec": svec,
        "wvec": wvec,
    }


# ----------------------------- forward --------------------------------------

def _full_map(ndim):
    return lambda i: (0,) * ndim


def tiny_vit_forward(x, kp):
    """x: [B, C, H, W] NCHW float32 -> logits [B, NUM_CLASSES]."""
    B, C, H, W = x.shape
    gh, gw = H // PATCH, W // PATCH

    # patch extraction glue: stride==kernel conv == per-patch flatten in
    # (c, kh, kw) order, exactly as PyTorch Conv2d weight flattening.
    patches = (
        x.reshape(B, C, gh, PATCH, gw, PATCH)
        .transpose(0, 2, 4, 1, 3, 5)
        .reshape(B, gh * gw, C * PATCH * PATCH)
    )
    # prepend a zero cls-slot row and zero-pad the sequence 5 -> 8 rows, then
    # fold the batch into the sublane axis: (B*SEQ_PAD, PATCH_DIM).
    patches = jnp.pad(patches, ((0, 0), (1, SEQ_PAD - SEQ), (0, 0)))
    patches = patches.reshape(B * SEQ_PAD, PATCH_DIM)

    args = (patches, kp["patch_w"], kp["wqf"], kp["proj_w"], kp["fc2_w"],
            kp["head_w"], kp["svec"], kp["wvec"])

    logits_pad = pl.pallas_call(
        _vit_fused_kernel,
        out_shape=jax.ShapeDtypeStruct((B, NUM_CLASSES_PAD), jnp.float32),
        grid=(1,),                                  # whole batch in one step
        in_specs=[pl.BlockSpec(a.shape, _full_map(a.ndim)) for a in args],
        out_specs=pl.BlockSpec((B, NUM_CLASSES_PAD), lambda i: (0, 0)),
        compiler_params=pltpu.CompilerParams(
            dimension_semantics=("arbitrary",),
        ),
    )(*args)

    return logits_pad[:, :NUM_CLASSES]


# ----------------------------- main ------------------------------------------

if __name__ == "__main__":
    key = jax.random.PRNGKey(0)
    k_param, k_input = jax.random.split(key)
    params = init_params(k_param)
    kparams = prepare_params(params)          # one-time layout prep, outside jit
    x = jax.random.normal(k_input, (2, IN_CH, IMG, IMG), dtype=jnp.float32)

    fwd = jax.jit(tiny_vit_forward)
    logits = fwd(x, kparams)
    jax.block_until_ready(logits)

    assert logits.shape == (2, NUM_CLASSES)
    assert logits.dtype == jnp.float32
    assert bool(jnp.all(jnp.isfinite(logits)))
    print("KERNEL_OK")
</pallas_src>

<mosaic_0001>
module attributes {stable_mosaic.version = 11 : i64} {
  func.func @_vit_fused_kernel(%arg0: i32, %arg1: memref<16x3072xf32, #tpu.memory_space<vmem>>, %arg2: memref<3072x64xf32, #tpu.memory_space<vmem>>, %arg3: memref<4x64x256xf32, #tpu.memory_space<vmem>>, %arg4: memref<2x64x64xf32, #tpu.memory_space<vmem>>, %arg5: memref<2x256x64xf32, #tpu.memory_space<vmem>>, %arg6: memref<64x128xf32, #tpu.memory_space<vmem>>, %arg7: memref<22x64xf32, #tpu.memory_space<vmem>>, %arg8: memref<5x256xf32, #tpu.memory_space<vmem>>, %arg9: memref<2x128xf32, #tpu.memory_space<vmem>>) attributes {dimension_semantics = [#tpu.dimension_semantics<arbitrary>], iteration_bounds = array<i64: 1>, scalar_prefetch = 0 : i64, scratch_operands = 0 : i64, tpu.core_type = #tpu.core_type<tc>, window_params = [{pipeline_mode = #tpu.pipeline_mode<synchronous>, transform_indices = @transform_0, window_bounds = array<i64: 16, 3072>}, {pipeline_mode = #tpu.pipeline_mode<synchronous>, transform_indices = @transform_1, window_bounds = array<i64: 3072, 64>}, {pipeline_mode = #tpu.pipeline_mode<synchronous>, transform_indices = @transform_2, window_bounds = array<i64: 4, 64, 256>}, {pipeline_mode = #tpu.pipeline_mode<synchronous>, transform_indices = @transform_3, window_bounds = array<i64: 2, 64, 64>}, {pipeline_mode = #tpu.pipeline_mode<synchronous>, transform_indices = @transform_4, window_bounds = array<i64: 2, 256, 64>}, {pipeline_mode = #tpu.pipeline_mode<synchronous>, transform_indices = @transform_5, window_bounds = array<i64: 64, 128>}, {pipeline_mode = #tpu.pipeline_mode<synchronous>, transform_indices = @transform_6, window_bounds = array<i64: 22, 64>}, {pipeline_mode = #tpu.pipeline_mode<synchronous>, transform_indices = @transform_7, window_bounds = array<i64: 5, 256>}, {pipeline_mode = #tpu.pipeline_mode<synchronous>, transform_indices = @transform_8, window_bounds = array<i64: 2, 128>}]} {
    %c0 = arith.constant 0 : index
    %c0_0 = arith.constant 0 : index
    %0 = vector.load %arg1[%c0, %c0_0] : memref<16x3072xf32, #tpu.memory_space<vmem>>, vector<16x3072xf32>
    %c0_1 = arith.constant 0 : index
    %c0_2 = arith.constant 0 : index
    %1 = vector.load %arg2[%c0_1, %c0_2] : memref<3072x64xf32, #tpu.memory_space<vmem>>, vector<3072x64xf32>
    %cst = arith.constant dense<0.000000e+00> : vector<16x64xf32>
    %2 = tpu.matmul %0, %1, %cst {dimension_numbers = #tpu.dot_dimension_numbers<[1], [0], [0], [1], [0, 0, 1, 1], [], []>} : vector<16x3072xf32>, vector<3072x64xf32>, vector<16x64xf32> -> vector<16x64xf32>
    %c0_3 = arith.constant 0 : index
    %c0_4 = arith.constant 0 : index
    %3 = vector.load %arg7[%c0_3, %c0_4] : memref<22x64xf32, #tpu.memory_space<vmem>>, vector<8x64xf32>
    %4 = tpu.concatenate %3, %3 in 0 : vector<8x64xf32>, vector<8x64xf32> -> vector<16x64xf32>
    %5 = arith.addf %2, %4 : vector<16x64xf32>
    %6 = tpu.iota {dimensions = array<i32: 0>} : vector<16x16xi32>
    %7 = tpu.iota {dimensions = array<i32: 1>} : vector<16x16xi32>
    %8 = arith.xori %6, %7 : vector<16x16xi32>
    %c8_i32 = arith.constant 8 : i32
    %9 = vector.broadcast %c8_i32 : i32 to vector<16x16xi32>
    %10 = arith.cmpi slt, %8, %9 : vector<16x16xi32>
    %c7_i32 = arith.constant 7 : i32
    %11 = vector.broadcast %c7_i32 : i32 to vector<16x16xi32>
    %12 = arith.andi %7, %11 : vector<16x16xi32>
    %c5_i32 = arith.constant 5 : i32
    %13 = vector.broadcast %c5_i32 : i32 to vector<16x16xi32>
    %14 = arith.cmpi slt, %12, %13 : vector<16x16xi32>
    %15 = arith.andi %10, %14 : vector<16x16xi1>
    %cst_5 = arith.constant 0.000000e+00 : f32
    %cst_6 = arith.constant -1.000000e+30 : f32
    %16 = vector.broadcast %cst_5 : f32 to vector<16x16xf32>
    %17 = vector.broadcast %cst_6 : f32 to vector<16x16xf32>
    %18 = arith.select %15, %16, %17 : vector<16x16xi1>, vector<16x16xf32>
    %c8 = arith.constant 8 : index
    %c0_7 = arith.constant 0 : index
    %19 = vector.load %arg7[%c8, %c0_7] : memref<22x64xf32, #tpu.memory_space<vmem>>, vector<1x64xf32>
    %c9 = arith.constant 9 : index
    %c0_8 = arith.constant 0 : index
    %20 = vector.load %arg7[%c9, %c0_8] : memref<22x64xf32, #tpu.memory_space<vmem>>, vector<1x64xf32>
    %cst_9 = arith.constant dense<0.000000e+00> : vector<16xf32>
    %21 = vector.multi_reduction <add>, %5, %cst_9 [1] : vector<16x64xf32> to vector<16xf32>
    %22 = vector.shape_cast %21 : vector<16xf32> to vector<16x1xf32>
    %cst_10 = arith.constant 6.400000e+01 : f32
    %23 = vector.broadcast %cst_10 : f32 to vector<16x1xf32>
    %24 = arith.divf %22, %23 : vector<16x1xf32>
    %25 = vector.broadcast %24 : vector<16x1xf32> to vector<16x64xf32>
    %26 = arith.subf %5, %25 : vector<16x64xf32>
    %27 = arith.mulf %26, %26 : vector<16x64xf32>
    %cst_11 = arith.constant dense<0.000000e+00> : vector<16xf32>
    %28 = vector.multi_reduction <add>, %27, %cst_11 [1] : vector<16x64xf32> to vector<16xf32>
    %29 = vector.shape_cast %28 : vector<16xf32> to vector<16x1xf32>
    %cst_12 = arith.constant 6.400000e+01 : f32
    %30 = vector.broadcast %cst_12 : f32 to vector<16x1xf32>
    %31 = arith.divf %29, %30 : vector<16x1xf32>
    %cst_13 = arith.constant 9.99999997E-7 : f32
    %32 = vector.broadcast %cst_13 : f32 to vector<16x1xf32>
    %33 = arith.addf %31, %32 : vector<16x1xf32>
    %34 = math.rsqrt %33 : vector<16x1xf32>
    %35 = vector.broadcast %34 : vector<16x1xf32> to vector<16x64xf32>
    %36 = arith.mulf %26, %35 : vector<16x64xf32>
    %37 = vector.broadcast %19 : vector<1x64xf32> to vector<16x64xf32>
    %38 = arith.mulf %36, %37 : vector<16x64xf32>
    %39 = vector.broadcast %20 : vector<1x64xf32> to vector<16x64xf32>
    %40 = arith.addf %38, %39 : vector<16x64xf32>
    %c0_14 = arith.constant 0 : index
    %c0_15 = arith.constant 0 : index
    %c0_16 = arith.constant 0 : index
    %41 = vector.load %arg3[%c0_14, %c0_15, %c0_16] : memref<4x64x256xf32, #tpu.memory_space<vmem>>, vector<1x64x256xf32>
    %42 = vector.shape_cast %41 : vector<1x64x256xf32> to vector<64x256xf32>
    %cst_17 = arith.constant dense<0.000000e+00> : vector<16x256xf32>
    %43 = tpu.matmul %40, %42, %cst_17 {dimension_numbers = #tpu.dot_dimension_numbers<[1], [0], [0], [1], [0, 0, 1, 1], [], []>} : vector<16x64xf32>, vector<64x256xf32>, vector<16x256xf32> -> vector<16x256xf32>
    %c0_18 = arith.constant 0 : index
    %c0_19 = arith.constant 0 : index
    %44 = vector.load %arg8[%c0_18, %c0_19] : memref<5x256xf32, #tpu.memory_space<vmem>>, vector<1x256xf32>
    %45 = vector.broadcast %44 : vector<1x256xf32> to vector<16x256xf32>
    %46 = arith.addf %43, %45 : vector<16x256xf32>
    %47 = vector.extract_strided_slice %46 {offsets = [0, 0], sizes = [16, 32], strides = [1, 1]} : vector<16x256xf32> to vector<16x32xf32>
    %48 = vector.extract_strided_slice %46 {offsets = [0, 64], sizes = [16, 32], strides = [1, 1]} : vector<16x256xf32> to vector<16x32xf32>
    %49 = vector.extract_strided_slice %46 {offsets = [0, 128], sizes = [16, 32], strides = [1, 1]} : vector<16x256xf32> to vector<16x32xf32>
    %cst_20 = arith.constant 0.176776692 : f32
    %50 = vector.broadcast %cst_20 : f32 to vector<16x32xf32>
    %51 = arith.mulf %47, %50 : vector<16x32xf32>
    %cst_21 = arith.constant dense<0.000000e+00> : vector<16x16xf32>
    %52 = tpu.matmul %51, %48, %cst_21 {dimension_numbers = #tpu.dot_dimension_numbers<[1], [1], [0], [0], [0, 0, 1, 0], [], []>} : vector<16x32xf32>, vector<16x32xf32>, vector<16x16xf32> -> vector<16x16xf32>
    %53 = arith.addf %52, %18 : vector<16x16xf32>
    %cst_22 = arith.constant dense<0xFF800000> : vector<16xf32>
    %54 = vector.multi_reduction <maximumf>, %53, %cst_22 [1] : vector<16x16xf32> to vector<16xf32>
    %55 = vector.shape_cast %54 : vector<16xf32> to vector<16x1xf32>
    %56 = vector.broadcast %55 : vector<16x1xf32> to vector<16x16xf32>
    %57 = arith.subf %53, %56 : vector<16x16xf32>
    %58 = math.exp %57 : vector<16x16xf32>
    %cst_23 = arith.constant dense<0.000000e+00> : vector<16xf32>
    %59 = vector.multi_reduction <add>, %58, %cst_23 [1] : vector<16x16xf32> to vector<16xf32>
    %60 = vector.shape_cast %59 : vector<16xf32> to vector<16x1xf32>
    %61 = vector.broadcast %60 : vector<16x1xf32> to vector<16x16xf32>
    %62 = arith.divf %58, %61 : vector<16x16xf32>
    %cst_24 = arith.constant dense<0.000000e+00> : vector<16x32xf32>
    %63 = tpu.matmul %62, %49, %cst_24 {dimension_numbers = #tpu.dot_dimension_numbers<[1], [0], [0], [1], [0, 0, 1, 1], [], []>} : vector<16x16xf32>, vector<16x32xf32>, vector<16x32xf32> -> vector<16x32xf32>
    %64 = vector.extract_strided_slice %46 {offsets = [0, 32], sizes = [16, 32], strides = [1, 1]} : vector<16x256xf32> to vector<16x32xf32>
    %65 = vector.extract_strided_slice %46 {offsets = [0, 96], sizes = [16, 32], strides = [1, 1]} : vector<16x256xf32> to vector<16x32xf32>
    %66 = vector.extract_strided_slice %46 {offsets = [0, 160], sizes = [16, 32], strides = [1, 1]} : vector<16x256xf32> to vector<16x32xf32>
    %cst_25 = arith.constant 0.176776692 : f32
    %67 = vector.broadcast %cst_25 : f32 to vector<16x32xf32>
    %68 = arith.mulf %64, %67 : vector<16x32xf32>
    %cst_26 = arith.constant dense<0.000000e+00> : vector<16x16xf32>
    %69 = tpu.matmul %68, %65, %cst_26 {dimension_numbers = #tpu.dot_dimension_numbers<[1], [1], [0], [0], [0, 0, 1, 0], [], []>} : vector<16x32xf32>, vector<16x32xf32>, vector<16x16xf32> -> vector<16x16xf32>
    %70 = arith.addf %69, %18 : vector<16x16xf32>
    %cst_27 = arith.constant dense<0xFF800000> : vector<16xf32>
    %71 = vector.multi_reduction <maximumf>, %70, %cst_27 [1] : vector<16x16xf32> to vector<16xf32>
    %72 = vector.shape_cast %71 : vector<16xf32> to vector<16x1xf32>
    %73 = vector.broadcast %72 : vector<16x1xf32> to vector<16x16xf32>
    %74 = arith.subf %70, %73 : vector<16x16xf32>
    %75 = math.exp %74 : vector<16x16xf32>
    %cst_28 = arith.constant dense<0.000000e+00> : vector<16xf32>
    %76 = vector.multi_reduction <add>, %75, %cst_28 [1] : vector<16x16xf32> to vector<16xf32>
    %77 = vector.shape_cast %76 : vector<16xf32> to vector<16x1xf32>
    %78 = vector.broadcast %77 : vector<16x1xf32> to vector<16x16xf32>
    %79 = arith.divf %75, %78 : vector<16x16xf32>
    %cst_29 = arith.constant dense<0.000000e+00> : vector<16x32xf32>
    %80 = tpu.matmul %79, %66, %cst_29 {dimension_numbers = #tpu.dot_dimension_numbers<[1], [0], [0], [1], [0, 0, 1, 1], [], []>} : vector<16x16xf32>, vector<16x32xf32>, vector<16x32xf32> -> vector<16x32xf32>
    %81 = tpu.concatenate %63, %80 in 1 : vector<16x32xf32>, vector<16x32xf32> -> vector<16x64xf32>
    %c0_30 = arith.constant 0 : index
    %c0_31 = arith.constant 0 : index
    %c0_32 = arith.constant 0 : index
    %82 = vector.load %arg4[%c0_30, %c0_31, %c0_32] : memref<2x64x64xf32, #tpu.memory_space<vmem>>, vector<1x64x64xf32>
    %83 = vector.shape_cast %82 : vector<1x64x64xf32> to vector<64x64xf32>
    %cst_33 = arith.constant dense<0.000000e+00> : vector<16x64xf32>
    %84 = tpu.matmul %81, %83, %cst_33 {dimension_numbers = #tpu.dot_dimension_numbers<[1], [0], [0], [1], [0, 0, 1, 1], [], []>} : vector<16x64xf32>, vector<64x64xf32>, vector<16x64xf32> -> vector<16x64xf32>
    %85 = arith.addf %5, %84 : vector<16x64xf32>
    %c10 = arith.constant 10 : index
    %c0_34 = arith.constant 0 : index
    %86 = vector.load %arg7[%c10, %c0_34] : memref<22x64xf32, #tpu.memory_space<vmem>>, vector<1x64xf32>
    %87 = vector.broadcast %86 : vector<1x64xf32> to vector<16x64xf32>
    %88 = arith.addf %85, %87 : vector<16x64xf32>
    %c11 = arith.constant 11 : index
    %c0_35 = arith.constant 0 : index
    %89 = vector.load %arg7[%c11, %c0_35] : memref<22x64xf32, #tpu.memory_space<vmem>>, vector<1x64xf32>
    %c12 = arith.constant 12 : index
    %c0_36 = arith.constant 0 : index
    %90 = vector.load %arg7[%c12, %c0_36] : memref<22x64xf32, #tpu.memory_space<vmem>>, vector<1x64xf32>
    %cst_37 = arith.constant dense<0.000000e+00> : vector<16xf32>
    %91 = vector.multi_reduction <add>, %88, %cst_37 [1] : vector<16x64xf32> to vector<16xf32>
    %92 = vector.shape_cast %91 : vector<16xf32> to vector<16x1xf32>
    %cst_38 = arith.constant 6.400000e+01 : f32
    %93 = vector.broadcast %cst_38 : f32 to vector<16x1xf32>
    %94 = arith.divf %92, %93 : vector<16x1xf32>
    %95 = vector.broadcast %94 : vector<16x1xf32> to vector<16x64xf32>
    %96 = arith.subf %88, %95 : vector<16x64xf32>
    %97 = arith.mulf %96, %96 : vector<16x64xf32>
    %cst_39 = arith.constant dense<0.000000e+00> : vector<16xf32>
    %98 = vector.multi_reduction <add>, %97, %cst_39 [1] : vector<16x64xf32> to vector<16xf32>
    %99 = vector.shape_cast %98 : vector<16xf32> to vector<16x1xf32>
    %cst_40 = arith.constant 6.400000e+01 : f32
    %100 = vector.broadcast %cst_40 : f32 to vector<16x1xf32>
    %101 = arith.divf %99, %100 : vector<16x1xf32>
    %cst_41 = arith.constant 9.99999997E-7 : f32
    %102 = vector.broadcast %cst_41 : f32 to vector<16x1xf32>
    %103 = arith.addf %101, %102 : vector<16x1xf32>
    %104 = math.rsqrt %103 : vector<16x1xf32>
    %105 = vector.broadcast %104 : vector<16x1xf32> to vector<16x64xf32>
    %106 = arith.mulf %96, %105 : vector<16x64xf32>
    %107 = vector.broadcast %89 : vector<1x64xf32> to vector<16x64xf32>
    %108 = arith.mulf %106, %107 : vector<16x64xf32>
    %109 = vector.broadcast %90 : vector<1x64xf32> to vector<16x64xf32>
    %110 = arith.addf %108, %109 : vector<16x64xf32>
    %c2 = arith.constant 2 : index
    %c0_42 = arith.constant 0 : index
    %c0_43 = arith.constant 0 : index
    %111 = vector.load %arg3[%c2, %c0_42, %c0_43] : memref<4x64x256xf32, #tpu.memory_space<vmem>>, vector<1x64x256xf32>
    %112 = vector.shape_cast %111 : vector<1x64x256xf32> to vector<64x256xf32>
    %cst_44 = arith.constant dense<0.000000e+00> : vector<16x256xf32>
    %113 = tpu.matmul %110, %112, %cst_44 {dimension_numbers = #tpu.dot_dimension_numbers<[1], [0], [0], [1], [0, 0, 1, 1], [], []>} : vector<16x64xf32>, vector<64x256xf32>, vector<16x256xf32> -> vector<16x256xf32>
    %c2_45 = arith.constant 2 : index
    %c0_46 = arith.constant 0 : index
    %114 = vector.load %arg8[%c2_45, %c0_46] : memref<5x256xf32, #tpu.memory_space<vmem>>, vector<1x256xf32>
    %115 = vector.broadcast %114 : vector<1x256xf32> to vector<16x256xf32>
    %116 = arith.addf %113, %115 : vector<16x256xf32>
    %cst_47 = arith.constant 5.000000e-01 : f32
    %117 = vector.broadcast %cst_47 : f32 to vector<16x256xf32>
    %118 = arith.mulf %117, %116 : vector<16x256xf32>
    %cst_48 = arith.constant 0.707106769 : f32
    %119 = vector.broadcast %cst_48 : f32 to vector<16x256xf32>
    %120 = arith.mulf %116, %119 : vector<16x256xf32>
    %121 = math.absf %120 : vector<16x256xf32>
    %cst_49 = arith.constant 0.327591091 : f32
    %122 = vector.broadcast %cst_49 : f32 to vector<16x256xf32>
    %123 = arith.mulf %122, %121 : vector<16x256xf32>
    %cst_50 = arith.constant 1.000000e+00 : f32
    %124 = vector.broadcast %cst_50 : f32 to vector<16x256xf32>
    %125 = arith.addf %124, %123 : vector<16x256xf32>
    %cst_51 = arith.constant 1.000000e+00 : f32
    %126 = vector.broadcast %cst_51 : f32 to vector<16x256xf32>
    %127 = arith.divf %126, %125 : vector<16x256xf32>
    %cst_52 = arith.constant 1.06140542 : f32
    %128 = vector.broadcast %cst_52 : f32 to vector<16x256xf32>
    %129 = arith.mulf %128, %127 : vector<16x256xf32>
    %cst_53 = arith.constant -1.45315206 : f32
    %130 = vector.broadcast %cst_53 : f32 to vector<16x256xf32>
    %131 = arith.addf %129, %130 : vector<16x256xf32>
    %132 = arith.mulf %131, %127 : vector<16x256xf32>
    %cst_54 = arith.constant 1.42141378 : f32
    %133 = vector.broadcast %cst_54 : f32 to vector<16x256xf32>
    %134 = arith.addf %132, %133 : vector<16x256xf32>
    %135 = arith.mulf %134, %127 : vector<16x256xf32>
    %cst_55 = arith.constant -0.284496725 : f32
    %136 = vector.broadcast %cst_55 : f32 to vector<16x256xf32>
    %137 = arith.addf %135, %136 : vector<16x256xf32>
    %138 = arith.mulf %137, %127 : vector<16x256xf32>
    %cst_56 = arith.constant 0.254829586 : f32
    %139 = vector.broadcast %cst_56 : f32 to vector<16x256xf32>
    %140 = arith.addf %138, %139 : vector<16x256xf32>
    %141 = arith.mulf %140, %127 : vector<16x256xf32>
    %cst_57 = arith.constant 0.000000e+00 : f32
    %142 = vector.broadcast %cst_57 : f32 to vector<16x256xf32>
    %143 = arith.subf %142, %121 : vector<16x256xf32>
    %144 = arith.mulf %143, %121 : vector<16x256xf32>
    %145 = math.exp %144 : vector<16x256xf32>
    %146 = arith.mulf %141, %145 : vector<16x256xf32>
    %cst_58 = arith.constant 1.000000e+00 : f32
    %147 = vector.broadcast %cst_58 : f32 to vector<16x256xf32>
    %148 = arith.subf %147, %146 : vector<16x256xf32>
    %cst_59 = arith.constant 0.000000e+00 : f32
    %149 = vector.broadcast %cst_59 : f32 to vector<16x256xf32>
    %150 = arith.cmpf oge, %120, %149 : vector<16x256xf32>
    %cst_60 = arith.constant 0.000000e+00 : f32
    %151 = vector.broadcast %cst_60 : f32 to vector<16x256xf32>
    %152 = arith.subf %151, %148 : vector<16x256xf32>
    %153 = arith.select %150, %148, %152 : vector<16x256xi1>, vector<16x256xf32>
    %cst_61 = arith.constant 1.000000e+00 : f32
    %154 = vector.broadcast %cst_61 : f32 to vector<16x256xf32>
    %155 = arith.addf %154, %153 : vector<16x256xf32>
    %156 = arith.mulf %118, %155 : vector<16x256xf32>
    %c0_62 = arith.constant 0 : index
    %c0_63 = arith.constant 0 : index
    %c0_64 = arith.constant 0 : index
    %157 = vector.load %arg5[%c0_62, %c0_63, %c0_64] : memref<2x256x64xf32, #tpu.memory_space<vmem>>, vector<1x256x64xf32>
    %158 = vector.shape_cast %157 : vector<1x256x64xf32> to vector<256x64xf32>
    %cst_65 = arith.constant dense<0.000000e+00> : vector<16x64xf32>
    %159 = tpu.matmul %156, %158, %cst_65 {dimension_numbers = #tpu.dot_dimension_numbers<[1], [0], [0], [1], [0, 0, 1, 1], [], []>} : vector<16x256xf32>, vector<256x64xf32>, vector<16x64xf32> -> vector<16x64xf32>
    %160 = arith.addf %88, %159 : vector<16x64xf32>
    %c13 = arith.constant 13 : index
    %c0_66 = arith.constant 0 : index
    %161 = vector.load %arg7[%c13, %c0_66] : memref<22x64xf32, #tpu.memory_space<vmem>>, vector<1x64xf32>
    %162 = vector.broadcast %161 : vector<1x64xf32> to vector<16x64xf32>
    %163 = arith.addf %160, %162 : vector<16x64xf32>
    %c14 = arith.constant 14 : index
    %c0_67 = arith.constant 0 : index
    %164 = vector.load %arg7[%c14, %c0_67] : memref<22x64xf32, #tpu.memory_space<vmem>>, vector<1x64xf32>
    %c15 = arith.constant 15 : index
    %c0_68 = arith.constant 0 : index
    %165 = vector.load %arg7[%c15, %c0_68] : memref<22x64xf32, #tpu.memory_space<vmem>>, vector<1x64xf32>
    %cst_69 = arith.constant dense<0.000000e+00> : vector<16xf32>
    %166 = vector.multi_reduction <add>, %163, %cst_69 [1] : vector<16x64xf32> to vector<16xf32>
    %167 = vector.shape_cast %166 : vector<16xf32> to vector<16x1xf32>
    %cst_70 = arith.constant 6.400000e+01 : f32
    %168 = vector.broadcast %cst_70 : f32 to vector<16x1xf32>
    %169 = arith.divf %167, %168 : vector<16x1xf32>
    %170 = vector.broadcast %169 : vector<16x1xf32> to vector<16x64xf32>
    %171 = arith.subf %163, %170 : vector<16x64xf32>
    %172 = arith.mulf %171, %171 : vector<16x64xf32>
    %cst_71 = arith.constant dense<0.000000e+00> : vector<16xf32>
    %173 = vector.multi_reduction <add>, %172, %cst_71 [1] : vector<16x64xf32> to vector<16xf32>
    %174 = vector.shape_cast %173 : vector<16xf32> to vector<16x1xf32>
    %cst_72 = arith.constant 6.400000e+01 : f32
    %175 = vector.broadcast %cst_72 : f32 to vector<16x1xf32>
    %176 = arith.divf %174, %175 : vector<16x1xf32>
    %cst_73 = arith.constant 9.99999997E-7 : f32
    %177 = vector.broadcast %cst_73 : f32 to vector<16x1xf32>
    %178 = arith.addf %176, %177 : vector<16x1xf32>
    %179 = math.rsqrt %178 : vector<16x1xf32>
    %180 = vector.broadcast %179 : vector<16x1xf32> to vector<16x64xf32>
    %181 = arith.mulf %171, %180 : vector<16x64xf32>
    %182 = vector.broadcast %164 : vector<1x64xf32> to vector<16x64xf32>
    %183 = arith.mulf %181, %182 : vector<16x64xf32>
    %184 = vector.broadcast %165 : vector<1x64xf32> to vector<16x64xf32>
    %185 = arith.addf %183, %184 : vector<16x64xf32>
    %c1 = arith.constant 1 : index
    %c0_74 = arith.constant 0 : index
    %c0_75 = arith.constant 0 : index
    %186 = vector.load %arg3[%c1, %c0_74, %c0_75] : memref<4x64x256xf32, #tpu.memory_space<vmem>>, vector<1x64x256xf32>
    %187 = vector.shape_cast %186 : vector<1x64x256xf32> to vector<64x256xf32>
    %cst_76 = arith.constant dense<0.000000e+00> : vector<16x256xf32>
    %188 = tpu.matmul %185, %187, %cst_76 {dimension_numbers = #tpu.dot_dimension_numbers<[1], [0], [0], [1], [0, 0, 1, 1], [], []>} : vector<16x64xf32>, vector<64x256xf32>, vector<16x256xf32> -> vector<16x256xf32>
    %c1_77 = arith.constant 1 : index
    %c0_78 = arith.constant 0 : index
    %189 = vector.load %arg8[%c1_77, %c0_78] : memref<5x256xf32, #tpu.memory_space<vmem>>, vector<1x256xf32>
    %190 = vector.broadcast %189 : vector<1x256xf32> to vector<16x256xf32>
    %191 = arith.addf %188, %190 : vector<16x256xf32>
    %192 = vector.extract_strided_slice %191 {offsets = [0, 0], sizes = [16, 32], strides = [1, 1]} : vector<16x256xf32> to vector<16x32xf32>
    %193 = vector.extract_strided_slice %191 {offsets = [0, 64], sizes = [16, 32], strides = [1, 1]} : vector<16x256xf32> to vector<16x32xf32>
    %194 = vector.extract_strided_slice %191 {offsets = [0, 128], sizes = [16, 32], strides = [1, 1]} : vector<16x256xf32> to vector<16x32xf32>
    %cst_79 = arith.constant 0.176776692 : f32
    %195 = vector.broadcast %cst_79 : f32 to vector<16x32xf32>
    %196 = arith.mulf %192, %195 : vector<16x32xf32>
    %cst_80 = arith.constant dense<0.000000e+00> : vector<16x16xf32>
    %197 = tpu.matmul %196, %193, %cst_80 {dimension_numbers = #tpu.dot_dimension_numbers<[1], [1], [0], [0], [0, 0, 1, 0], [], []>} : vector<16x32xf32>, vector<16x32xf32>, vector<16x16xf32> -> vector<16x16xf32>
    %198 = arith.addf %197, %18 : vector<16x16xf32>
    %cst_81 = arith.constant dense<0xFF800000> : vector<16xf32>
    %199 = vector.multi_reduction <maximumf>, %198, %cst_81 [1] : vector<16x16xf32> to vector<16xf32>
    %200 = vector.shape_cast %199 : vector<16xf32> to vector<16x1xf32>
    %201 = vector.broadcast %200 : vector<16x1xf32> to vector<16x16xf32>
    %202 = arith.subf %198, %201 : vector<16x16xf32>
    %203 = math.exp %202 : vector<16x16xf32>
    %cst_82 = arith.constant dense<0.000000e+00> : vector<16xf32>
    %204 = vector.multi_reduction <add>, %203, %cst_82 [1] : vector<16x16xf32> to vector<16xf32>
    %205 = vector.shape_cast %204 : vector<16xf32> to vector<16x1xf32>
    %206 = vector.broadcast %205 : vector<16x1xf32> to vector<16x16xf32>
    %207 = arith.divf %203, %206 : vector<16x16xf32>
    %cst_83 = arith.constant dense<0.000000e+00> : vector<16x32xf32>
    %208 = tpu.matmul %207, %194, %cst_83 {dimension_numbers = #tpu.dot_dimension_numbers<[1], [0], [0], [1], [0, 0, 1, 1], [], []>} : vector<16x16xf32>, vector<16x32xf32>, vector<16x32xf32> -> vector<16x32xf32>
    %209 = vector.extract_strided_slice %191 {offsets = [0, 32], sizes = [16, 32], strides = [1, 1]} : vector<16x256xf32> to vector<16x32xf32>
    %210 = vector.extract_strided_slice %191 {offsets = [0, 96], sizes = [16, 32], strides = [1, 1]} : vector<16x256xf32> to vector<16x32xf32>
    %211 = vector.extract_strided_slice %191 {offsets = [0, 160], sizes = [16, 32], strides = [1, 1]} : vector<16x256xf32> to vector<16x32xf32>
    %cst_84 = arith.constant 0.176776692 : f32
    %212 = vector.broadcast %cst_84 : f32 to vector<16x32xf32>
    %213 = arith.mulf %209, %212 : vector<16x32xf32>
    %cst_85 = arith.constant dense<0.000000e+00> : vector<16x16xf32>
    %214 = tpu.matmul %213, %210, %cst_85 {dimension_numbers = #tpu.dot_dimension_numbers<[1], [1], [0], [0], [0, 0, 1, 0], [], []>} : vector<16x32xf32>, vector<16x32xf32>, vector<16x16xf32> -> vector<16x16xf32>
    %215 = arith.addf %214, %18 : vector<16x16xf32>
    %cst_86 = arith.constant dense<0xFF800000> : vector<16xf32>
    %216 = vector.multi_reduction <maximumf>, %215, %cst_86 [1] : vector<16x16xf32> to vector<16xf32>
    %217 = vector.shape_cast %216 : vector<16xf32> to vector<16x1xf32>
    %218 = vector.broadcast %217 : vector<16x1xf32> to vector<16x16xf32>
    %219 = arith.subf %215, %218 : vector<16x16xf32>
    %220 = math.exp %219 : vector<16x16xf32>
    %cst_87 = arith.constant dense<0.000000e+00> : vector<16xf32>
    %221 = vector.multi_reduction <add>, %220, %cst_87 [1] : vector<16x16xf32> to vector<16xf32>
    %222 = vector.shape_cast %221 : vector<16xf32> to vector<16x1xf32>
    %223 = vector.broadcast %222 : vector<16x1xf32> to vector<16x16xf32>
    %224 = arith.divf %220, %223 : vector<16x16xf32>
    %cst_88 = arith.constant dense<0.000000e+00> : vector<16x32xf32>
    %225 = tpu.matmul %224, %211, %cst_88 {dimension_numbers = #tpu.dot_dimension_numbers<[1], [0], [0], [1], [0, 0, 1, 1], [], []>} : vector<16x16xf32>, vector<16x32xf32>, vector<16x32xf32> -> vector<16x32xf32>
    %226 = tpu.concatenate %208, %225 in 1 : vector<16x32xf32>, vector<16x32xf32> -> vector<16x64xf32>
    %c1_89 = arith.constant 1 : index
    %c0_90 = arith.constant 0 : index
    %c0_91 = arith.constant 0 : index
    %227 = vector.load %arg4[%c1_89, %c0_90, %c0_91] : memref<2x64x64xf32, #tpu.memory_space<vmem>>, vector<1x64x64xf32>
    %228 = vector.shape_cast %227 : vector<1x64x64xf32> to vector<64x64xf32>
    %cst_92 = arith.constant dense<0.000000e+00> : vector<16x64xf32>
    %229 = tpu.matmul %226, %228, %cst_92 {dimension_numbers = #tpu.dot_dimension_numbers<[1], [0], [0], [1], [0, 0, 1, 1], [], []>} : vector<16x64xf32>, vector<64x64xf32>, vector<16x64xf32> -> vector<16x64xf32>
    %230 = arith.addf %163, %229 : vector<16x64xf32>
    %c16 = arith.constant 16 : index
    %c0_93 = arith.constant 0 : index
    %231 = vector.load %arg7[%c16, %c0_93] : memref<22x64xf32, #tpu.memory_space<vmem>>, vector<1x64xf32>
    %232 = vector.broadcast %231 : vector<1x64xf32> to vector<16x64xf32>
    %233 = arith.addf %230, %232 : vector<16x64xf32>
    %c17 = arith.constant 17 : index
    %c0_94 = arith.constant 0 : index
    %234 = vector.load %arg7[%c17, %c0_94] : memref<22x64xf32, #tpu.memory_space<vmem>>, vector<1x64xf32>
    %c18 = arith.constant 18 : index
    %c0_95 = arith.constant 0 : index
    %235 = vector.load %arg7[%c18, %c0_95] : memref<22x64xf32, #tpu.memory_space<vmem>>, vector<1x64xf32>
    %cst_96 = arith.constant dense<0.000000e+00> : vector<16xf32>
    %236 = vector.multi_reduction <add>, %233, %cst_96 [1] : vector<16x64xf32> to vector<16xf32>
    %237 = vector.shape_cast %236 : vector<16xf32> to vector<16x1xf32>
    %cst_97 = arith.constant 6.400000e+01 : f32
    %238 = vector.broadcast %cst_97 : f32 to vector<16x1xf32>
    %239 = arith.divf %237, %238 : vector<16x1xf32>
    %240 = vector.broadcast %239 : vector<16x1xf32> to vector<16x64xf32>
    %241 = arith.subf %233, %240 : vector<16x64xf32>
    %242 = arith.mulf %241, %241 : vector<16x64xf32>
    %cst_98 = arith.constant dense<0.000000e+00> : vector<16xf32>
    %243 = vector.multi_reduction <add>, %242, %cst_98 [1] : vector<16x64xf32> to vector<16xf32>
    %244 = vector.shape_cast %243 : vector<16xf32> to vector<16x1xf32>
    %cst_99 = arith.constant 6.400000e+01 : f32
    %245 = vector.broadcast %cst_99 : f32 to vector<16x1xf32>
    %246 = arith.divf %244, %245 : vector<16x1xf32>
    %cst_100 = arith.constant 9.99999997E-7 : f32
    %247 = vector.broadcast %cst_100 : f32 to vector<16x1xf32>
    %248 = arith.addf %246, %247 : vector<16x1xf32>
    %249 = math.rsqrt %248 : vector<16x1xf32>
    %250 = vector.broadcast %249 : vector<16x1xf32> to vector<16x64xf32>
    %251 = arith.mulf %241, %250 : vector<16x64xf32>
    %252 = vector.broadcast %234 : vector<1x64xf32> to vector<16x64xf32>
    %253 = arith.mulf %251, %252 : vector<16x64xf32>
    %254 = vector.broadcast %235 : vector<1x64xf32> to vector<16x64xf32>
    %255 = arith.addf %253, %254 : vector<16x64xf32>
    %c3 = arith.constant 3 : index
    %c0_101 = arith.constant 0 : index
    %c0_102 = arith.constant 0 : index
    %256 = vector.load %arg3[%c3, %c0_101, %c0_102] : memref<4x64x256xf32, #tpu.memory_space<vmem>>, vector<1x64x256xf32>
    %257 = vector.shape_cast %256 : vector<1x64x256xf32> to vector<64x256xf32>
    %cst_103 = arith.constant dense<0.000000e+00> : vector<16x256xf32>
    %258 = tpu.matmul %255, %257, %cst_103 {dimension_numbers = #tpu.dot_dimension_numbers<[1], [0], [0], [1], [0, 0, 1, 1], [], []>} : vector<16x64xf32>, vector<64x256xf32>, vector<16x256xf32> -> vector<16x256xf32>
    %c3_104 = arith.constant 3 : index
    %c0_105 = arith.constant 0 : index
    %259 = vector.load %arg8[%c3_104, %c0_105] : memref<5x256xf32, #tpu.memory_space<vmem>>, vector<1x256xf32>
    %260 = vector.broadcast %259 : vector<1x256xf32> to vector<16x256xf32>
    %261 = arith.addf %258, %260 : vector<16x256xf32>
    %cst_106 = arith.constant 5.000000e-01 : f32
    %262 = vector.broadcast %cst_106 : f32 to vector<16x256xf32>
    %263 = arith.mulf %262, %261 : vector<16x256xf32>
    %cst_107 = arith.constant 0.707106769 : f32
    %264 = vector.broadcast %cst_107 : f32 to vector<16x256xf32>
    %265 = arith.mulf %261, %264 : vector<16x256xf32>
    %266 = math.absf %265 : vector<16x256xf32>
    %cst_108 = arith.constant 0.327591091 : f32
    %267 = vector.broadcast %cst_108 : f32 to vector<16x256xf32>
    %268 = arith.mulf %267, %266 : vector<16x256xf32>
    %cst_109 = arith.constant 1.000000e+00 : f32
    %269 = vector.broadcast %cst_109 : f32 to vector<16x256xf32>
    %270 = arith.addf %269, %268 : vector<16x256xf32>
    %cst_110 = arith.constant 1.000000e+00 : f32
    %271 = vector.broadcast %cst_110 : f32 to vector<16x256xf32>
    %272 = arith.divf %271, %270 : vector<16x256xf32>
    %cst_111 = arith.constant 1.06140542 : f32
    %273 = vector.broadcast %cst_111 : f32 to vector<16x256xf32>
    %274 = arith.mulf %273, %272 : vector<16x256xf32>
    %cst_112 = arith.constant -1.45315206 : f32
    %275 = vector.broadcast %cst_112 : f32 to vector<16x256xf32>
    %276 = arith.addf %274, %275 : vector<16x256xf32>
    %277 = arith.mulf %276, %272 : vector<16x256xf32>
    %cst_113 = arith.constant 1.42141378 : f32
    %278 = vector.broadcast %cst_113 : f32 to vector<16x256xf32>
    %279 = arith.addf %277, %278 : vector<16x256xf32>
    %280 = arith.mulf %279, %272 : vector<16x256xf32>
    %cst_114 = arith.constant -0.284496725 : f32
    %281 = vector.broadcast %cst_114 : f32 to vector<16x256xf32>
    %282 = arith.addf %280, %281 : vector<16x256xf32>
    %283 = arith.mulf %282, %272 : vector<16x256xf32>
    %cst_115 = arith.constant 0.254829586 : f32
    %284 = vector.broadcast %cst_115 : f32 to vector<16x256xf32>
    %285 = arith.addf %283, %284 : vector<16x256xf32>
    %286 = arith.mulf %285, %272 : vector<16x256xf32>
    %cst_116 = arith.constant 0.000000e+00 : f32
    %287 = vector.broadcast %cst_116 : f32 to vector<16x256xf32>
    %288 = arith.subf %287, %266 : vector<16x256xf32>
    %289 = arith.mulf %288, %266 : vector<16x256xf32>
    %290 = math.exp %289 : vector<16x256xf32>
    %291 = arith.mulf %286, %290 : vector<16x256xf32>
    %cst_117 = arith.constant 1.000000e+00 : f32
    %292 = vector.broadcast %cst_117 : f32 to vector<16x256xf32>
    %293 = arith.subf %292, %291 : vector<16x256xf32>
    %cst_118 = arith.constant 0.000000e+00 : f32
    %294 = vector.broadcast %cst_118 : f32 to vector<16x256xf32>
    %295 = arith.cmpf oge, %265, %294 : vector<16x256xf32>
    %cst_119 = arith.constant 0.000000e+00 : f32
    %296 = vector.broadcast %cst_119 : f32 to vector<16x256xf32>
    %297 = arith.subf %296, %293 : vector<16x256xf32>
    %298 = arith.select %295, %293, %297 : vector<16x256xi1>, vector<16x256xf32>
    %cst_120 = arith.constant 1.000000e+00 : f32
    %299 = vector.broadcast %cst_120 : f32 to vector<16x256xf32>
    %300 = arith.addf %299, %298 : vector<16x256xf32>
    %301 = arith.mulf %263, %300 : vector<16x256xf32>
    %c1_121 = arith.constant 1 : index
    %c0_122 = arith.constant 0 : index
    %c0_123 = arith.constant 0 : index
    %302 = vector.load %arg5[%c1_121, %c0_122, %c0_123] : memref<2x256x64xf32, #tpu.memory_space<vmem>>, vector<1x256x64xf32>
    %303 = vector.shape_cast %302 : vector<1x256x64xf32> to vector<256x64xf32>
    %cst_124 = arith.constant dense<0.000000e+00> : vector<16x64xf32>
    %304 = tpu.matmul %301, %303, %cst_124 {dimension_numbers = #tpu.dot_dimension_numbers<[1], [0], [0], [1], [0, 0, 1, 1], [], []>} : vector<16x256xf32>, vector<256x64xf32>, vector<16x64xf32> -> vector<16x64xf32>
    %305 = arith.addf %233, %304 : vector<16x64xf32>
    %c19 = arith.constant 19 : index
    %c0_125 = arith.constant 0 : index
    %306 = vector.load %arg7[%c19, %c0_125] : memref<22x64xf32, #tpu.memory_space<vmem>>, vector<1x64xf32>
    %307 = vector.broadcast %306 : vector<1x64xf32> to vector<16x64xf32>
    %308 = arith.addf %305, %307 : vector<16x64xf32>
    %309 = vector.extract_strided_slice %308 {offsets = [0, 0], sizes = [1, 64], strides = [1, 1]} : vector<16x64xf32> to vector<1x64xf32>
    %310 = vector.extract_strided_slice %308 {offsets = [8, 0], sizes = [1, 64], strides = [1, 1]} : vector<16x64xf32> to vector<1x64xf32>
    %311 = tpu.concatenate %309, %310 in 0 : vector<1x64xf32>, vector<1x64xf32> -> vector<2x64xf32>
    %c20 = arith.constant 20 : index
    %c0_126 = arith.constant 0 : index
    %312 = vector.load %arg7[%c20, %c0_126] : memref<22x64xf32, #tpu.memory_space<vmem>>, vector<1x64xf32>
    %c21 = arith.constant 21 : index
    %c0_127 = arith.constant 0 : index
    %313 = vector.load %arg7[%c21, %c0_127] : memref<22x64xf32, #tpu.memory_space<vmem>>, vector<1x64xf32>
    %cst_128 = arith.constant dense<0.000000e+00> : vector<2xf32>
    %314 = vector.multi_reduction <add>, %311, %cst_128 [1] : vector<2x64xf32> to vector<2xf32>
    %315 = vector.shape_cast %314 : vector<2xf32> to vector<2x1xf32>
    %cst_129 = arith.constant 6.400000e+01 : f32
    %316 = vector.broadcast %cst_129 : f32 to vector<2x1xf32>
    %317 = arith.divf %315, %316 : vector<2x1xf32>
    %318 = vector.broadcast %317 : vector<2x1xf32> to vector<2x64xf32>
    %319 = arith.subf %311, %318 : vector<2x64xf32>
    %320 = arith.mulf %319, %319 : vector<2x64xf32>
    %cst_130 = arith.constant dense<0.000000e+00> : vector<2xf32>
    %321 = vector.multi_reduction <add>, %320, %cst_130 [1] : vector<2x64xf32> to vector<2xf32>
    %322 = vector.shape_cast %321 : vector<2xf32> to vector<2x1xf32>
    %cst_131 = arith.constant 6.400000e+01 : f32
    %323 = vector.broadcast %cst_131 : f32 to vector<2x1xf32>
    %324 = arith.divf %322, %323 : vector<2x1xf32>
    %cst_132 = arith.constant 9.99999997E-7 : f32
    %325 = vector.broadcast %cst_132 : f32 to vector<2x1xf32>
    %326 = arith.addf %324, %325 : vector<2x1xf32>
    %327 = math.rsqrt %326 : vector<2x1xf32>
    %328 = vector.broadcast %327 : vector<2x1xf32> to vector<2x64xf32>
    %329 = arith.mulf %319, %328 : vector<2x64xf32>
    %330 = vector.broadcast %312 : vector<1x64xf32> to vector<2x64xf32>
    %331 = arith.mulf %329, %330 : vector<2x64xf32>
    %332 = vector.broadcast %313 : vector<1x64xf32> to vector<2x64xf32>
    %333 = arith.addf %331, %332 : vector<2x64xf32>
    %c4 = arith.constant 4 : index
    %c0_133 = arith.constant 0 : index
    %334 = vector.load %arg8[%c4, %c0_133] : memref<5x256xf32, #tpu.memory_space<vmem>>, vector<1x128xf32>
    %c0_134 = arith.constant 0 : index
    %c0_135 = arith.constant 0 : index
    %335 = vector.load %arg6[%c0_134, %c0_135] : memref<64x128xf32, #tpu.memory_space<vmem>>, vector<64x128xf32>
    %cst_136 = arith.constant dense<0.000000e+00> : vector<2x128xf32>
    %336 = tpu.matmul %333, %335, %cst_136 {dimension_numbers = #tpu.dot_dimension_numbers<[1], [0], [0], [1], [0, 0, 1, 1], [], []>} : vector<2x64xf32>, vector<64x128xf32>, vector<2x128xf32> -> vector<2x128xf32>
    %337 = vector.broadcast %334 : vector<1x128xf32> to vector<2x128xf32>
    %338 = arith.addf %336, %337 : vector<2x128xf32>
    %c0_137 = arith.constant 0 : index
    %c0_138 = arith.constant 0 : index
    %339 = vector.load %arg9[%c0_137, %c0_138] : memref<2x128xf32, #tpu.memory_space<vmem>>, vector<2x128xf32>
    tpu.vector_store %arg9[%c0_137, %c0_138], %338 {strides = array<i32>} : memref<2x128xf32, #tpu.memory_space<vmem>>, vector<2x128xf32>,
    return
  }
  func.func @transform_0(%arg0: i32) -> (i32, i32) {
    %c0_i32 = arith.constant 0 : i32
    %c0_i32_0 = arith.constant 0 : i32
    %c0_i32_1 = arith.constant 0 : i32
    return %c0_i32, %c0_i32_0 : i32, i32
  }
  func.func @transform_1(%arg0: i32) -> (i32, i32) {
    %c0_i32 = arith.constant 0 : i32
    %c0_i32_0 = arith.constant 0 : i32
    %c0_i32_1 = arith.constant 0 : i32
    return %c0_i32, %c0_i32_0 : i32, i32
  }
  func.func @transform_2(%arg0: i32) -> (i32, i32, i32) {
    %c0_i32 = arith.constant 0 : i32
    %c0_i32_0 = arith.constant 0 : i32
    %c0_i32_1 = arith.constant 0 : i32
    %c0_i32_2 = arith.constant 0 : i32
    return %c0_i32, %c0_i32_0, %c0_i32_1 : i32, i32, i32
  }
  func.func @transform_3(%arg0: i32) -> (i32, i32, i32) {
    %c0_i32 = arith.constant 0 : i32
    %c0_i32_0 = arith.constant 0 : i32
    %c0_i32_1 = arith.constant 0 : i32
    %c0_i32_2 = arith.constant 0 : i32
    return %c0_i32, %c0_i32_0, %c0_i32_1 : i32, i32, i32
  }
  func.func @transform_4(%arg0: i32) -> (i32, i32, i32) {
    %c0_i32 = arith.constant 0 : i32
    %c0_i32_0 = arith.constant 0 : i32
    %c0_i32_1 = arith.constant 0 : i32
    %c0_i32_2 = arith.constant 0 : i32
    return %c0_i32, %c0_i32_0, %c0_i32_1 : i32, i32, i32
  }
  func.func @transform_5(%arg0: i32) -> (i32, i32) {
    %c0_i32 = arith.constant 0 : i32
    %c0_i32_0 = arith.constant 0 : i32
    %c0_i32_1 = arith.constant 0 : i32
    return %c0_i32, %c0_i32_0 : i32, i32
  }
  func.func @transform_6(%arg0: i32) -> (i32, i32) {
    %c0_i32 = arith.constant 0 : i32
    %c0_i32_0 = arith.constant 0 : i32
    %c0_i32_1 = arith.constant 0 : i32
    return %c0_i32, %c0_i32_0 : i32, i32
  }
  func.func @transform_7(%arg0: i32) -> (i32, i32) {
    %c0_i32 = arith.constant 0 : i32
    %c0_i32_0 = arith.constant 0 : i32
    %c0_i32_1 = arith.constant 0 : i32
    return %c0_i32, %c0_i32_0 : i32, i32
  }
  func.func @transform_8(%arg0: i32) -> (i32, i32) {
    %c0_i32 = arith.constant 0 : i32
    %c0_i32_0 = arith.constant 0 : i32
    %c0_i32_1 = arith.constant 0 : i32
    return %c0_i32, %c0_i32_0 : i32, i32
  }
}

</mosaic_0001>

<llo_original>
// kernel: tiny_vit_forward.1
$region0: #{tiny_vit_forward.1}
  #allocation0 [shape = 'u32[]', space=smem, size = 0x4, offset = 0x4, fixed_abs, tag = 'smem constant byte address 0x4 - core index']
  #allocation1 [shape = 'u32[144,128]{1,0:T(1,128)}', space=vmem, size = 0x12000, scoped, tag = 'internal scratch']
  %s0 = inlined_call_operand.vmem [shape: f32[16,3072], index: 0, kind: input, shape index: {}]
  %s1 = inlined_call_operand.vmem [shape: f32[3072,64], index: 1, kind: input, shape index: {}]
  %s2 = inlined_call_operand.vmem [shape: f32[4,64,256], index: 2, kind: input, shape index: {}]
  %s3 = inlined_call_operand.vmem [shape: f32[2,64,64], index: 3, kind: input, shape index: {}]
  %s4 = inlined_call_operand.vmem [shape: f32[2,256,64], index: 4, kind: input, shape index: {}]
  %s5 = inlined_call_operand.vmem [shape: f32[64,128], index: 5, kind: input, shape index: {}]
  %s6 = inlined_call_operand.vmem [shape: f32[22,64], index: 6, kind: input, shape index: {}]
  %s7 = inlined_call_operand.vmem [shape: f32[5,256], index: 7, kind: input, shape index: {}]
  %s8 = inlined_call_operand.hbm [shape: f32[2,128], index: 8, kind: output, shape index: {}]
  %s9 = sld [smem:[#allocation0]]
  $region42: #{tiny_vit_forward.1} parent=0
    _
  %s11 = ssub.s32 1, %s9
  %s12 = scalar_select 0, %s11, %s9
  $region1: #{tiny_vit_forward.1} parent=0
    #allocation2 [shape = 'u8[1024]{0}', space=vmem, size = 0x400, scoped, tag = 'output window, operand 0, single buffered']
    #allocation3 [shape = 's32[1]{0}', space=sflag, size = 0x4, scoped, tag = 'scoped memory for tiny_vit_forward.1']
    %13 = vsyncpa [#allocation3], 0
    // Predicated region
    $region2: #{tiny_vit_forward.1} parent=1 // pred_check
      _
    $region3: #{tiny_vit_forward.1} parent=1 // pred_check_branch
      %15 = sbr.rel (0) target = $region5
    $region4: #{tiny_vit_forward.1} parent=1 // pred_region
      _
    $region5: #{tiny_vit_forward.1} parent=1 // pred_fallthru
      _
    // Predicated region
    $region6: #{tiny_vit_forward.1} parent=1 // pred_check
      _
    $region7: #{tiny_vit_forward.1} parent=1 // pred_check_branch
      %17 = sbr.rel (0) target = $region9
    $region8: #{tiny_vit_forward.1} parent=1 // pred_region
      _
    $region9: #{tiny_vit_forward.1} parent=1 // pred_fallthru
      _
    // Predicated region
    $region10: #{tiny_vit_forward.1} parent=1 // pred_check
      _
    $region11: #{tiny_vit_forward.1} parent=1 // pred_check_branch
      %19 = sbr.rel (0) target = $region13
    $region12: #{tiny_vit_forward.1} parent=1 // pred_region
      _
    $region13: #{tiny_vit_forward.1} parent=1 // pred_fallthru
      _
    // Predicated region
    $region14: #{tiny_vit_forward.1} parent=1 // pred_check
      _
    $region15: #{tiny_vit_forward.1} parent=1 // pred_check_branch
      %21 = sbr.rel (0) target = $region17
    $region16: #{tiny_vit_forward.1} parent=1 // pred_region
      _
    $region17: #{tiny_vit_forward.1} parent=1 // pred_fallthru
      _
    // Predicated region
    $region18: #{tiny_vit_forward.1} parent=1 // pred_check
      _
    $region19: #{tiny_vit_forward.1} parent=1 // pred_check_branch
      %23 = sbr.rel (0) target = $region21
    $region20: #{tiny_vit_forward.1} parent=1 // pred_region
      _
    $region21: #{tiny_vit_forward.1} parent=1 // pred_fallthru
      _
    // Predicated region
    $region22: #{tiny_vit_forward.1} parent=1 // pred_check
      _
    $region23: #{tiny_vit_forward.1} parent=1 // pred_check_branch
      %25 = sbr.rel (0) target = $region25
    $region24: #{tiny_vit_forward.1} parent=1 // pred_region
      _
    $region25: #{tiny_vit_forward.1} parent=1 // pred_fallthru
      _
    // Predicated region
    $region26: #{tiny_vit_forward.1} parent=1 // pred_check
      _
    $region27: #{tiny_vit_forward.1} parent=1 // pred_check_branch
      %27 = sbr.rel (0) target = $region29
    $region28: #{tiny_vit_forward.1} parent=1 // pred_region
      _
    $region29: #{tiny_vit_forward.1} parent=1 // pred_fallthru
      _
    // Predicated region
    $region30: #{tiny_vit_forward.1} parent=1 // pred_check
      _
    $region31: #{tiny_vit_forward.1} parent=1 // pred_check_branch
      %29 = sbr.rel (0) target = $region33
    $region32: #{tiny_vit_forward.1} parent=1 // pred_region
      _
    $region33: #{tiny_vit_forward.1} parent=1 // pred_fallthru
      _
    %v30 = vld [vmem:[%s0] sm:$0xff]
    %v31 = vld [vmem:[%s0 + $0x8] sm:$0xff]
    %v32 = vld [vmem:[%s0 + $0x10] sm:$0xff]
    %v33 = vld [vmem:[%s0 + $0x18] sm:$0xff]
    %v34 = vld [vmem:[%s0 + $0x20] sm:$0xff]
    %v35 = vld [vmem:[%s0 + $0x28] sm:$0xff]
    %v36 = vld [vmem:[%s0 + $0x30] sm:$0xff]
    %v37 = vld [vmem:[%s0 + $0x38] sm:$0xff]
    %v38 = vld [vmem:[%s0 + $0x40] sm:$0xff]
    %v39 = vld [vmem:[%s0 + $0x48] sm:$0xff]
    %v40 = vld [vmem:[%s0 + $0x50] sm:$0xff]
    %v41 = vld [vmem:[%s0 + $0x58] sm:$0xff]
    %v42 = vld [vmem:[%s0 + $0x60] sm:$0xff]
    %v43 = vld [vmem:[%s0 + $0x68] sm:$0xff]
    %v44 = vld [vmem:[%s0 + $0x70] sm:$0xff]
    %v45 = vld [vmem:[%s0 + $0x78] sm:$0xff]
    %v46 = vld [vmem:[%s0 + $0x80] sm:$0xff]
    %v47 = vld [vmem:[%s0 + $0x88] sm:$0xff]
    %v48 = vld [vmem:[%s0 + $0x90] sm:$0xff]
    %v49 = vld [vmem:[%s0 + $0x98] sm:$0xff]
    %v50 = vld [vmem:[%s0 + $0xa0] sm:$0xff]
    %v51 = vld [vmem:[%s0 + $0xa8] sm:$0xff]
    %v52 = vld [vmem:[%s0 + $0xb0] sm:$0xff]
    %v53 = vld [vmem:[%s0 + $0xb8] sm:$0xff]
    %v54 = vld [vmem:[%s0 + $0xc0] sm:$0xff]
    %v55 = vld [vmem:[%s0 + $0xc8] sm:$0xff]
    %v56 = vld [vmem:[%s0 + $0xd0] sm:$0xff]
    %v57 = vld [vmem:[%s0 + $0xd8] sm:$0xff]
    %v58 = vld [vmem:[%s0 + $0xe0] sm:$0xff]
    %v59 = vld [vmem:[%s0 + $0xe8] sm:$0xff]
    %v60 = vld [vmem:[%s0 + $0xf0] sm:$0xff]
    %v61 = vld [vmem:[%s0 + $0xf8] sm:$0xff]
    %v62 = vld [vmem:[%s0 + $0x100] sm:$0xff]
    %v63 = vld [vmem:[%s0 + $0x108] sm:$0xff]
    %v64 = vld [vmem:[%s0 + $0x110] sm:$0xff]
    %v65 = vld [vmem:[%s0 + $0x118] sm:$0xff]
    %v66 = vld [vmem:[%s0 + $0x120] sm:$0xff]
    %v67 = vld [vmem:[%s0 + $0x128] sm:$0xff]
    %v68 = vld [vmem:[%s0 + $0x130] sm:$0xff]
    %v69 = vld [vmem:[%s0 + $0x138] sm:$0xff]
    %v70 = vld [vmem:[%s0 + $0x140] sm:$0xff]
    %v71 = vld [vmem:[%s0 + $0x148] sm:$0xff]
    %v72 = vld [vmem:[%s0 + $0x150] sm:$0xff]
    %v73 = vld [vmem:[%s0 + $0x158] sm:$0xff]
    %v74 = vld [vmem:[%s0 + $0x160] sm:$0xff]
    %v75 = vld [vmem:[%s0 + $0x168] sm:$0xff]
    %v76 = vld [vmem:[%s0 + $0x170] sm:$0xff]
    %v77 = vld [vmem:[%s0 + $0x178] sm:$0xff]
    %v78 = vld [vmem:[%s1] sm:$0xff]
    %v79 = vld [vmem:[%s1 + $0x8] sm:$0xff]
    %v80 = vld [vmem:[%s1 + $0x10] sm:$0xff]
    %v81 = vld [vmem:[%s1 + $0x18] sm:$0xff]
    %v82 = vld [vmem:[%s1 + $0x20] sm:$0xff]
    %v83 = vld [vmem:[%s1 + $0x28] sm:$0xff]
    %v84 = vld [vmem:[%s1 + $0x30] sm:$0xff]
    %v85 = vld [vmem:[%s1 + $0x38] sm:$0xff]
    %v86 = vld [vmem:[%s1 + $0x40] sm:$0xff]
    %v87 = vld [vmem:[%s1 + $0x48] sm:$0xff]
    %v88 = vld [vmem:[%s1 + $0x50] sm:$0xff]
    %v89 = vld [vmem:[%s1 + $0x58] sm:$0xff]
    %v90 = vld [vmem:[%s1 + $0x60] sm:$0xff]
    %v91 = vld [vmem:[%s1 + $0x68] sm:$0xff]
    %v92 = vld [vmem:[%s1 + $0x70] sm:$0xff]
    %v93 = vld [vmem:[%s1 + $0x78] sm:$0xff]
    %v94 = vld [vmem:[%s1 + $0x80] sm:$0xff]
    %v95 = vld [vmem:[%s1 + $0x88] sm:$0xff]
    %v96 = vld [vmem:[%s1 + $0x90] sm:$0xff]
    %v97 = vld [vmem:[%s1 + $0x98] sm:$0xff]
    %v98 = vld [vmem:[%s1 + $0xa0] sm:$0xff]
    %v99 = vld [vmem:[%s1 + $0xa8] sm:$0xff]
    %v100 = vld [vmem:[%s1 + $0xb0] sm:$0xff]
    %v101 = vld [vmem:[%s1 + $0xb8] sm:$0xff]
    %v102 = vld [vmem:[%s1 + $0xc0] sm:$0xff]
    %v103 = vld [vmem:[%s1 + $0xc8] sm:$0xff]
    %v104 = vld [vmem:[%s1 + $0xd0] sm:$0xff]
    %v105 = vld [vmem:[%s1 + $0xd8] sm:$0xff]
    %v106 = vld [vmem:[%s1 + $0xe0] sm:$0xff]
    %v107 = vld [vmem:[%s1 + $0xe8] sm:$0xff]
    %v108 = vld [vmem:[%s1 + $0xf0] sm:$0xff]
    %v109 = vld [vmem:[%s1 + $0xf8] sm:$0xff]
    %v110 = vld [vmem:[%s1 + $0x100] sm:$0xff]
    %v111 = vld [vmem:[%s1 + $0x108] sm:$0xff]
    %v112 = vld [vmem:[%s1 + $0x110] sm:$0xff]
    %v113 = vld [vmem:[%s1 + $0x118] sm:$0xff]
    %v114 = vld [vmem:[%s1 + $0x120] sm:$0xff]
    %v115 = vld [vmem:[%s1 + $0x128] sm:$0xff]
    %v116 = vld [vmem:[%s1 + $0x130] sm:$0xff]
    %v117 = vld [vmem:[%s1 + $0x138] sm:$0xff]
    %v118 = vld [vmem:[%s1 + $0x140] sm:$0xff]
    %v119 = vld [vmem:[%s1 + $0x148] sm:$0xff]
    %v120 = vld [vmem:[%s1 + $0x150] sm:$0xff]
    %v121 = vld [vmem:[%s1 + $0x158] sm:$0xff]
    %v122 = vld [vmem:[%s1 + $0x160] sm:$0xff]
    %v123 = vld [vmem:[%s1 + $0x168] sm:$0xff]
    %v124 = vld [vmem:[%s1 + $0x170] sm:$0xff]
    %v125 = vld [vmem:[%s1 + $0x178] sm:$0xff]
    %v126 = vld [vmem:[%s1 + $0x180] sm:$0xff]
    %v127 = vld [vmem:[%s1 + $0x188] sm:$0xff]
    %v128 = vld [vmem:[%s1 + $0x190] sm:$0xff]
    %v129 = vld [vmem:[%s1 + $0x198] sm:$0xff]
    %v130 = vld [vmem:[%s1 + $0x1a0] sm:$0xff]
    %v131 = vld [vmem:[%s1 + $0x1a8] sm:$0xff]
    %v132 = vld [vmem:[%s1 + $0x1b0] sm:$0xff]
    %v133 = vld [vmem:[%s1 + $0x1b8] sm:$0xff]
    %v134 = vld [vmem:[%s1 + $0x1c0] sm:$0xff]
    %v135 = vld [vmem:[%s1 + $0x1c8] sm:$0xff]
    %v136 = vld [vmem:[%s1 + $0x1d0] sm:$0xff]
    %v137 = vld [vmem:[%s1 + $0x1d8] sm:$0xff]
    %v138 = vld [vmem:[%s1 + $0x1e0] sm:$0xff]
    %v139 = vld [vmem:[%s1 + $0x1e8] sm:$0xff]
    %v140 = vld [vmem:[%s1 + $0x1f0] sm:$0xff]
    %v141 = vld [vmem:[%s1 + $0x1f8] sm:$0xff]
    %v142 = vld [vmem:[%s1 + $0x200] sm:$0xff]
    %v143 = vld [vmem:[%s1 + $0x208] sm:$0xff]
    %v144 = vld [vmem:[%s1 + $0x210] sm:$0xff]
    %v145 = vld [vmem:[%s1 + $0x218] sm:$0xff]
    %v146 = vld [vmem:[%s1 + $0x220] sm:$0xff]
    %v147 = vld [vmem:[%s1 + $0x228] sm:$0xff]
    %v148 = vld [vmem:[%s1 + $0x230] sm:$0xff]
    %v149 = vld [vmem:[%s1 + $0x238] sm:$0xff]
    %v150 = vld [vmem:[%s1 + $0x240] sm:$0xff]
    %v151 = vld [vmem:[%s1 + $0x248] sm:$0xff]
    %v152 = vld [vmem:[%s1 + $0x250] sm:$0xff]
    %v153 = vld [vmem:[%s1 + $0x258] sm:$0xff]
    %v154 = vld [vmem:[%s1 + $0x260] sm:$0xff]
    %v155 = vld [vmem:[%s1 + $0x268] sm:$0xff]
    %v156 = vld [vmem:[%s1 + $0x270] sm:$0xff]
    %v157 = vld [vmem:[%s1 + $0x278] sm:$0xff]
    %v158 = vld [vmem:[%s1 + $0x280] sm:$0xff]
    %v159 = vld [vmem:[%s1 + $0x288] sm:$0xff]
    %v160 = vld [vmem:[%s1 + $0x290] sm:$0xff]
    %v161 = vld [vmem:[%s1 + $0x298] sm:$0xff]
    %v162 = vld [vmem:[%s1 + $0x2a0] sm:$0xff]
    %v163 = vld [vmem:[%s1 + $0x2a8] sm:$0xff]
    %v164 = vld [vmem:[%s1 + $0x2b0] sm:$0xff]
    %v165 = vld [vmem:[%s1 + $0x2b8] sm:$0xff]
    %v166 = vld [vmem:[%s1 + $0x2c0] sm:$0xff]
    %v167 = vld [vmem:[%s1 + $0x2c8] sm:$0xff]
    %v168 = vld [vmem:[%s1 + $0x2d0] sm:$0xff]
    %v169 = vld [vmem:[%s1 + $0x2d8] sm:$0xff]
    %v170 = vld [vmem:[%s1 + $0x2e0] sm:$0xff]
    %v171 = vld [vmem:[%s1 + $0x2e8] sm:$0xff]
    %v172 = vld [vmem:[%s1 + $0x2f0] sm:$0xff]
    %v173 = vld [vmem:[%s1 + $0x2f8] sm:$0xff]
    %v174 = vld [vmem:[%s1 + $0x300] sm:$0xff]
    %v175 = vld [vmem:[%s1 + $0x308] sm:$0xff]
    %v176 = vld [vmem:[%s1 + $0x310] sm:$0xff]
    %v177 = vld [vmem:[%s1 + $0x318] sm:$0xff]
    %v178 = vld [vmem:[%s1 + $0x320] sm:$0xff]
    %v179 = vld [vmem:[%s1 + $0x328] sm:$0xff]
    %v180 = vld [vmem:[%s1 + $0x330] sm:$0xff]
    %v181 = vld [vmem:[%s1 + $0x338] sm:$0xff]
    %v182 = vld [vmem:[%s1 + $0x340] sm:$0xff]
    %v183 = vld [vmem:[%s1 + $0x348] sm:$0xff]
    %v184 = vld [vmem:[%s1 + $0x350] sm:$0xff]
    %v185 = vld [vmem:[%s1 + $0x358] sm:$0xff]
    %v186 = vld [vmem:[%s1 + $0x360] sm:$0xff]
    %v187 = vld [vmem:[%s1 + $0x368] sm:$0xff]
    %v188 = vld [vmem:[%s1 + $0x370] sm:$0xff]
    %v189 = vld [vmem:[%s1 + $0x378] sm:$0xff]
    %v190 = vld [vmem:[%s1 + $0x380] sm:$0xff]
    %v191 = vld [vmem:[%s1 + $0x388] sm:$0xff]
    %v192 = vld [vmem:[%s1 + $0x390] sm:$0xff]
    %v193 = vld [vmem:[%s1 + $0x398] sm:$0xff]
    %v194 = vld [vmem:[%s1 + $0x3a0] sm:$0xff]
    %v195 = vld [vmem:[%s1 + $0x3a8] sm:$0xff]
    %v196 = vld [vmem:[%s1 + $0x3b0] sm:$0xff]
    %v197 = vld [vmem:[%s1 + $0x3b8] sm:$0xff]
    %v198 = vld [vmem:[%s1 + $0x3c0] sm:$0xff]
    %v199 = vld [vmem:[%s1 + $0x3c8] sm:$0xff]
    %v200 = vld [vmem:[%s1 + $0x3d0] sm:$0xff]
    %v201 = vld [vmem:[%s1 + $0x3d8] sm:$0xff]
    %v202 = vld [vmem:[%s1 + $0x3e0] sm:$0xff]
    %v203 = vld [vmem:[%s1 + $0x3e8] sm:$0xff]
    %v204 = vld [vmem:[%s1 + $0x3f0] sm:$0xff]
    %v205 = vld [vmem:[%s1 + $0x3f8] sm:$0xff]
    %v206 = vld [vmem:[%s1 + $0x400] sm:$0xff]
    %v207 = vld [vmem:[%s1 + $0x408] sm:$0xff]
    %v208 = vld [vmem:[%s1 + $0x410] sm:$0xff]
    %v209 = vld [vmem:[%s1 + $0x418] sm:$0xff]
    %v210 = vld [vmem:[%s1 + $0x420] sm:$0xff]
    %v211 = vld [vmem:[%s1 + $0x428] sm:$0xff]
    %v212 = vld [vmem:[%s1 + $0x430] sm:$0xff]
    %v213 = vld [vmem:[%s1 + $0x438] sm:$0xff]
    %v214 = vld [vmem:[%s1 + $0x440] sm:$0xff]
    %v215 = vld [vmem:[%s1 + $0x448] sm:$0xff]
    %v216 = vld [vmem:[%s1 + $0x450] sm:$0xff]
    %v217 = vld [vmem:[%s1 + $0x458] sm:$0xff]
    %v218 = vld [vmem:[%s1 + $0x460] sm:$0xff]
    %v219 = vld [vmem:[%s1 + $0x468] sm:$0xff]
    %v220 = vld [vmem:[%s1 + $0x470] sm:$0xff]
    %v221 = vld [vmem:[%s1 + $0x478] sm:$0xff]
    %v222 = vld [vmem:[%s1 + $0x480] sm:$0xff]
    %v223 = vld [vmem:[%s1 + $0x488] sm:$0xff]
    %v224 = vld [vmem:[%s1 + $0x490] sm:$0xff]
    %v225 = vld [vmem:[%s1 + $0x498] sm:$0xff]
    %v226 = vld [vmem:[%s1 + $0x4a0] sm:$0xff]
    %v227 = vld [vmem:[%s1 + $0x4a8] sm:$0xff]
    %v228 = vld [vmem:[%s1 + $0x4b0] sm:$0xff]
    %v229 = vld [vmem:[%s1 + $0x4b8] sm:$0xff]
    %v230 = vld [vmem:[%s1 + $0x4c0] sm:$0xff]
    %v231 = vld [vmem:[%s1 + $0x4c8] sm:$0xff]
    %v232 = vld [vmem:[%s1 + $0x4d0] sm:$0xff]
    %v233 = vld [vmem:[%s1 + $0x4d8] sm:$0xff]
    %v234 = vld [vmem:[%s1 + $0x4e0] sm:$0xff]
    %v235 = vld [vmem:[%s1 + $0x4e8] sm:$0xff]
    %v236 = vld [vmem:[%s1 + $0x4f0] sm:$0xff]
    %v237 = vld [vmem:[%s1 + $0x4f8] sm:$0xff]
    %v238 = vld [vmem:[%s1 + $0x500] sm:$0xff]
    %v239 = vld [vmem:[%s1 + $0x508] sm:$0xff]
    %v240 = vld [vmem:[%s1 + $0x510] sm:$0xff]
    %v241 = vld [vmem:[%s1 + $0x518] sm:$0xff]
    %v242 = vld [vmem:[%s1 + $0x520] sm:$0xff]
    %v243 = vld [vmem:[%s1 + $0x528] sm:$0xff]
    %v244 = vld [vmem:[%s1 + $0x530] sm:$0xff]
    %v245 = vld [vmem:[%s1 + $0x538] sm:$0xff]
    %v246 = vld [vmem:[%s1 + $0x540] sm:$0xff]
    %v247 = vld [vmem:[%s1 + $0x548] sm:$0xff]
    %v248 = vld [vmem:[%s1 + $0x550] sm:$0xff]
    %v249 = vld [vmem:[%s1 + $0x558] sm:$0xff]
    %v250 = vld [vmem:[%s1 + $0x560] sm:$0xff]
    %v251 = vld [vmem:[%s1 + $0x568] sm:$0xff]
    %v252 = vld [vmem:[%s1 + $0x570] sm:$0xff]
    %v253 = vld [vmem:[%s1 + $0x578] sm:$0xff]
    %v254 = vld [vmem:[%s1 + $0x580] sm:$0xff]
    %v255 = vld [vmem:[%s1 + $0x588] sm:$0xff]
    %v256 = vld [vmem:[%s1 + $0x590] sm:$0xff]
    %v257 = vld [vmem:[%s1 + $0x598] sm:$0xff]
    %v258 = vld [vmem:[%s1 + $0x5a0] sm:$0xff]
    %v259 = vld [vmem:[%s1 + $0x5a8] sm:$0xff]
    %v260 = vld [vmem:[%s1 + $0x5b0] sm:$0xff]
    %v261 = vld [vmem:[%s1 + $0x5b8] sm:$0xff]
    %v262 = vld [vmem:[%s1 + $0x5c0] sm:$0xff]
    %v263 = vld [vmem:[%s1 + $0x5c8] sm:$0xff]
    %v264 = vld [vmem:[%s1 + $0x5d0] sm:$0xff]
    %v265 = vld [vmem:[%s1 + $0x5d8] sm:$0xff]
    %v266 = vld [vmem:[%s1 + $0x5e0] sm:$0xff]
    %v267 = vld [vmem:[%s1 + $0x5e8] sm:$0xff]
    %v268 = vld [vmem:[%s1 + $0x5f0] sm:$0xff]
    %v269 = vld [vmem:[%s1 + $0x5f8] sm:$0xff]
    %v270 = vld [vmem:[%s1 + $0x600] sm:$0xff]
    %v271 = vld [vmem:[%s1 + $0x608] sm:$0xff]
    %v272 = vld [vmem:[%s1 + $0x610] sm:$0xff]
    %v273 = vld [vmem:[%s1 + $0x618] sm:$0xff]
    %v274 = vld [vmem:[%s1 + $0x620] sm:$0xff]
    %v275 = vld [vmem:[%s1 + $0x628] sm:$0xff]
    %v276 = vld [vmem:[%s1 + $0x630] sm:$0xff]
    %v277 = vld [vmem:[%s1 + $0x638] sm:$0xff]
    %v278 = vld [vmem:[%s1 + $0x640] sm:$0xff]
    %v279 = vld [vmem:[%s1 + $0x648] sm:$0xff]
    %v280 = vld [vmem:[%s1 + $0x650] sm:$0xff]
    %v281 = vld [vmem:[%s1 + $0x658] sm:$0xff]
    %v282 = vld [vmem:[%s1 + $0x660] sm:$0xff]
    %v283 = vld [vmem:[%s1 + $0x668] sm:$0xff]
    %v284 = vld [vmem:[%s1 + $0x670] sm:$0xff]
    %v285 = vld [vmem:[%s1 + $0x678] sm:$0xff]
    %v286 = vld [vmem:[%s1 + $0x680] sm:$0xff]
    %v287 = vld [vmem:[%s1 + $0x688] sm:$0xff]
    %v288 = vld [vmem:[%s1 + $0x690] sm:$0xff]
    %v289 = vld [vmem:[%s1 + $0x698] sm:$0xff]
    %v290 = vld [vmem:[%s1 + $0x6a0] sm:$0xff]
    %v291 = vld [vmem:[%s1 + $0x6a8] sm:$0xff]
    %v292 = vld [vmem:[%s1 + $0x6b0] sm:$0xff]
    %v293 = vld [vmem:[%s1 + $0x6b8] sm:$0xff]
    %v294 = vld [vmem:[%s1 + $0x6c0] sm:$0xff]
    %v295 = vld [vmem:[%s1 + $0x6c8] sm:$0xff]
    %v296 = vld [vmem:[%s1 + $0x6d0] sm:$0xff]
    %v297 = vld [vmem:[%s1 + $0x6d8] sm:$0xff]
    %v298 = vld [vmem:[%s1 + $0x6e0] sm:$0xff]
    %v299 = vld [vmem:[%s1 + $0x6e8] sm:$0xff]
    %v300 = vld [vmem:[%s1 + $0x6f0] sm:$0xff]
    %v301 = vld [vmem:[%s1 + $0x6f8] sm:$0xff]
    %v302 = vld [vmem:[%s1 + $0x700] sm:$0xff]
    %v303 = vld [vmem:[%s1 + $0x708] sm:$0xff]
    %v304 = vld [vmem:[%s1 + $0x710] sm:$0xff]
    %v305 = vld [vmem:[%s1 + $0x718] sm:$0xff]
    %v306 = vld [vmem:[%s1 + $0x720] sm:$0xff]
    %v307 = vld [vmem:[%s1 + $0x728] sm:$0xff]
    %v308 = vld [vmem:[%s1 + $0x730] sm:$0xff]
    %v309 = vld [vmem:[%s1 + $0x738] sm:$0xff]
    %v310 = vld [vmem:[%s1 + $0x740] sm:$0xff]
    %v311 = vld [vmem:[%s1 + $0x748] sm:$0xff]
    %v312 = vld [vmem:[%s1 + $0x750] sm:$0xff]
    %v313 = vld [vmem:[%s1 + $0x758] sm:$0xff]
    %v314 = vld [vmem:[%s1 + $0x760] sm:$0xff]
    %v315 = vld [vmem:[%s1 + $0x768] sm:$0xff]
    %v316 = vld [vmem:[%s1 + $0x770] sm:$0xff]
    %v317 = vld [vmem:[%s1 + $0x778] sm:$0xff]
    %v318 = vld [vmem:[%s1 + $0x780] sm:$0xff]
    %v319 = vld [vmem:[%s1 + $0x788] sm:$0xff]
    %v320 = vld [vmem:[%s1 + $0x790] sm:$0xff]
    %v321 = vld [vmem:[%s1 + $0x798] sm:$0xff]
    %v322 = vld [vmem:[%s1 + $0x7a0] sm:$0xff]
    %v323 = vld [vmem:[%s1 + $0x7a8] sm:$0xff]
    %v324 = vld [vmem:[%s1 + $0x7b0] sm:$0xff]
    %v325 = vld [vmem:[%s1 + $0x7b8] sm:$0xff]
    %v326 = vld [vmem:[%s1 + $0x7c0] sm:$0xff]
    %v327 = vld [vmem:[%s1 + $0x7c8] sm:$0xff]
    %v328 = vld [vmem:[%s1 + $0x7d0] sm:$0xff]
    %v329 = vld [vmem:[%s1 + $0x7d8] sm:$0xff]
    %v330 = vld [vmem:[%s1 + $0x7e0] sm:$0xff]
    %v331 = vld [vmem:[%s1 + $0x7e8] sm:$0xff]
    %v332 = vld [vmem:[%s1 + $0x7f0] sm:$0xff]
    %v333 = vld [vmem:[%s1 + $0x7f8] sm:$0xff]
    %v334 = vld [vmem:[%s1 + $0x800] sm:$0xff]
    %v335 = vld [vmem:[%s1 + $0x808] sm:$0xff]
    %v336 = vld [vmem:[%s1 + $0x810] sm:$0xff]
    %v337 = vld [vmem:[%s1 + $0x818] sm:$0xff]
    %v338 = vld [vmem:[%s1 + $0x820] sm:$0xff]
    %v339 = vld [vmem:[%s1 + $0x828] sm:$0xff]
    %v340 = vld [vmem:[%s1 + $0x830] sm:$0xff]
    %v341 = vld [vmem:[%s1 + $0x838] sm:$0xff]
    %v342 = vld [vmem:[%s1 + $0x840] sm:$0xff]
    %v343 = vld [vmem:[%s1 + $0x848] sm:$0xff]
    %v344 = vld [vmem:[%s1 + $0x850] sm:$0xff]
    %v345 = vld [vmem:[%s1 + $0x858] sm:$0xff]
    %v346 = vld [vmem:[%s1 + $0x860] sm:$0xff]
    %v347 = vld [vmem:[%s1 + $0x868] sm:$0xff]
    %v348 = vld [vmem:[%s1 + $0x870] sm:$0xff]
    %v349 = vld [vmem:[%s1 + $0x878] sm:$0xff]
    %v350 = vld [vmem:[%s1 + $0x880] sm:$0xff]
    %v351 = vld [vmem:[%s1 + $0x888] sm:$0xff]
    %v352 = vld [vmem:[%s1 + $0x890] sm:$0xff]
    %v353 = vld [vmem:[%s1 + $0x898] sm:$0xff]
    %v354 = vld [vmem:[%s1 + $0x8a0] sm:$0xff]
    %v355 = vld [vmem:[%s1 + $0x8a8] sm:$0xff]
    %v356 = vld [vmem:[%s1 + $0x8b0] sm:$0xff]
    %v357 = vld [vmem:[%s1 + $0x8b8] sm:$0xff]
    %v358 = vld [vmem:[%s1 + $0x8c0] sm:$0xff]
    %v359 = vld [vmem:[%s1 + $0x8c8] sm:$0xff]
    %v360 = vld [vmem:[%s1 + $0x8d0] sm:$0xff]
    %v361 = vld [vmem:[%s1 + $0x8d8] sm:$0xff]
    %v362 = vld [vmem:[%s1 + $0x8e0] sm:$0xff]
    %v363 = vld [vmem:[%s1 + $0x8e8] sm:$0xff]
    %v364 = vld [vmem:[%s1 + $0x8f0] sm:$0xff]
    %v365 = vld [vmem:[%s1 + $0x8f8] sm:$0xff]
    %v366 = vld [vmem:[%s1 + $0x900] sm:$0xff]
    %v367 = vld [vmem:[%s1 + $0x908] sm:$0xff]
    %v368 = vld [vmem:[%s1 + $0x910] sm:$0xff]
    %v369 = vld [vmem:[%s1 + $0x918] sm:$0xff]
    %v370 = vld [vmem:[%s1 + $0x920] sm:$0xff]
    %v371 = vld [vmem:[%s1 + $0x928] sm:$0xff]
    %v372 = vld [vmem:[%s1 + $0x930] sm:$0xff]
    %v373 = vld [vmem:[%s1 + $0x938] sm:$0xff]
    %v374 = vld [vmem:[%s1 + $0x940] sm:$0xff]
    %v375 = vld [vmem:[%s1 + $0x948] sm:$0xff]
    %v376 = vld [vmem:[%s1 + $0x950] sm:$0xff]
    %v377 = vld [vmem:[%s1 + $0x958] sm:$0xff]
    %v378 = vld [vmem:[%s1 + $0x960] sm:$0xff]
    %v379 = vld [vmem:[%s1 + $0x968] sm:$0xff]
    %v380 = vld [vmem:[%s1 + $0x970] sm:$0xff]
    %v381 = vld [vmem:[%s1 + $0x978] sm:$0xff]
    %v382 = vld [vmem:[%s1 + $0x980] sm:$0xff]
    %v383 = vld [vmem:[%s1 + $0x988] sm:$0xff]
    %v384 = vld [vmem:[%s1 + $0x990] sm:$0xff]
    %v385 = vld [vmem:[%s1 + $0x998] sm:$0xff]
    %v386 = vld [vmem:[%s1 + $0x9a0] sm:$0xff]
    %v387 = vld [vmem:[%s1 + $0x9a8] sm:$0xff]
    %v388 = vld [vmem:[%s1 + $0x9b0] sm:$0xff]
    %v389 = vld [vmem:[%s1 + $0x9b8] sm:$0xff]
    %v390 = vld [vmem:[%s1 + $0x9c0] sm:$0xff]
    %v391 = vld [vmem:[%s1 + $0x9c8] sm:$0xff]
    %v392 = vld [vmem:[%s1 + $0x9d0] sm:$0xff]
    %v393 = vld [vmem:[%s1 + $0x9d8] sm:$0xff]
    %v394 = vld [vmem:[%s1 + $0x9e0] sm:$0xff]
    %v395 = vld [vmem:[%s1 + $0x9e8] sm:$0xff]
    %v396 = vld [vmem:[%s1 + $0x9f0] sm:$0xff]
    %v397 = vld [vmem:[%s1 + $0x9f8] sm:$0xff]
    %v398 = vld [vmem:[%s1 + $0xa00] sm:$0xff]
    %v399 = vld [vmem:[%s1 + $0xa08] sm:$0xff]
    %v400 = vld [vmem:[%s1 + $0xa10] sm:$0xff]
    %v401 = vld [vmem:[%s1 + $0xa18] sm:$0xff]
    %v402 = vld [vmem:[%s1 + $0xa20] sm:$0xff]
    %v403 = vld [vmem:[%s1 + $0xa28] sm:$0xff]
    %v404 = vld [vmem:[%s1 + $0xa30] sm:$0xff]
    %v405 = vld [vmem:[%s1 + $0xa38] sm:$0xff]
    %v406 = vld [vmem:[%s1 + $0xa40] sm:$0xff]
    %v407 = vld [vmem:[%s1 + $0xa48] sm:$0xff]
    %v408 = vld [vmem:[%s1 + $0xa50] sm:$0xff]
    %v409 = vld [vmem:[%s1 + $0xa58] sm:$0xff]
    %v410 = vld [vmem:[%s1 + $0xa60] sm:$0xff]
    %v411 = vld [vmem:[%s1 + $0xa68] sm:$0xff]
    %v412 = vld [vmem:[%s1 + $0xa70] sm:$0xff]
    %v413 = vld [vmem:[%s1 + $0xa78] sm:$0xff]
    %v414 = vld [vmem:[%s1 + $0xa80] sm:$0xff]
    %v415 = vld [vmem:[%s1 + $0xa88] sm:$0xff]
    %v416 = vld [vmem:[%s1 + $0xa90] sm:$0xff]
    %v417 = vld [vmem:[%s1 + $0xa98] sm:$0xff]
    %v418 = vld [vmem:[%s1 + $0xaa0] sm:$0xff]
    %v419 = vld [vmem:[%s1 + $0xaa8] sm:$0xff]
    %v420 = vld [vmem:[%s1 + $0xab0] sm:$0xff]
    %v421 = vld [vmem:[%s1 + $0xab8] sm:$0xff]
    %v422 = vld [vmem:[%s1 + $0xac0] sm:$0xff]
    %v423 = vld [vmem:[%s1 + $0xac8] sm:$0xff]
    %v424 = vld [vmem:[%s1 + $0xad0] sm:$0xff]
    %v425 = vld [vmem:[%s1 + $0xad8] sm:$0xff]
    %v426 = vld [vmem:[%s1 + $0xae0] sm:$0xff]
    %v427 = vld [vmem:[%s1 + $0xae8] sm:$0xff]
    %v428 = vld [vmem:[%s1 + $0xaf0] sm:$0xff]
    %v429 = vld [vmem:[%s1 + $0xaf8] sm:$0xff]
    %v430 = vld [vmem:[%s1 + $0xb00] sm:$0xff]
    %v431 = vld [vmem:[%s1 + $0xb08] sm:$0xff]
    %v432 = vld [vmem:[%s1 + $0xb10] sm:$0xff]
    %v433 = vld [vmem:[%s1 + $0xb18] sm:$0xff]
    %v434 = vld [vmem:[%s1 + $0xb20] sm:$0xff]
    %v435 = vld [vmem:[%s1 + $0xb28] sm:$0xff]
    %v436 = vld [vmem:[%s1 + $0xb30] sm:$0xff]
    %v437 = vld [vmem:[%s1 + $0xb38] sm:$0xff]
    %v438 = vld [vmem:[%s1 + $0xb40] sm:$0xff]
    %v439 = vld [vmem:[%s1 + $0xb48] sm:$0xff]
    %v440 = vld [vmem:[%s1 + $0xb50] sm:$0xff]
    %v441 = vld [vmem:[%s1 + $0xb58] sm:$0xff]
    %v442 = vld [vmem:[%s1 + $0xb60] sm:$0xff]
    %v443 = vld [vmem:[%s1 + $0xb68] sm:$0xff]
    %v444 = vld [vmem:[%s1 + $0xb70] sm:$0xff]
    %v445 = vld [vmem:[%s1 + $0xb78] sm:$0xff]
    %v446 = vld [vmem:[%s1 + $0xb80] sm:$0xff]
    %v447 = vld [vmem:[%s1 + $0xb88] sm:$0xff]
    %v448 = vld [vmem:[%s1 + $0xb90] sm:$0xff]
    %v449 = vld [vmem:[%s1 + $0xb98] sm:$0xff]
    %v450 = vld [vmem:[%s1 + $0xba0] sm:$0xff]
    %v451 = vld [vmem:[%s1 + $0xba8] sm:$0xff]
    %v452 = vld [vmem:[%s1 + $0xbb0] sm:$0xff]
    %v453 = vld [vmem:[%s1 + $0xbb8] sm:$0xff]
    %v454 = vld [vmem:[%s1 + $0xbc0] sm:$0xff]
    %v455 = vld [vmem:[%s1 + $0xbc8] sm:$0xff]
    %v456 = vld [vmem:[%s1 + $0xbd0] sm:$0xff]
    %v457 = vld [vmem:[%s1 + $0xbd8] sm:$0xff]
    %v458 = vld [vmem:[%s1 + $0xbe0] sm:$0xff]
    %v459 = vld [vmem:[%s1 + $0xbe8] sm:$0xff]
    %v460 = vld [vmem:[%s1 + $0xbf0] sm:$0xff]
    %v461 = vld [vmem:[%s1 + $0xbf8] sm:$0xff]
    %v462 = vld [vmem:[%s6] sm:$0xff]
    %463 = vmatprep.subr.mxu0 0.0
    %464 = vmatpush1.msra.mxu0 %v78
    %465 = vmatprep.subr.mxu0 0.0
    %466 = vmatpush1.msra.mxu0 %v79
    %467 = vmatprep.subr.mxu0 0.0
    %468 = vmatpush1.msra.mxu0 %v80
    %469 = vmatprep.subr.mxu0 0.0
    %470 = vmatpush1.msra.mxu0 %v81
    %471 = vmatprep.subr.mxu0 0.0
    %472 = vmatpush1.msra.mxu0 %v82
    %473 = vmatprep.subr.mxu0 0.0
    %474 = vmatpush1.msra.mxu0 %v83
    %475 = vmatprep.subr.mxu0 0.0
    %476 = vmatpush1.msra.mxu0 %v84
    %477 = vmatprep.subr.mxu0 0.0
    %478 = vmatpush1.msra.mxu0 %v85
    %479 = vmatprep.subr.mxu0 0.0
    %480 = vmatpush1.msra.mxu0 %v86
    %481 = vmatprep.subr.mxu0 0.0
    %482 = vmatpush1.msra.mxu0 %v87
    %483 = vmatprep.subr.mxu0 0.0
    %484 = vmatpush1.msra.mxu0 %v88
    %485 = vmatprep.subr.mxu0 0.0
    %486 = vmatpush1.msra.mxu0 %v89
    %487 = vmatprep.subr.mxu0 0.0
    %488 = vmatpush1.msra.mxu0 %v90
    %489 = vmatprep.subr.mxu0 0.0
    %490 = vmatpush1.msra.mxu0 %v91
    %491 = vmatprep.subr.mxu0 0.0
    %492 = vmatpush1.msra.mxu0 %v92
    %493 = vmatprep.subr.mxu0 0.0
    %494 = vmatpush1.msra.mxu0 %v93
    %495 = vmatprep.subr.mxu0 0.0
    %496 = vmatpush1.msra.mxu0 %v94
    %497 = vmatprep.subr.mxu0 0.0
    %498 = vmatpush1.msra.mxu0 %v95
    %499 = vmatprep.subr.mxu0 0.0
    %500 = vmatpush1.msra.mxu0 %v96
    %501 = vmatprep.subr.mxu0 0.0
    %502 = vmatpush1.msra.mxu0 %v97
    %503 = vmatprep.subr.mxu0 0.0
    %504 = vmatpush1.msra.mxu0 %v98
    %505 = vmatprep.subr.mxu0 0.0
    %506 = vmatpush1.msra.mxu0 %v99
    %507 = vmatprep.subr.mxu0 0.0
    %508 = vmatpush1.msra.mxu0 %v100
    %509 = vmatprep.subr.mxu0 0.0
    %510 = vmatpush1.msra.mxu0 %v101
    %511 = vmatprep.subr.mxu0 0.0
    %512 = vmatpush1.msra.mxu0 %v102
    %513 = vmatprep.subr.mxu0 0.0
    %514 = vmatpush1.msra.mxu0 %v103
    %515 = vmatprep.subr.mxu0 0.0
    %516 = vmatpush1.msra.mxu0 %v104
    %517 = vmatprep.subr.mxu0 0.0
    %518 = vmatpush1.msra.mxu0 %v105
    %519 = vmatprep.subr.mxu0 0.0
    %520 = vmatpush1.msra.mxu0 %v106
    %521 = vmatprep.subr.mxu0 0.0
    %522 = vmatpush1.msra.mxu0 %v107
    %523 = vmatprep.subr.mxu0 0.0
    %524 = vmatpush1.msra.mxu0 %v108
    %525 = vmatprep.subr.mxu0 0.0
    %526 = vmatpush1.msra.mxu0 %v109
    %527 = vmatprep.mubr.f32.mxu0 %v31
    %528 = vmatmul.mubr.f32.gmra.mrb[0].mxu0 %v30
    %v529 = vpop.f32.mrb[0].mxu0
    %v530 = vadd.f32 %v462, %v529
    %v531 = vpop.f32.mrb[0].mxu0
    %532 = vmatprep.mubr.f32.mxu0 %v55
    %533 = vmatmul.mubr.f32.gmra.mrb[0].mxu0 %v54
    %v534 = vpop.f32.mrb[0].mxu0
    %v535 = vadd.f32 %v462, %v534
    %v536 = vpop.f32.mrb[0].mxu0
    %537 = vdwg.mxu0
    %538 = vmatprep.subr.mxu0 0.0
    %539 = vmatpush1.msra.mxu0 %v110
    %540 = vmatprep.subr.mxu0 0.0
    %541 = vmatpush1.msra.mxu0 %v111
    %542 = vmatprep.subr.mxu0 0.0
    %543 = vmatpush1.msra.mxu0 %v112
    %544 = vmatprep.subr.mxu0 0.0
    %545 = vmatpush1.msra.mxu0 %v113
    %546 = vmatprep.subr.mxu0 0.0
    %547 = vmatpush1.msra.mxu0 %v114
    %548 = vmatprep.subr.mxu0 0.0
    %549 = vmatpush1.msra.mxu0 %v115
    %550 = vmatprep.subr.mxu0 0.0
    %551 = vmatpush1.msra.mxu0 %v116
    %552 = vmatprep.subr.mxu0 0.0
    %553 = vmatpush1.msra.mxu0 %v117
    %554 = vmatprep.subr.mxu0 0.0
    %555 = vmatpush1.msra.mxu0 %v118
    %556 = vmatprep.subr.mxu0 0.0
    %557 = vmatpush1.msra.mxu0 %v119
    %558 = vmatprep.subr.mxu0 0.0
    %559 = vmatpush1.msra.mxu0 %v120
    %560 = vmatprep.subr.mxu0 0.0
    %561 = vmatpush1.msra.mxu0 %v121
    %562 = vmatprep.subr.mxu0 0.0
    %563 = vmatpush1.msra.mxu0 %v122
    %564 = vmatprep.subr.mxu0 0.0
    %565 = vmatpush1.msra.mxu0 %v123
    %566 = vmatprep.subr.mxu0 0.0
    %567 = vmatpush1.msra.mxu0 %v124
    %568 = vmatprep.subr.mxu0 0.0
    %569 = vmatpush1.msra.mxu0 %v125
    %570 = vmatprep.subr.mxu0 0.0
    %571 = vmatpush1.msra.mxu0 %v126
    %572 = vmatprep.subr.mxu0 0.0
    %573 = vmatpush1.msra.mxu0 %v127
    %574 = vmatprep.subr.mxu0 0.0
    %575 = vmatpush1.msra.mxu0 %v128
    %576 = vmatprep.subr.mxu0 0.0
    %577 = vmatpush1.msra.mxu0 %v129
    %578 = vmatprep.subr.mxu0 0.0
    %579 = vmatpush1.msra.mxu0 %v130
    %580 = vmatprep.subr.mxu0 0.0
    %581 = vmatpush1.msra.mxu0 %v131
    %582 = vmatprep.subr.mxu0 0.0
    %583 = vmatpush1.msra.mxu0 %v132
    %584 = vmatprep.subr.mxu0 0.0
    %585 = vmatpush1.msra.mxu0 %v133
    %586 = vmatprep.subr.mxu0 0.0
    %587 = vmatpush1.msra.mxu0 %v134
    %588 = vmatprep.subr.mxu0 0.0
    %589 = vmatpush1.msra.mxu0 %v135
    %590 = vmatprep.subr.mxu0 0.0
    %591 = vmatpush1.msra.mxu0 %v136
    %592 = vmatprep.subr.mxu0 0.0
    %593 = vmatpush1.msra.mxu0 %v137
    %594 = vmatprep.subr.mxu0 0.0
    %595 = vmatpush1.msra.mxu0 %v138
    %596 = vmatprep.subr.mxu0 0.0
    %597 = vmatpush1.msra.mxu0 %v139
    %598 = vmatprep.subr.mxu0 0.0
    %599 = vmatpush1.msra.mxu0 %v140
    %600 = vmatprep.subr.mxu0 0.0
    %601 = vmatpush1.msra.mxu0 %v141
    %602 = vmatprep.mubr.f32.mxu0 %v33
    %603 = vmatmul.mubr.f32.gmra.mrb[0].mxu0 %v32
    %v604 = vpop.f32.mrb[0].mxu0
    %v605 = vadd.f32 %v530, %v604
    %v606 = vpop.f32.mrb[0].mxu0
    %607 = vmatprep.mubr.f32.mxu0 %v57
    %608 = vmatmul.mubr.f32.gmra.mrb[0].mxu0 %v56
    %v609 = vpop.f32.mrb[0].mxu0
    %v610 = vadd.f32 %v535, %v609
    %v611 = vpop.f32.mrb[0].mxu0
    %612 = vdwg.mxu0
    %613 = vmatprep.subr.mxu0 0.0
    %614 = vmatpush1.msra.mxu0 %v142
    %615 = vmatprep.subr.mxu0 0.0
    %616 = vmatpush1.msra.mxu0 %v143
    %617 = vmatprep.subr.mxu0 0.0
    %618 = vmatpush1.msra.mxu0 %v144
    %619 = vmatprep.subr.mxu0 0.0
    %620 = vmatpush1.msra.mxu0 %v145
    %621 = vmatprep.subr.mxu0 0.0
    %622 = vmatpush1.msra.mxu0 %v146
    %623 = vmatprep.subr.mxu0 0.0
    %624 = vmatpush1.msra.mxu0 %v147
    %625 = vmatprep.subr.mxu0 0.0
    %626 = vmatpush1.msra.mxu0 %v148
    %627 = vmatprep.subr.mxu0 0.0
    %628 = vmatpush1.msra.mxu0 %v149
    %629 = vmatprep.subr.mxu0 0.0
    %630 = vmatpush1.msra.mxu0 %v150
    %631 = vmatprep.subr.mxu0 0.0
    %632 = vmatpush1.msra.mxu0 %v151
    %633 = vmatprep.subr.mxu0 0.0
    %634 = vmatpush1.msra.mxu0 %v152
    %635 = vmatprep.subr.mxu0 0.0
    %636 = vmatpush1.msra.mxu0 %v153
    %637 = vmatprep.subr.mxu0 0.0
    %638 = vmatpush1.msra.mxu0 %v154
    %639 = vmatprep.subr.mxu0 0.0
    %640 = vmatpush1.msra.mxu0 %v155
    %641 = vmatprep.subr.mxu0 0.0
    %642 = vmatpush1.msra.mxu0 %v156
    %643 = vmatprep.subr.mxu0 0.0
    %644 = vmatpush1.msra.mxu0 %v157
    %645 = vmatprep.subr.mxu0 0.0
    %646 = vmatpush1.msra.mxu0 %v158
    %647 = vmatprep.subr.mxu0 0.0
    %648 = vmatpush1.msra.mxu0 %v159
    %649 = vmatprep.subr.mxu0 0.0
    %650 = vmatpush1.msra.mxu0 %v160
    %651 = vmatprep.subr.mxu0 0.0
    %652 = vmatpush1.msra.mxu0 %v161
    %653 = vmatprep.subr.mxu0 0.0
    %654 = vmatpush1.msra.mxu0 %v162
    %655 = vmatprep.subr.mxu0 0.0
    %656 = vmatpush1.msra.mxu0 %v163
    %657 = vmatprep.subr.mxu0 0.0
    %658 = vmatpush1.msra.mxu0 %v164
    %659 = vmatprep.subr.mxu0 0.0
    %660 = vmatpush1.msra.mxu0 %v165
    %661 = vmatprep.subr.mxu0 0.0
    %662 = vmatpush1.msra.mxu0 %v166
    %663 = vmatprep.subr.mxu0 0.0
    %664 = vmatpush1.msra.mxu0 %v167
    %665 = vmatprep.subr.mxu0 0.0
    %666 = vmatpush1.msra.mxu0 %v168
    %667 = vmatprep.subr.mxu0 0.0
    %668 = vmatpush1.msra.mxu0 %v169
    %669 = vmatprep.subr.mxu0 0.0
    %670 = vmatpush1.msra.mxu0 %v170
    %671 = vmatprep.subr.mxu0 0.0
    %672 = vmatpush1.msra.mxu0 %v171
    %673 = vmatprep.subr.mxu0 0.0
    %674 = vmatpush1.msra.mxu0 %v172
    %675 = vmatprep.subr.mxu0 0.0
    %676 = vmatpush1.msra.mxu0 %v173
    %677 = vmatprep.mubr.f32.mxu0 %v35
    %678 = vmatmul.mubr.f32.gmra.mrb[0].mxu0 %v34
    %v679 = vpop.f32.mrb[0].mxu0
    %v680 = vadd.f32 %v605, %v679
    %v681 = vpop.f32.mrb[0].mxu0
    %682 = vmatprep.mubr.f32.mxu0 %v59
    %683 = vmatmul.mubr.f32.gmra.mrb[0].mxu0 %v58
    %v684 = vpop.f32.mrb[0].mxu0
    %v685 = vadd.f32 %v610, %v684
    %v686 = vpop.f32.mrb[0].mxu0
    %687 = vdwg.mxu0
    %688 = vmatprep.subr.mxu0 0.0
    %689 = vmatpush1.msra.mxu0 %v174
    %690 = vmatprep.subr.mxu0 0.0
    %691 = vmatpush1.msra.mxu0 %v175
    %692 = vmatprep.subr.mxu0 0.0
    %693 = vmatpush1.msra.mxu0 %v176
    %694 = vmatprep.subr.mxu0 0.0
    %695 = vmatpush1.msra.mxu0 %v177
    %696 = vmatprep.subr.mxu0 0.0
    %697 = vmatpush1.msra.mxu0 %v178
    %698 = vmatprep.subr.mxu0 0.0
    %699 = vmatpush1.msra.mxu0 %v179
    %700 = vmatprep.subr.mxu0 0.0
    %701 = vmatpush1.msra.mxu0 %v180
    %702 = vmatprep.subr.mxu0 0.0
    %703 = vmatpush1.msra.mxu0 %v181
    %704 = vmatprep.subr.mxu0 0.0
    %705 = vmatpush1.msra.mxu0 %v182
    %706 = vmatprep.subr.mxu0 0.0
    %707 = vmatpush1.msra.mxu0 %v183
    %708 = vmatprep.subr.mxu0 0.0
    %709 = vmatpush1.msra.mxu0 %v184
    %710 = vmatprep.subr.mxu0 0.0
    %711 = vmatpush1.msra.mxu0 %v185
    %712 = vmatprep.subr.mxu0 0.0
    %713 = vmatpush1.msra.mxu0 %v186
    %714 = vmatprep.subr.mxu0 0.0
    %715 = vmatpush1.msra.mxu0 %v187
    %716 = vmatprep.subr.mxu0 0.0
    %717 = vmatpush1.msra.mxu0 %v188
    %718 = vmatprep.subr.mxu0 0.0
    %719 = vmatpush1.msra.mxu0 %v189
    %720 = vmatprep.subr.mxu0 0.0
    %721 = vmatpush1.msra.mxu0 %v190
    %722 = vmatprep.subr.mxu0 0.0
    %723 = vmatpush1.msra.mxu0 %v191
    %724 = vmatprep.subr.mxu0 0.0
    %725 = vmatpush1.msra.mxu0 %v192
    %726 = vmatprep.subr.mxu0 0.0
    %727 = vmatpush1.msra.mxu0 %v193
    %728 = vmatprep.subr.mxu0 0.0
    %729 = vmatpush1.msra.mxu0 %v194
    %730 = vmatprep.subr.mxu0 0.0
    %731 = vmatpush1.msra.mxu0 %v195
    %732 = vmatprep.subr.mxu0 0.0
    %733 = vmatpush1.msra.mxu0 %v196
    %734 = vmatprep.subr.mxu0 0.0
    %735 = vmatpush1.msra.mxu0 %v197
    %736 = vmatprep.subr.mxu0 0.0
    %737 = vmatpush1.msra.mxu0 %v198
    %738 = vmatprep.subr.mxu0 0.0
    %739 = vmatpush1.msra.mxu0 %v199
    %740 = vmatprep.subr.mxu0 0.0
    %741 = vmatpush1.msra.mxu0 %v200
    %742 = vmatprep.subr.mxu0 0.0
    %743 = vmatpush1.msra.mxu0 %v201
    %744 = vmatprep.subr.mxu0 0.0
    %745 = vmatpush1.msra.mxu0 %v202
    %746 = vmatprep.subr.mxu0 0.0
    %747 = vmatpush1.msra.mxu0 %v203
    %748 = vmatprep.subr.mxu0 0.0
    %749 = vmatpush1.msra.mxu0 %v204
    %750 = vmatprep.subr.mxu0 0.0
    %751 = vmatpush1.msra.mxu0 %v205
    %752 = vmatprep.mubr.f32.mxu0 %v37
    %753 = vmatmul.mubr.f32.gmra.mrb[0].mxu0 %v36
    %v754 = vpop.f32.mrb[0].mxu0
    %v755 = vadd.f32 %v680, %v754
    %v756 = vpop.f32.mrb[0].mxu0
    %757 = vmatprep.mubr.f32.mxu0 %v61
    %758 = vmatmul.mubr.f32.gmra.mrb[0].mxu0 %v60
    %v759 = vpop.f32.mrb[0].mxu0
    %v760 = vadd.f32 %v685, %v759
    %v761 = vpop.f32.mrb[0].mxu0
    %762 = vdwg.mxu0
    %763 = vmatprep.subr.mxu0 0.0
    %764 = vmatpush1.msra.mxu0 %v206
    %765 = vmatprep.subr.mxu0 0.0
    %766 = vmatpush1.msra.mxu0 %v207
    %767 = vmatprep.subr.mxu0 0.0
    %768 = vmatpush1.msra.mxu0 %v208
    %769 = vmatprep.subr.mxu0 0.0
    %770 = vmatpush1.msra.mxu0 %v209
    %771 = vmatprep.subr.mxu0 0.0
    %772 = vmatpush1.msra.mxu0 %v210
    %773 = vmatprep.subr.mxu0 0.0
    %774 = vmatpush1.msra.mxu0 %v211
    %775 = vmatprep.subr.mxu0 0.0
    %776 = vmatpush1.msra.mxu0 %v212
    %777 = vmatprep.subr.mxu0 0.0
    %778 = vmatpush1.msra.mxu0 %v213
    %779 = vmatprep.subr.mxu0 0.0
    %780 = vmatpush1.msra.mxu0 %v214
    %781 = vmatprep.subr.mxu0 0.0
    %782 = vmatpush1.msra.mxu0 %v215
    %783 = vmatprep.subr.mxu0 0.0
    %784 = vmatpush1.msra.mxu0 %v216
    %785 = vmatprep.subr.mxu0 0.0
    %786 = vmatpush1.msra.mxu0 %v217
    %787 = vmatprep.subr.mxu0 0.0
    %788 = vmatpush1.msra.mxu0 %v218
    %789 = vmatprep.subr.mxu0 0.0
    %790 = vmatpush1.msra.mxu0 %v219
    %791 = vmatprep.subr.mxu0 0.0
    %792 = vmatpush1.msra.mxu0 %v220
    %793 = vmatprep.subr.mxu0 0.0
    %794 = vmatpush1.msra.mxu0 %v221
    %795 = vmatprep.subr.mxu0 0.0
    %796 = vmatpush1.msra.mxu0 %v222
    %797 = vmatprep.subr.mxu0 0.0
    %798 = vmatpush1.msra.mxu0 %v223
    %799 = vmatprep.subr.mxu0 0.0
    %800 = vmatpush1.msra.mxu0 %v224
    %801 = vmatprep.subr.mxu0 0.0
    %802 = vmatpush1.msra.mxu0 %v225
    %803 = vmatprep.subr.mxu0 0.0
    %804 = vmatpush1.msra.mxu0 %v226
    %805 = vmatprep.subr.mxu0 0.0
    %806 = vmatpush1.msra.mxu0 %v227
    %807 = vmatprep.subr.mxu0 0.0
    %808 = vmatpush1.msra.mxu0 %v228
    %809 = vmatprep.subr.mxu0 0.0
    %810 = vmatpush1.msra.mxu0 %v229
    %811 = vmatprep.subr.mxu0 0.0
    %812 = vmatpush1.msra.mxu0 %v230
    %813 = vmatprep.subr.mxu0 0.0
    %814 = vmatpush1.msra.mxu0 %v231
    %815 = vmatprep.subr.mxu0 0.0
    %816 = vmatpush1.msra.mxu0 %v232
    %817 = vmatprep.subr.mxu0 0.0
    %818 = vmatpush1.msra.mxu0 %v233
    %819 = vmatprep.subr.mxu0 0.0
    %820 = vmatpush1.msra.mxu0 %v234
    %821 = vmatprep.subr.mxu0 0.0
    %822 = vmatpush1.msra.mxu0 %v235
    %823 = vmatprep.subr.mxu0 0.0
    %824 = vmatpush1.msra.mxu0 %v236
    %825 = vmatprep.subr.mxu0 0.0
    %826 = vmatpush1.msra.mxu0 %v237
    %827 = vmatprep.mubr.f32.mxu0 %v39
    %828 = vmatmul.mubr.f32.gmra.mrb[0].mxu0 %v38
    %v829 = vpop.f32.mrb[0].mxu0
    %v830 = vadd.f32 %v755, %v829
    %v831 = vpop.f32.mrb[0].mxu0
    %832 = vmatprep.mubr.f32.mxu0 %v63
    %833 = vmatmul.mubr.f32.gmra.mrb[0].mxu0 %v62
    %v834 = vpop.f32.mrb[0].mxu0
    %v835 = vadd.f32 %v760, %v834
    %v836 = vpop.f32.mrb[0].mxu0
    %837 = vdwg.mxu0
    %838 = vmatprep.subr.mxu0 0.0
    %839 = vmatpush1.msra.mxu0 %v238
    %840 = vmatprep.subr.mxu0 0.0
    %841 = vmatpush1.msra.mxu0 %v239
    %842 = vmatprep.subr.mxu0 0.0
    %843 = vmatpush1.msra.mxu0 %v240
    %844 = vmatprep.subr.mxu0 0.0
    %845 = vmatpush1.msra.mxu0 %v241
    %846 = vmatprep.subr.mxu0 0.0
    %847 = vmatpush1.msra.mxu0 %v242
    %848 = vmatprep.subr.mxu0 0.0
    %849 = vmatpush1.msra.mxu0 %v243
    %850 = vmatprep.subr.mxu0 0.0
    %851 = vmatpush1.msra.mxu0 %v244
    %852 = vmatprep.subr.mxu0 0.0
    %853 = vmatpush1.msra.mxu0 %v245
    %854 = vmatprep.subr.mxu0 0.0
    %855 = vmatpush1.msra.mxu0 %v246
    %856 = vmatprep.subr.mxu0 0.0
    %857 = vmatpush1.msra.mxu0 %v247
    %858 = vmatprep.subr.mxu0 0.0
    %859 = vmatpush1.msra.mxu0 %v248
    %860 = vmatprep.subr.mxu0 0.0
    %861 = vmatpush1.msra.mxu0 %v249
    %862 = vmatprep.subr.mxu0 0.0
    %863 = vmatpush1.msra.mxu0 %v250
    %864 = vmatprep.subr.mxu0 0.0
    %865 = vmatpush1.msra.mxu0 %v251
    %866 = vmatprep.subr.mxu0 0.0
    %867 = vmatpush1.msra.mxu0 %v252
    %868 = vmatprep.subr.mxu0 0.0
    %869 = vmatpush1.msra.mxu0 %v253
    %870 = vmatprep.subr.mxu0 0.0
    %871 = vmatpush1.msra.mxu0 %v254
    %872 = vmatprep.subr.mxu0 0.0
    %873 = vmatpush1.msra.mxu0 %v255
    %874 = vmatprep.subr.mxu0 0.0
    %875 = vmatpush1.msra.mxu0 %v256
    %876 = vmatprep.subr.mxu0 0.0
    %877 = vmatpush1.msra.mxu0 %v257
    %878 = vmatprep.subr.mxu0 0.0
    %879 = vmatpush1.msra.mxu0 %v258
    %880 = vmatprep.subr.mxu0 0.0
    %881 = vmatpush1.msra.mxu0 %v259
    %882 = vmatprep.subr.mxu0 0.0
    %883 = vmatpush1.msra.mxu0 %v260
    %884 = vmatprep.subr.mxu0 0.0
    %885 = vmatpush1.msra.mxu0 %v261
    %886 = vmatprep.subr.mxu0 0.0
    %887 = vmatpush1.msra.mxu0 %v262
    %888 = vmatprep.subr.mxu0 0.0
    %889 = vmatpush1.msra.mxu0 %v263
    %890 = vmatprep.subr.mxu0 0.0
    %891 = vmatpush1.msra.mxu0 %v264
    %892 = vmatprep.subr.mxu0 0.0
    %893 = vmatpush1.msra.mxu0 %v265
    %894 = vmatprep.subr.mxu0 0.0
    %895 = vmatpush1.msra.mxu0 %v266
    %896 = vmatprep.subr.mxu0 0.0
    %897 = vmatpush1.msra.mxu0 %v267
    %898 = vmatprep.subr.mxu0 0.0
    %899 = vmatpush1.msra.mxu0 %v268
    %900 = vmatprep.subr.mxu0 0.0
    %901 = vmatpush1.msra.mxu0 %v269
    %902 = vmatprep.mubr.f32.mxu0 %v41
    %903 = vmatmul.mubr.f32.gmra.mrb[0].mxu0 %v40
    %v904 = vpop.f32.mrb[0].mxu0
    %v905 = vadd.f32 %v830, %v904
    %v906 = vpop.f32.mrb[0].mxu0
    %907 = vmatprep.mubr.f32.mxu0 %v65
    %908 = vmatmul.mubr.f32.gmra.mrb[0].mxu0 %v64
    %v909 = vpop.f32.mrb[0].mxu0
    %v910 = vadd.f32 %v835, %v909
    %v911 = vpop.f32.mrb[0].mxu0
    %912 = vdwg.mxu0
    %913 = vmatprep.subr.mxu0 0.0
    %914 = vmatpush1.msra.mxu0 %v270
    %915 = vmatprep.subr.mxu0 0.0
    %916 = vmatpush1.msra.mxu0 %v271
    %917 = vmatprep.subr.mxu0 0.0
    %918 = vmatpush1.msra.mxu0 %v272
    %919 = vmatprep.subr.mxu0 0.0
    %920 = vmatpush1.msra.mxu0 %v273
    %921 = vmatprep.subr.mxu0 0.0
    %922 = vmatpush1.msra.mxu0 %v274
    %923 = vmatprep.subr.mxu0 0.0
    %924 = vmatpush1.msra.mxu0 %v275
    %925 = vmatprep.subr.mxu0 0.0
    %926 = vmatpush1.msra.mxu0 %v276
    %927 = vmatprep.subr.mxu0 0.0
    %928 = vmatpush1.msra.mxu0 %v277
    %929 = vmatprep.subr.mxu0 0.0
    %930 = vmatpush1.msra.mxu0 %v278
    %931 = vmatprep.subr.mxu0 0.0
    %932 = vmatpush1.msra.mxu0 %v279
    %933 = vmatprep.subr.mxu0 0.0
    %934 = vmatpush1.msra.mxu0 %v280
    %935 = vmatprep.subr.mxu0 0.0
    %936 = vmatpush1.msra.mxu0 %v281
    %937 = vmatprep.subr.mxu0 0.0
    %938 = vmatpush1.msra.mxu0 %v282
    %939 = vmatprep.subr.mxu0 0.0
    %940 = vmatpush1.msra.mxu0 %v283
    %941 = vmatprep.subr.mxu0 0.0
    %942 = vmatpush1.msra.mxu0 %v284
    %943 = vmatprep.subr.mxu0 0.0
    %944 = vmatpush1.msra.mxu0 %v285
    %945 = vmatprep.subr.mxu0 0.0
    %946 = vmatpush1.msra.mxu0 %v286
    %947 = vmatprep.subr.mxu0 0.0
    %948 = vmatpush1.msra.mxu0 %v287
    %949 = vmatprep.subr.mxu0 0.0
    %950 = vmatpush1.msra.mxu0 %v288
    %951 = vmatprep.subr.mxu0 0.0
    %952 = vmatpush1.msra.mxu0 %v289
    %953 = vmatprep.subr.mxu0 0.0
    %954 = vmatpush1.msra.mxu0 %v290
    %955 = vmatprep.subr.mxu0 0.0
    %956 = vmatpush1.msra.mxu0 %v291
    %957 = vmatprep.subr.mxu0 0.0
    %958 = vmatpush1.msra.mxu0 %v292
    %959 = vmatprep.subr.mxu0 0.0
    %960 = vmatpush1.msra.mxu0 %v293
    %961 = vmatprep.subr.mxu0 0.0
    %962 = vmatpush1.msra.mxu0 %v294
    %963 = vmatprep.subr.mxu0 0.0
    %964 = vmatpush1.msra.mxu0 %v295
    %965 = vmatprep.subr.mxu0 0.0
    %966 = vmatpush1.msra.mxu0 %v296
    %967 = vmatprep.subr.mxu0 0.0
    %968 = vmatpush1.msra.mxu0 %v297
    %969 = vmatprep.subr.mxu0 0.0
    %970 = vmatpush1.msra.mxu0 %v298
    %971 = vmatprep.subr.mxu0 0.0
    %972 = vmatpush1.msra.mxu0 %v299
    %973 = vmatprep.subr.mxu0 0.0
    %974 = vmatpush1.msra.mxu0 %v300
    %975 = vmatprep.subr.mxu0 0.0
    %976 = vmatpush1.msra.mxu0 %v301
    %977 = vmatprep.mubr.f32.mxu0 %v43
    %978 = vmatmul.mubr.f32.gmra.mrb[0].mxu0 %v42
    %v979 = vpop.f32.mrb[0].mxu0
    %v980 = vadd.f32 %v905, %v979
    %v981 = vpop.f32.mrb[0].mxu0
    %982 = vmatprep.mubr.f32.mxu0 %v67
    %983 = vmatmul.mubr.f32.gmra.mrb[0].mxu0 %v66
    %v984 = vpop.f32.mrb[0].mxu0
    %v985 = vadd.f32 %v910, %v984
    %v986 = vpop.f32.mrb[0].mxu0
    %987 = vdwg.mxu0
    %988 = vmatprep.subr.mxu0 0.0
    %989 = vmatpush1.msra.mxu0 %v302
    %990 = vmatprep.subr.mxu0 0.0
    %991 = vmatpush1.msra.mxu0 %v303
    %992 = vmatprep.subr.mxu0 0.0
    %993 = vmatpush1.msra.mxu0 %v304
    %994 = vmatprep.subr.mxu0 0.0
    %995 = vmatpush1.msra.mxu0 %v305
    %996 = vmatprep.subr.mxu0 0.0
    %997 = vmatpush1.msra.mxu0 %v306
    %998 = vmatprep.subr.mxu0 0.0
    %999 = vmatpush1.msra.mxu0 %v307
    %1000 = vmatprep.subr.mxu0 0.0
    %1001 = vmatpush1.msra.mxu0 %v308
    %1002 = vmatprep.subr.mxu0 0.0
    %1003 = vmatpush1.msra.mxu0 %v309
    %1004 = vmatprep.subr.mxu0 0.0
    %1005 = vmatpush1.msra.mxu0 %v310
    %1006 = vmatprep.subr.mxu0 0.0
    %1007 = vmatpush1.msra.mxu0 %v311
    %1008 = vmatprep.subr.mxu0 0.0
    %1009 = vmatpush1.msra.mxu0 %v312
    %1010 = vmatprep.subr.mxu0 0.0
    %1011 = vmatpush1.msra.mxu0 %v313
    %1012 = vmatprep.subr.mxu0 0.0
    %1013 = vmatpush1.msra.mxu0 %v314
    %1014 = vmatprep.subr.mxu0 0.0
    %1015 = vmatpush1.msra.mxu0 %v315
    %1016 = vmatprep.subr.mxu0 0.0
    %1017 = vmatpush1.msra.mxu0 %v316
    %1018 = vmatprep.subr.mxu0 0.0
    %1019 = vmatpush1.msra.mxu0 %v317
    %1020 = vmatprep.subr.mxu0 0.0
    %1021 = vmatpush1.msra.mxu0 %v318
    %1022 = vmatprep.subr.mxu0 0.0
    %1023 = vmatpush1.msra.mxu0 %v319
    %1024 = vmatprep.subr.mxu0 0.0
    %1025 = vmatpush1.msra.mxu0 %v320
    %1026 = vmatprep.subr.mxu0 0.0
    %1027 = vmatpush1.msra.mxu0 %v321
    %1028 = vmatprep.subr.mxu0 0.0
    %1029 = vmatpush1.msra.mxu0 %v322
    %1030 = vmatprep.subr.mxu0 0.0
    %1031 = vmatpush1.msra.mxu0 %v323
    %1032 = vmatprep.subr.mxu0 0.0
    %1033 = vmatpush1.msra.mxu0 %v324
    %1034 = vmatprep.subr.mxu0 0.0
    %1035 = vmatpush1.msra.mxu0 %v325
    %1036 = vmatprep.subr.mxu0 0.0
    %1037 = vmatpush1.msra.mxu0 %v326
    %1038 = vmatprep.subr.mxu0 0.0
    %1039 = vmatpush1.msra.mxu0 %v327
    %1040 = vmatprep.subr.mxu0 0.0
    %1041 = vmatpush1.msra.mxu0 %v328
    %1042 = vmatprep.subr.mxu0 0.0
    %1043 = vmatpush1.msra.mxu0 %v329
    %1044 = vmatprep.subr.mxu0 0.0
    %1045 = vmatpush1.msra.mxu0 %v330
    %1046 = vmatprep.subr.mxu0 0.0
    %1047 = vmatpush1.msra.mxu0 %v331
    %1048 = vmatprep.subr.mxu0 0.0
    %1049 = vmatpush1.msra.mxu0 %v332
    %1050 = vmatprep.subr.mxu0 0.0
    %1051 = vmatpush1.msra.mxu0 %v333
    %1052 = vmatprep.mubr.f32.mxu0 %v45
    %1053 = vmatmul.mubr.f32.gmra.mrb[0].mxu0 %v44
    %v1054 = vpop.f32.mrb[0].mxu0
    %v1055 = vadd.f32 %v980, %v1054
    %v1056 = vpop.f32.mrb[0].mxu0
    %1057 = vmatprep.mubr.f32.mxu0 %v69
    %1058 = vmatmul.mubr.f32.gmra.mrb[0].mxu0 %v68
    %v1059 = vpop.f32.mrb[0].mxu0
    %v1060 = vadd.f32 %v985, %v1059
    %v1061 = vpop.f32.mrb[0].mxu0
    %1062 = vdwg.mxu0
    %1063 = vmatprep.subr.mxu0 0.0
    %1064 = vmatpush1.msra.mxu0 %v334
    %1065 = vmatprep.subr.mxu0 0.0
    %1066 = vmatpush1.msra.mxu0 %v335
    %1067 = vmatprep.subr.mxu0 0.0
    %1068 = vmatpush1.msra.mxu0 %v336
    %1069 = vmatprep.subr.mxu0 0.0
    %1070 = vmatpush1.msra.mxu0 %v337
    %1071 = vmatprep.subr.mxu0 0.0
    %1072 = vmatpush1.msra.mxu0 %v338
    %1073 = vmatprep.subr.mxu0 0.0
    %1074 = vmatpush1.msra.mxu0 %v339
    %1075 = vmatprep.subr.mxu0 0.0
    %1076 = vmatpush1.msra.mxu0 %v340
    %1077 = vmatprep.subr.mxu0 0.0
    %1078 = vmatpush1.msra.mxu0 %v341
    %1079 = vmatprep.subr.mxu0 0.0
    %1080 = vmatpush1.msra.mxu0 %v342
    %1081 = vmatprep.subr.mxu0 0.0
    %1082 = vmatpush1.msra.mxu0 %v343
    %1083 = vmatprep.subr.mxu0 0.0
    %1084 = vmatpush1.msra.mxu0 %v344
    %1085 = vmatprep.subr.mxu0 0.0
    %1086 = vmatpush1.msra.mxu0 %v345
    %1087 = vmatprep.subr.mxu0 0.0
    %1088 = vmatpush1.msra.mxu0 %v346
    %1089 = vmatprep.subr.mxu0 0.0
    %1090 = vmatpush1.msra.mxu0 %v347
    %1091 = vmatprep.subr.mxu0 0.0
    %1092 = vmatpush1.msra.mxu0 %v348
    %1093 = vmatprep.subr.mxu0 0.0
    %1094 = vmatpush1.msra.mxu0 %v349
    %1095 = vmatprep.subr.mxu0 0.0
    %1096 = vmatpush1.msra.mxu0 %v350
    %1097 = vmatprep.subr.mxu0 0.0
    %1098 = vmatpush1.msra.mxu0 %v351
    %1099 = vmatprep.subr.mxu0 0.0
    %1100 = vmatpush1.msra.mxu0 %v352
    %1101 = vmatprep.subr.mxu0 0.0
    %1102 = vmatpush1.msra.mxu0 %v353
    %1103 = vmatprep.subr.mxu0 0.0
    %1104 = vmatpush1.msra.mxu0 %v354
    %1105 = vmatprep.subr.mxu0 0.0
    %1106 = vmatpush1.msra.mxu0 %v355
    %1107 = vmatprep.subr.mxu0 0.0
    %1108 = vmatpush1.msra.mxu0 %v356
    %1109 = vmatprep.subr.mxu0 0.0
    %1110 = vmatpush1.msra.mxu0 %v357
    %1111 = vmatprep.subr.mxu0 0.0
    %1112 = vmatpush1.msra.mxu0 %v358
    %1113 = vmatprep.subr.mxu0 0.0
    %1114 = vmatpush1.msra.mxu0 %v359
    %1115 = vmatprep.subr.mxu0 0.0
    %1116 = vmatpush1.msra.mxu0 %v360
    %1117 = vmatprep.subr.mxu0 0.0
    %1118 = vmatpush1.msra.mxu0 %v361
    %1119 = vmatprep.subr.mxu0 0.0
    %1120 = vmatpush1.msra.mxu0 %v362
    %1121 = vmatprep.subr.mxu0 0.0
    %1122 = vmatpush1.msra.mxu0 %v363
    %1123 = vmatprep.subr.mxu0 0.0
    %1124 = vmatpush1.msra.mxu0 %v364
    %1125 = vmatprep.subr.mxu0 0.0
    %1126 = vmatpush1.msra.mxu0 %v365
    %1127 = vmatprep.mubr.f32.mxu0 %v47
    %1128 = vmatmul.mubr.f32.gmra.mrb[0].mxu0 %v46
    %v1129 = vpop.f32.mrb[0].mxu0
    %v1130 = vadd.f32 %v1055, %v1129
    %v1131 = vpop.f32.mrb[0].mxu0
    %1132 = vmatprep.mubr.f32.mxu0 %v71
    %1133 = vmatmul.mubr.f32.gmra.mrb[0].mxu0 %v70
    %v1134 = vpop.f32.mrb[0].mxu0
    %v1135 = vadd.f32 %v1060, %v1134
    %v1136 = vpop.f32.mrb[0].mxu0
    %1137 = vdwg.mxu0
    %1138 = vmatprep.subr.mxu0 0.0
    %1139 = vmatpush1.msra.mxu0 %v366
    %1140 = vmatprep.subr.mxu0 0.0
    %1141 = vmatpush1.msra.mxu0 %v367
    %1142 = vmatprep.subr.mxu0 0.0
    %1143 = vmatpush1.msra.mxu0 %v368
    %1144 = vmatprep.subr.mxu0 0.0
    %1145 = vmatpush1.msra.mxu0 %v369
    %1146 = vmatprep.subr.mxu0 0.0
    %1147 = vmatpush1.msra.mxu0 %v370
    %1148 = vmatprep.subr.mxu0 0.0
    %1149 = vmatpush1.msra.mxu0 %v371
    %1150 = vmatprep.subr.mxu0 0.0
    %1151 = vmatpush1.msra.mxu0 %v372
    %1152 = vmatprep.subr.mxu0 0.0
    %1153 = vmatpush1.msra.mxu0 %v373
    %1154 = vmatprep.subr.mxu0 0.0
    %1155 = vmatpush1.msra.mxu0 %v374
    %1156 = vmatprep.subr.mxu0 0.0
    %1157 = vmatpush1.msra.mxu0 %v375
    %1158 = vmatprep.subr.mxu0 0.0
    %1159 = vmatpush1.msra.mxu0 %v376
    %1160 = vmatprep.subr.mxu0 0.0
    %1161 = vmatpush1.msra.mxu0 %v377
    %1162 = vmatprep.subr.mxu0 0.0
    %1163 = vmatpush1.msra.mxu0 %v378
    %1164 = vmatprep.subr.mxu0 0.0
    %1165 = vmatpush1.msra.mxu0 %v379
    %1166 = vmatprep.subr.mxu0 0.0
    %1167 = vmatpush1.msra.mxu0 %v380
    %1168 = vmatprep.subr.mxu0 0.0
    %1169 = vmatpush1.msra.mxu0 %v381
    %1170 = vmatprep.subr.mxu0 0.0
    %1171 = vmatpush1.msra.mxu0 %v382
    %1172 = vmatprep.subr.mxu0 0.0
    %1173 = vmatpush1.msra.mxu0 %v383
    %1174 = vmatprep.subr.mxu0 0.0
    %1175 = vmatpush1.msra.mxu0 %v384
    %1176 = vmatprep.subr.mxu0 0.0
    %1177 = vmatpush1.msra.mxu0 %v385
    %1178 = vmatprep.subr.mxu0 0.0
    %1179 = vmatpush1.msra.mxu0 %v386
    %1180 = vmatprep.subr.mxu0 0.0
    %1181 = vmatpush1.msra.mxu0 %v387
    %1182 = vmatprep.subr.mxu0 0.0
    %1183 = vmatpush1.msra.mxu0 %v388
    %1184 = vmatprep.subr.mxu0 0.0
    %1185 = vmatpush1.msra.mxu0 %v389
    %1186 = vmatprep.subr.mxu0 0.0
    %1187 = vmatpush1.msra.mxu0 %v390
    %1188 = vmatprep.subr.mxu0 0.0
    %1189 = vmatpush1.msra.mxu0 %v391
    %1190 = vmatprep.subr.mxu0 0.0
    %1191 = vmatpush1.msra.mxu0 %v392
    %1192 = vmatprep.subr.mxu0 0.0
    %1193 = vmatpush1.msra.mxu0 %v393
    %1194 = vmatprep.subr.mxu0 0.0
    %1195 = vmatpush1.msra.mxu0 %v394
    %1196 = vmatprep.subr.mxu0 0.0
    %1197 = vmatpush1.msra.mxu0 %v395
    %1198 = vmatprep.subr.mxu0 0.0
    %1199 = vmatpush1.msra.mxu0 %v396
    %1200 = vmatprep.subr.mxu0 0.0
    %1201 = vmatpush1.msra.mxu0 %v397
    %1202 = vmatprep.mubr.f32.mxu0 %v49
    %1203 = vmatmul.mubr.f32.gmra.mrb[0].mxu0 %v48
    %v1204 = vpop.f32.mrb[0].mxu0
    %v1205 = vadd.f32 %v1130, %v1204
    %v1206 = vpop.f32.mrb[0].mxu0
    %1207 = vmatprep.mubr.f32.mxu0 %v73
    %1208 = vmatmul.mubr.f32.gmra.mrb[0].mxu0 %v72
    %v1209 = vpop.f32.mrb[0].mxu0
    %v1210 = vadd.f32 %v1135, %v1209
    %v1211 = vpop.f32.mrb[0].mxu0
    %1212 = vdwg.mxu0
    %1213 = vmatprep.subr.mxu0 0.0
    %1214 = vmatpush1.msra.mxu0 %v398
    %1215 = vmatprep.subr.mxu0 0.0
    %1216 = vmatpush1.msra.mxu0 %v399
    %1217 = vmatprep.subr.mxu0 0.0
    %1218 = vmatpush1.msra.mxu0 %v400
    %1219 = vmatprep.subr.mxu0 0.0
    %1220 = vmatpush1.msra.mxu0 %v401
    %1221 = vmatprep.subr.mxu0 0.0
    %1222 = vmatpush1.msra.mxu0 %v402
    %1223 = vmatprep.subr.mxu0 0.0
    %1224 = vmatpush1.msra.mxu0 %v403
    %1225 = vmatprep.subr.mxu0 0.0
    %1226 = vmatpush1.msra.mxu0 %v404
    %1227 = vmatprep.subr.mxu0 0.0
    %1228 = vmatpush1.msra.mxu0 %v405
    %1229 = vmatprep.subr.mxu0 0.0
    %1230 = vmatpush1.msra.mxu0 %v406
    %1231 = vmatprep.subr.mxu0 0.0
    %1232 = vmatpush1.msra.mxu0 %v407
    %1233 = vmatprep.subr.mxu0 0.0
    %1234 = vmatpush1.msra.mxu0 %v408
    %1235 = vmatprep.subr.mxu0 0.0
    %1236 = vmatpush1.msra.mxu0 %v409
    %1237 = vmatprep.subr.mxu0 0.0
    %1238 = vmatpush1.msra.mxu0 %v410
    %1239 = vmatprep.subr.mxu0 0.0
    %1240 = vmatpush1.msra.mxu0 %v411
    %1241 = vmatprep.subr.mxu0 0.0
    %1242 = vmatpush1.msra.mxu0 %v412
    %1243 = vmatprep.subr.mxu0 0.0
    %1244 = vmatpush1.msra.mxu0 %v413
    %1245 = vmatprep.subr.mxu0 0.0
    %1246 = vmatpush1.msra.mxu0 %v414
    %1247 = vmatprep.subr.mxu0 0.0
    %1248 = vmatpush1.msra.mxu0 %v415
    %1249 = vmatprep.subr.mxu0 0.0
    %1250 = vmatpush1.msra.mxu0 %v416
    %1251 = vmatprep.subr.mxu0 0.0
    %1252 = vmatpush1.msra.mxu0 %v417
    %1253 = vmatprep.subr.mxu0 0.0
    %1254 = vmatpush1.msra.mxu0 %v418
    %1255 = vmatprep.subr.mxu0 0.0
    %1256 = vmatpush1.msra.mxu0 %v419
    %1257 = vmatprep.subr.mxu0 0.0
    %1258 = vmatpush1.msra.mxu0 %v420
    %1259 = vmatprep.subr.mxu0 0.0
    %1260 = vmatpush1.msra.mxu0 %v421
    %1261 = vmatprep.subr.mxu0 0.0
    %1262 = vmatpush1.msra.mxu0 %v422
    %1263 = vmatprep.subr.mxu0 0.0
    %1264 = vmatpush1.msra.mxu0 %v423
    %1265 = vmatprep.subr.mxu0 0.0
    %1266 = vmatpush1.msra.mxu0 %v424
    %1267 = vmatprep.subr.mxu0 0.0
    %1268 = vmatpush1.msra.mxu0 %v425
    %1269 = vmatprep.subr.mxu0 0.0
    %1270 = vmatpush1.msra.mxu0 %v426
    %1271 = vmatprep.subr.mxu0 0.0
    %1272 = vmatpush1.msra.mxu0 %v427
    %1273 = vmatprep.subr.mxu0 0.0
    %1274 = vmatpush1.msra.mxu0 %v428
    %1275 = vmatprep.subr.mxu0 0.0
    %1276 = vmatpush1.msra.mxu0 %v429
    %1277 = vmatprep.mubr.f32.mxu0 %v51
    %1278 = vmatmul.mubr.f32.gmra.mrb[0].mxu0 %v50
    %v1279 = vpop.f32.mrb[0].mxu0
    %v1280 = vadd.f32 %v1205, %v1279
    %v1281 = vpop.f32.mrb[0].mxu0
    %1282 = vmatprep.mubr.f32.mxu0 %v75
    %1283 = vmatmul.mubr.f32.gmra.mrb[0].mxu0 %v74
    %v1284 = vpop.f32.mrb[0].mxu0
    %v1285 = vadd.f32 %v1210, %v1284
    %v1286 = vpop.f32.mrb[0].mxu0
    %1287 = vdwg.mxu0
    %1288 = vmatprep.subr.mxu0 0.0
    %1289 = vmatpush1.msra.mxu0 %v430
    %1290 = vmatprep.subr.mxu0 0.0
    %1291 = vmatpush1.msra.mxu0 %v431
    %1292 = vmatprep.subr.mxu0 0.0
    %1293 = vmatpush1.msra.mxu0 %v432
    %1294 = vmatprep.subr.mxu0 0.0
    %1295 = vmatpush1.msra.mxu0 %v433
    %1296 = vmatprep.subr.mxu0 0.0
    %1297 = vmatpush1.msra.mxu0 %v434
    %1298 = vmatprep.subr.mxu0 0.0
    %1299 = vmatpush1.msra.mxu0 %v435
    %1300 = vmatprep.subr.mxu0 0.0
    %1301 = vmatpush1.msra.mxu0 %v436
    %1302 = vmatprep.subr.mxu0 0.0
    %1303 = vmatpush1.msra.mxu0 %v437
    %1304 = vmatprep.subr.mxu0 0.0
    %1305 = vmatpush1.msra.mxu0 %v438
    %1306 = vmatprep.subr.mxu0 0.0
    %1307 = vmatpush1.msra.mxu0 %v439
    %1308 = vmatprep.subr.mxu0 0.0
    %1309 = vmatpush1.msra.mxu0 %v440
    %1310 = vmatprep.subr.mxu0 0.0
    %1311 = vmatpush1.msra.mxu0 %v441
    %1312 = vmatprep.subr.mxu0 0.0
    %1313 = vmatpush1.msra.mxu0 %v442
    %1314 = vmatprep.subr.mxu0 0.0
    %1315 = vmatpush1.msra.mxu0 %v443
    %1316 = vmatprep.subr.mxu0 0.0
    %1317 = vmatpush1.msra.mxu0 %v444
    %1318 = vmatprep.subr.mxu0 0.0
    %1319 = vmatpush1.msra.mxu0 %v445
    %1320 = vmatprep.subr.mxu0 0.0
    %1321 = vmatpush1.msra.mxu0 %v446
    %1322 = vmatprep.subr.mxu0 0.0
    %1323 = vmatpush1.msra.mxu0 %v447
    %1324 = vmatprep.subr.mxu0 0.0
    %1325 = vmatpush1.msra.mxu0 %v448
    %1326 = vmatprep.subr.mxu0 0.0
    %1327 = vmatpush1.msra.mxu0 %v449
    %1328 = vmatprep.subr.mxu0 0.0
    %1329 = vmatpush1.msra.mxu0 %v450
    %1330 = vmatprep.subr.mxu0 0.0
    %1331 = vmatpush1.msra.mxu0 %v451
    %1332 = vmatprep.subr.mxu0 0.0
    %1333 = vmatpush1.msra.mxu0 %v452
    %1334 = vmatprep.subr.mxu0 0.0
    %1335 = vmatpush1.msra.mxu0 %v453
    %1336 = vmatprep.subr.mxu0 0.0
    %1337 = vmatpush1.msra.mxu0 %v454
    %1338 = vmatprep.subr.mxu0 0.0
    %1339 = vmatpush1.msra.mxu0 %v455
    %1340 = vmatprep.subr.mxu0 0.0
    %1341 = vmatpush1.msra.mxu0 %v456
    %1342 = vmatprep.subr.mxu0 0.0
    %1343 = vmatpush1.msra.mxu0 %v457
    %1344 = vmatprep.subr.mxu0 0.0
    %1345 = vmatpush1.msra.mxu0 %v458
    %1346 = vmatprep.subr.mxu0 0.0
    %1347 = vmatpush1.msra.mxu0 %v459
    %1348 = vmatprep.subr.mxu0 0.0
    %1349 = vmatpush1.msra.mxu0 %v460
    %1350 = vmatprep.subr.mxu0 0.0
    %1351 = vmatpush1.msra.mxu0 %v461
    %1352 = vmatprep.mubr.f32.mxu0 %v53
    %1353 = vmatmul.mubr.f32.gmra.mrb[0].mxu0 %v52
    %v1354 = vpop.f32.mrb[0].mxu0
    %v1355 = vadd.f32 %v1280, %v1354
    %v1356 = vpop.f32.mrb[0].mxu0
    %1357 = vmatprep.mubr.f32.mxu0 %v77
    %1358 = vmatmul.mubr.f32.gmra.mrb[0].mxu0 %v76
    %v1359 = vpop.f32.mrb[0].mxu0
    %v1360 = vadd.f32 %v1285, %v1359
    %v1361 = vpop.f32.mrb[0].mxu0
    %1362 = vdwg.mxu0
    %v1363 = vlaneseq
    %v1364 = vshrl.u32 %v1363, 7
    %v1365 = vadd.s32 %v1364, 8
    %v1366 = vlaneseq
    %v1367 = vand.u32 %v1366, 127
    %v1368 = vxor.u32 %v1364, %v1367
    %v1369 = vxor.u32 %v1365, %v1367
    %vm1370 = vcmp.lt.s32.totalorder %v1368, 8
    %vm1371 = vcmp.lt.s32.totalorder %v1369, 8
    %v1372 = vand.u32 %v1367, 7
    %vm1373 = vcmp.lt.s32.totalorder %v1372, 5
    %vm1374 = vmand %vm1370, %vm1373
    %vm1375 = vmand %vm1371, %vm1373
    %v1376 = vsel %vm1374, 0.0, -1e+30
    %v1377 = vsel %vm1375, 0.0, -1e+30
    %v1378 = vld [vmem:[%s6 + $0x8] sm:$0x1]
    %v1379 = vld [vmem:[%s6 + $0x9] sm:$0x1]
    %vm1380 = vcmask 523264
    %v1381 = vsel %vm1380, %v1355, 0.0
    %1382 = vadd.xlane.f32.xlu0 %v1381
    %v1383 = vpop.xlane.xlu0 %1382
    %v1384 = vsel %vm1380, %v1360, 0.0
    %1385 = vadd.xlane.f32.xlu0 %v1384
    %v1386 = vpop.xlane.xlu0 %1385
    %v1387 = vrcp.pop 64.0
    %v1388 = vmul.f32 %v1383, %v1387
    %v1389 = vmul.f32 %v1386, %v1387
    %v1390 = vsub.f32 %v1355, %v1388
    %v1391 = vsub.f32 %v1360, %v1389
    %v1392 = vmul.f32 %v1390, %v1390
    %v1393 = vmul.f32 %v1391, %v1391
    %v1394 = vsel %vm1380, %v1392, 0.0
    %1395 = vadd.xlane.f32.xlu0 %v1394
    %v1396 = vpop.xlane.xlu0 %1395
    %v1397 = vsel %vm1380, %v1393, 0.0
    %1398 = vadd.xlane.f32.xlu0 %v1397
    %v1399 = vpop.xlane.xlu0 %1398
    %v1400 = vmul.f32 %v1396, %v1387
    %v1401 = vmul.f32 %v1399, %v1387
    %v1402 = vadd.f32 %v1400, 1e-06
    %v1403 = vadd.f32 %v1401, 1e-06
    %v1404 = vrsqrt.pop %v1402
    %v1405 = vrsqrt.pop %v1403
    %v1406 = vmul.f32 %v1390, %v1404
    %v1407 = vmul.f32 %v1391, %v1405
    %v1408 = vlaneseq
    %v1409 = vshrl.u32 %v1408, 7
    %v1410 = vsub.s32 0, %v1409
    %v1411 = vrot.slane %v1378, %v1410
    %v1412 = vmul.f32 %v1406, %v1411
    %v1413 = vmul.f32 %v1407, %v1411
    %v1414 = vlaneseq
    %v1415 = vshrl.u32 %v1414, 7
    %v1416 = vsub.s32 0, %v1415
    %v1417 = vrot.slane %v1379, %v1416
    %v1418 = vadd.f32 %v1412, %v1417
    %v1419 = vadd.f32 %v1413, %v1417
    %v1420 = vld [vmem:[%s2] sm:$0xff]
    %v1421 = vld [vmem:[%s2 + $0x8] sm:$0xff]
    %v1422 = vld [vmem:[%s2 + $0x10] sm:$0xff]
    %v1423 = vld [vmem:[%s2 + $0x18] sm:$0xff]
    %v1424 = vld [vmem:[%s2 + $0x20] sm:$0xff]
    %v1425 = vld [vmem:[%s2 + $0x28] sm:$0xff]
    %v1426 = vld [vmem:[%s2 + $0x30] sm:$0xff]
    %v1427 = vld [vmem:[%s2 + $0x38] sm:$0xff]
    %v1428 = vld [vmem:[%s2 + $0x40] sm:$0xff]
    %v1429 = vld [vmem:[%s2 + $0x48] sm:$0xff]
    %v1430 = vld [vmem:[%s2 + $0x50] sm:$0xff]
    %v1431 = vld [vmem:[%s2 + $0x58] sm:$0xff]
    %v1432 = vld [vmem:[%s2 + $0x60] sm:$0xff]
    %v1433 = vld [vmem:[%s2 + $0x68] sm:$0xff]
    %v1434 = vld [vmem:[%s2 + $0x70] sm:$0xff]
    %v1435 = vld [vmem:[%s2 + $0x78] sm:$0xff]
    %v1436 = vld [vmem:[%s7] ss:$8 sm:$0x3]
    %v1438 = vlaneseq
    %v1439 = vshrl.u32 %v1438, 7
    %v1440 = vsub.s32 0, %v1439
    %v1441 = vrot.slane %v1436, %v1440
    %v1442 = vlaneseq
    %v1443 = vshrl.u32 %v1442, 7
    %v1444 = vsub.s32 1, %v1443
    %v1445 = vrot.slane %v1436, %v1444
    %v1449 = vsel %vm1380, %v1418, 0
    %v1452 = vsel %vm1380, %v1419, 0
    %1454 = vmatprep.subr.mxu0 %v1421
    %1455 = vmatpush1.msra.mxu0 %v1420
    %1456 = vmatprep.subr.mxu0 %v1423
    %1457 = vmatpush1.msra.mxu0 %v1422
    %1458 = vmatprep.subr.mxu0 %v1425
    %1459 = vmatpush1.msra.mxu0 %v1424
    %1460 = vmatprep.subr.mxu0 %v1427
    %1461 = vmatpush1.msra.mxu0 %v1426
    %1462 = vmatprep.subr.mxu0 %v1429
    %1463 = vmatpush1.msra.mxu0 %v1428
    %1464 = vmatprep.subr.mxu0 %v1431
    %1465 = vmatpush1.msra.mxu0 %v1430
    %1466 = vmatprep.subr.mxu0 %v1433
    %1467 = vmatpush1.msra.mxu0 %v1432
    %1468 = vmatprep.subr.mxu0 %v1435
    %1469 = vmatpush1.msra.mxu0 %v1434
    %1470 = vmatprep.subr.mxu0 0.0
    %1471 = vmatpush1.msra.mxu0 0.0
    %1472 = vmatprep.subr.mxu0 0.0
    %1473 = vmatpush1.msra.mxu0 0.0
    %1474 = vmatprep.subr.mxu0 0.0
    %1475 = vmatpush1.msra.mxu0 0.0
    %1476 = vmatprep.subr.mxu0 0.0
    %1477 = vmatpush1.msra.mxu0 0.0
    %1478 = vmatprep.subr.mxu0 0.0
    %1479 = vmatpush1.msra.mxu0 0.0
    %1480 = vmatprep.subr.mxu0 0.0
    %1481 = vmatpush1.msra.mxu0 0.0
    %1482 = vmatprep.subr.mxu0 0.0
    %1483 = vmatpush1.msra.mxu0 0.0
    %1484 = vmatprep.subr.mxu0 0.0
    %1485 = vmatpush1.msra.mxu0 0.0
    %1486 = vmatprep.subr.mxu0 0.0
    %1487 = vmatpush1.msra.mxu0 0.0
    %1488 = vmatprep.subr.mxu0 0.0
    %1489 = vmatpush1.msra.mxu0 0.0
    %1490 = vmatprep.subr.mxu0 0.0
    %1491 = vmatpush1.msra.mxu0 0.0
    %1492 = vmatprep.subr.mxu0 0.0
    %1493 = vmatpush1.msra.mxu0 0.0
    %1494 = vmatprep.subr.mxu0 0.0
    %1495 = vmatpush1.msra.mxu0 0.0
    %1496 = vmatprep.subr.mxu0 0.0
    %1497 = vmatpush1.msra.mxu0 0.0
    %1498 = vmatprep.subr.mxu0 0.0
    %1499 = vmatpush1.msra.mxu0 0.0
    %1500 = vmatprep.subr.mxu0 0.0
    %1501 = vmatpush1.msra.mxu0 0.0
    %1502 = vmatprep.subr.mxu0 0.0
    %1503 = vmatpush1.msra.mxu0 0.0
    %1504 = vmatprep.subr.mxu0 0.0
    %1505 = vmatpush1.msra.mxu0 0.0
    %1506 = vmatprep.subr.mxu0 0.0
    %1507 = vmatpush1.msra.mxu0 0.0
    %1508 = vmatprep.subr.mxu0 0.0
    %1509 = vmatpush1.msra.mxu0 0.0
    %1510 = vmatprep.subr.mxu0 0.0
    %1511 = vmatpush1.msra.mxu0 0.0
    %1512 = vmatprep.subr.mxu0 0.0
    %1513 = vmatpush1.msra.mxu0 0.0
    %1514 = vmatprep.subr.mxu0 0.0
    %1515 = vmatpush1.msra.mxu0 0.0
    %1516 = vmatprep.subr.mxu0 0.0
    %1517 = vmatpush1.msra.mxu0 0.0
    %1518 = vmatprep.mubr.f32.mxu0 0.0
    %1519 = vmatmul.mubr.f32.gmra.mrb[0].mxu0 %v1449
    %v1520 = vpop.f32.mrb[0].mxu0
    %v1521 = vadd.f32 %v1441, %v1520
    %v1522 = vpop.f32.mrb[0].mxu0
    %v1523 = vadd.f32 %v1445, %v1522
    %1524 = vmatprep.mubr.f32.mxu0 0.0
    %1525 = vmatmul.mubr.f32.gmra.mrb[0].mxu0 %v1452
    %v1526 = vpop.f32.mrb[0].mxu0
    %v1527 = vadd.f32 %v1441, %v1526
    %v1528 = vpop.f32.mrb[0].mxu0
    %v1529 = vadd.f32 %v1445, %v1528
    %1530 = vdwg.mxu0
    %v1531 = vmul.f32 %v1521, 0.17677669
    %v1532 = vmul.f32 %v1527, 0.17677669
    %1535 = vrot.lane.b32.xlu0 %v1521, 64
    %v1536 = vpop.permute.xlu0 %1535
    %1537 = vrot.lane.b32.xlu0 %v1527, 64
    %v1538 = vpop.permute.xlu0 %1537
    %vm1539 = vcmask 261120
    %v1541 = vsel %vm1539, %v1531, 0
    %v1544 = vsel %vm1539, %v1532, 0
    %v1546 = vsel %vm1539, %v1536, 0
    %v1548 = vsel %vm1539, %v1538, 0
    %1550 = vmatprep.subr.mxu0 0.0
    %1551 = vmatpush1.xpose.msra.mxu0 %v1546
    %1552 = vmatprep.subr.mxu0 0.0
    %1553 = vmatpush1.xpose.msra.mxu0 %v1548
    %1554 = vmatprep.subr.mxu0 0.0
    %1555 = vmatpush1.xpose.msra.mxu0 0.0
    %1556 = vmatprep.subr.mxu0 0.0
    %1557 = vmatpush1.xpose.msra.mxu0 0.0
    %1558 = vmatprep.subr.mxu0 0.0
    %1559 = vmatpush1.xpose.msra.mxu0 0.0
    %1560 = vmatprep.subr.mxu0 0.0
    %1561 = vmatpush1.xpose.msra.mxu0 0.0
    %1562 = vmatprep.subr.mxu0 0.0
    %1563 = vmatpush1.xpose.msra.mxu0 0.0
    %1564 = vmatprep.subr.mxu0 0.0
    %1565 = vmatpush1.xpose.msra.mxu0 0.0
    %1566 = vmatprep.subr.mxu0 0.0
    %1567 = vmatpush1.xpose.msra.mxu0 0.0
    %1568 = vmatprep.subr.mxu0 0.0
    %1569 = vmatpush1.xpose.msra.mxu0 0.0
    %1570 = vmatprep.subr.mxu0 0.0
    %1571 = vmatpush1.xpose.msra.mxu0 0.0
    %1572 = vmatprep.subr.mxu0 0.0
    %1573 = vmatpush1.xpose.msra.mxu0 0.0
    %1574 = vmatprep.subr.mxu0 0.0
    %1575 = vmatpush1.xpose.msra.mxu0 0.0
    %1576 = vmatprep.subr.mxu0 0.0
    %1577 = vmatpush1.xpose.msra.mxu0 0.0
    %1578 = vmatprep.subr.mxu0 0.0
    %1579 = vmatpush1.xpose.msra.mxu0 0.0
    %1580 = vmatprep.subr.mxu0 0.0
    %1581 = vmatpush1.xpose.msra.mxu0 0.0
    %1582 = vmatprep.subr.mxu0 0.0
    %1583 = vmatpush1.xpose.msra.mxu0 0.0
    %1584 = vmatprep.subr.mxu0 0.0
    %1585 = vmatpush1.xpose.msra.mxu0 0.0
    %1586 = vmatprep.subr.mxu0 0.0
    %1587 = vmatpush1.xpose.msra.mxu0 0.0
    %1588 = vmatprep.subr.mxu0 0.0
    %1589 = vmatpush1.xpose.msra.mxu0 0.0
    %1590 = vmatprep.subr.mxu0 0.0
    %1591 = vmatpush1.xpose.msra.mxu0 0.0
    %1592 = vmatprep.subr.mxu0 0.0
    %1593 = vmatpush1.xpose.msra.mxu0 0.0
    %1594 = vmatprep.subr.mxu0 0.0
    %1595 = vmatpush1.xpose.msra.mxu0 0.0
    %1596 = vmatprep.subr.mxu0 0.0
    %1597 = vmatpush1.xpose.msra.mxu0 0.0
    %1598 = vmatprep.subr.mxu0 0.0
    %1599 = vmatpush1.xpose.msra.mxu0 0.0
    %1600 = vmatprep.subr.mxu0 0.0
    %1601 = vmatpush1.xpose.msra.mxu0 0.0
    %1602 = vmatprep.subr.mxu0 0.0
    %1603 = vmatpush1.xpose.msra.mxu0 0.0
    %1604 = vmatprep.subr.mxu0 0.0
    %1605 = vmatpush1.xpose.msra.mxu0 0.0
    %1606 = vmatprep.subr.mxu0 0.0
    %1607 = vmatpush1.xpose.msra.mxu0 0.0
    %1608 = vmatprep.subr.mxu0 0.0
    %1609 = vmatpush1.xpose.msra.mxu0 0.0
    %1610 = vmatprep.subr.mxu0 0.0
    %1611 = vmatpush1.xpose.msra.mxu0 0.0
    %1612 = vmatprep.subr.mxu0 0.0
    %1613 = vmatpush1.xpose.msra.mxu0 0.0
    %1614 = vmatprep.mubr.f32.mxu0 0.0
    %1615 = vmatmul.mubr.f32.gmra.mrb[0].mxu0 %v1541
    %v1616 = vpop.f32.mrb[0].mxu0
    %v1617 = vadd.f32 %v1376, %v1616
    %v1618 = vpop.f32.mrb[0].mxu0
    %1619 = vmatprep.mubr.f32.mxu0 0.0
    %1620 = vmatmul.mubr.f32.gmra.mrb[0].mxu0 %v1544
    %v1621 = vpop.f32.mrb[0].mxu0
    %v1622 = vadd.f32 %v1377, %v1621
    %v1623 = vpop.f32.mrb[0].mxu0
    %1624 = vdwg.mxu0
    %vm1625 = vcmask 130048
    %v1626 = vsel %vm1625, %v1617, -inf
    %1627 = vmax.xlane.f32.xlu0 %v1626
    %v1628 = vpop.xlane.xlu0 %1627
    %v1629 = vsel %vm1625, %v1622, -inf
    %1630 = vmax.xlane.f32.xlu0 %v1629
    %v1631 = vpop.xlane.xlu0 %1630
    %v1632 = vsub.f32 %v1617, %v1628
    %v1633 = vsub.f32 %v1622, %v1631
    %v1634 = vmul.f32 %v1632, 1.442695
    %v1635 = vpow.pop %v1634
    %v1636 = vmul.f32 %v1633, 1.442695
    %v1637 = vpow.pop %v1636
    %v1638 = vsel %vm1625, %v1635, 0.0
    %1639 = vadd.xlane.f32.xlu0 %v1638
    %v1640 = vpop.xlane.xlu0 %1639
    %v1641 = vsel %vm1625, %v1637, 0.0
    %1642 = vadd.xlane.f32.xlu0 %v1641
    %v1643 = vpop.xlane.xlu0 %1642
    %v1644 = vrcp.pop %v1640
    %v1645 = vmul.f32 %v1635, %v1644
    %v1646 = vrcp.pop %v1643
    %v1647 = vmul.f32 %v1637, %v1646
    %v1649 = vsel %vm1625, %v1645, 0
    %v1652 = vsel %vm1625, %v1647, 0
    %1654 = vmatprep.subr.mxu0 0.0
    %1655 = vmatpush1.msra.mxu0 %v1523
    %1656 = vmatprep.subr.mxu0 0.0
    %1657 = vmatpush1.msra.mxu0 %v1529
    %1658 = vmatprep.subr.mxu0 0.0
    %1659 = vmatpush1.msra.mxu0 0.0
    %1660 = vmatprep.subr.mxu0 0.0
    %1661 = vmatpush1.msra.mxu0 0.0
    %1662 = vmatprep.subr.mxu0 0.0
    %1663 = vmatpush1.msra.mxu0 0.0
    %1664 = vmatprep.subr.mxu0 0.0
    %1665 = vmatpush1.msra.mxu0 0.0
    %1666 = vmatprep.subr.mxu0 0.0
    %1667 = vmatpush1.msra.mxu0 0.0
    %1668 = vmatprep.subr.mxu0 0.0
    %1669 = vmatpush1.msra.mxu0 0.0
    %1670 = vmatprep.subr.mxu0 0.0
    %1671 = vmatpush1.msra.mxu0 0.0
    %1672 = vmatprep.subr.mxu0 0.0
    %1673 = vmatpush1.msra.mxu0 0.0
    %1674 = vmatprep.subr.mxu0 0.0
    %1675 = vmatpush1.msra.mxu0 0.0
    %1676 = vmatprep.subr.mxu0 0.0
    %1677 = vmatpush1.msra.mxu0 0.0
    %1678 = vmatprep.subr.mxu0 0.0
    %1679 = vmatpush1.msra.mxu0 0.0
    %1680 = vmatprep.subr.mxu0 0.0
    %1681 = vmatpush1.msra.mxu0 0.0
    %1682 = vmatprep.subr.mxu0 0.0
    %1683 = vmatpush1.msra.mxu0 0.0
    %1684 = vmatprep.subr.mxu0 0.0
    %1685 = vmatpush1.msra.mxu0 0.0
    %1686 = vmatprep.subr.mxu0 0.0
    %1687 = vmatpush1.msra.mxu0 0.0
    %1688 = vmatprep.subr.mxu0 0.0
    %1689 = vmatpush1.msra.mxu0 0.0
    %1690 = vmatprep.subr.mxu0 0.0
    %1691 = vmatpush1.msra.mxu0 0.0
    %1692 = vmatprep.subr.mxu0 0.0
    %1693 = vmatpush1.msra.mxu0 0.0
    %1694 = vmatprep.subr.mxu0 0.0
    %1695 = vmatpush1.msra.mxu0 0.0
    %1696 = vmatprep.subr.mxu0 0.0
    %1697 = vmatpush1.msra.mxu0 0.0
    %1698 = vmatprep.subr.mxu0 0.0
    %1699 = vmatpush1.msra.mxu0 0.0
    %1700 = vmatprep.subr.mxu0 0.0
    %1701 = vmatpush1.msra.mxu0 0.0
    %1702 = vmatprep.subr.mxu0 0.0
    %1703 = vmatpush1.msra.mxu0 0.0
    %1704 = vmatprep.subr.mxu0 0.0
    %1705 = vmatpush1.msra.mxu0 0.0
    %1706 = vmatprep.subr.mxu0 0.0
    %1707 = vmatpush1.msra.mxu0 0.0
    %1708 = vmatprep.subr.mxu0 0.0
    %1709 = vmatpush1.msra.mxu0 0.0
    %1710 = vmatprep.subr.mxu0 0.0
    %1711 = vmatpush1.msra.mxu0 0.0
    %1712 = vmatprep.subr.mxu0 0.0
    %1713 = vmatpush1.msra.mxu0 0.0
    %1714 = vmatprep.subr.mxu0 0.0
    %1715 = vmatpush1.msra.mxu0 0.0
    %1716 = vmatprep.subr.mxu0 0.0
    %1717 = vmatpush1.msra.mxu0 0.0
    %1718 = vmatprep.mubr.f32.mxu0 0.0
    %1719 = vmatmul.mubr.f32.gmra.mrb[0].mxu0 %v1649
    %v1720 = vpop.f32.mrb[0].mxu0
    %v1721 = vadd.f32 0.0, %v1720
    %v1722 = vpop.f32.mrb[0].mxu0
    %1723 = vmatprep.mubr.f32.mxu0 0.0
    %1724 = vmatmul.mubr.f32.gmra.mrb[0].mxu0 %v1652
    %v1725 = vpop.f32.mrb[0].mxu0
    %v1726 = vadd.f32 0.0, %v1725
    %v1727 = vpop.f32.mrb[0].mxu0
    %1728 = vdwg.mxu0
    %1729 = vrot.lane.b32.xlu0 %v1531, 96
    %v1730 = vpop.permute.xlu0 %1729
    %1731 = vrot.lane.b32.xlu0 %v1532, 96
    %v1732 = vpop.permute.xlu0 %1731
    %1733 = vrot.lane.b32.xlu0 %v1521, 32
    %v1734 = vpop.permute.xlu0 %1733
    %1735 = vrot.lane.b32.xlu0 %v1527, 32
    %v1736 = vpop.permute.xlu0 %1735
    %v1737 = vsel %vm1539, %v1730, 0
    %v1739 = vsel %vm1539, %v1732, 0
    %v1741 = vsel %vm1539, %v1734, 0
    %v1743 = vsel %vm1539, %v1736, 0
    %1745 = vmatprep.subr.mxu0 0.0
    %1746 = vmatpush1.xpose.msra.mxu0 %v1741
    %1747 = vmatprep.subr.mxu0 0.0
    %1748 = vmatpush1.xpose.msra.mxu0 %v1743
    %1749 = vmatprep.subr.mxu0 0.0
    %1750 = vmatpush1.xpose.msra.mxu0 0.0
    %1751 = vmatprep.subr.mxu0 0.0
    %1752 = vmatpush1.xpose.msra.mxu0 0.0
    %1753 = vmatprep.subr.mxu0 0.0
    %1754 = vmatpush1.xpose.msra.mxu0 0.0
    %1755 = vmatprep.subr.mxu0 0.0
    %1756 = vmatpush1.xpose.msra.mxu0 0.0
    %1757 = vmatprep.subr.mxu0 0.0
    %1758 = vmatpush1.xpose.msra.mxu0 0.0
    %1759 = vmatprep.subr.mxu0 0.0
    %1760 = vmatpush1.xpose.msra.mxu0 0.0
    %1761 = vmatprep.subr.mxu0 0.0
    %1762 = vmatpush1.xpose.msra.mxu0 0.0
    %1763 = vmatprep.subr.mxu0 0.0
    %1764 = vmatpush1.xpose.msra.mxu0 0.0
    %1765 = vmatprep.subr.mxu0 0.0
    %1766 = vmatpush1.xpose.msra.mxu0 0.0
    %1767 = vmatprep.subr.mxu0 0.0
    %1768 = vmatpush1.xpose.msra.mxu0 0.0
    %1769 = vmatprep.subr.mxu0 0.0
    %1770 = vmatpush1.xpose.msra.mxu0 0.0
    %1771 = vmatprep.subr.mxu0 0.0
    %1772 = vmatpush1.xpose.msra.mxu0 0.0
    %1773 = vmatprep.subr.mxu0 0.0
    %1774 = vmatpush1.xpose.msra.mxu0 0.0
    %1775 = vmatprep.subr.mxu0 0.0
    %1776 = vmatpush1.xpose.msra.mxu0 0.0
    %1777 = vmatprep.subr.mxu0 0.0
    %1778 = vmatpush1.xpose.msra.mxu0 0.0
    %1779 = vmatprep.subr.mxu0 0.0
    %1780 = vmatpush1.xpose.msra.mxu0 0.0
    %1781 = vmatprep.subr.mxu0 0.0
    %1782 = vmatpush1.xpose.msra.mxu0 0.0
    %1783 = vmatprep.subr.mxu0 0.0
    %1784 = vmatpush1.xpose.msra.mxu0 0.0
    %1785 = vmatprep.subr.mxu0 0.0
    %1786 = vmatpush1.xpose.msra.mxu0 0.0
    %1787 = vmatprep.subr.mxu0 0.0
    %1788 = vmatpush1.xpose.msra.mxu0 0.0
    %1789 = vmatprep.subr.mxu0 0.0
    %1790 = vmatpush1.xpose.msra.mxu0 0.0
    %1791 = vmatprep.subr.mxu0 0.0
    %1792 = vmatpush1.xpose.msra.mxu0 0.0
    %1793 = vmatprep.subr.mxu0 0.0
    %1794 = vmatpush1.xpose.msra.mxu0 0.0
    %1795 = vmatprep.subr.mxu0 0.0
    %1796 = vmatpush1.xpose.msra.mxu0 0.0
    %1797 = vmatprep.subr.mxu0 0.0
    %1798 = vmatpush1.xpose.msra.mxu0 0.0
    %1799 = vmatprep.subr.mxu0 0.0
    %1800 = vmatpush1.xpose.msra.mxu0 0.0
    %1801 = vmatprep.subr.mxu0 0.0
    %1802 = vmatpush1.xpose.msra.mxu0 0.0
    %1803 = vmatprep.subr.mxu0 0.0
    %1804 = vmatpush1.xpose.msra.mxu0 0.0
    %1805 = vmatprep.subr.mxu0 0.0
    %1806 = vmatpush1.xpose.msra.mxu0 0.0
    %1807 = vmatprep.subr.mxu0 0.0
    %1808 = vmatpush1.xpose.msra.mxu0 0.0
    %1809 = vmatprep.mubr.f32.mxu0 0.0
    %1810 = vmatmul.mubr.f32.gmra.mrb[0].mxu0 %v1737
    %v1811 = vpop.f32.mrb[0].mxu0
    %v1812 = vadd.f32 %v1376, %v1811
    %v1813 = vpop.f32.mrb[0].mxu0
    %1814 = vmatprep.mubr.f32.mxu0 0.0
    %1815 = vmatmul.mubr.f32.gmra.mrb[0].mxu0 %v1739
    %v1816 = vpop.f32.mrb[0].mxu0
    %v1817 = vadd.f32 %v1377, %v1816
    %v1818 = vpop.f32.mrb[0].mxu0
    %1819 = vdwg.mxu0
    %v1820 = vsel %vm1625, %v1812, -inf
    %1821 = vmax.xlane.f32.xlu0 %v1820
    %v1822 = vpop.xlane.xlu0 %1821
    %v1823 = vsel %vm1625, %v1817, -inf
    %1824 = vmax.xlane.f32.xlu0 %v1823
    %v1825 = vpop.xlane.xlu0 %1824
    %v1826 = vsub.f32 %v1812, %v1822
    %v1827 = vsub.f32 %v1817, %v1825
    %v1828 = vmul.f32 %v1826, 1.442695
    %v1829 = vpow.pop %v1828
    %v1830 = vmul.f32 %v1827, 1.442695
    %v1831 = vpow.pop %v1830
    %v1832 = vsel %vm1625, %v1829, 0.0
    %1833 = vadd.xlane.f32.xlu0 %v1832
    %v1834 = vpop.xlane.xlu0 %1833
    %v1835 = vsel %vm1625, %v1831, 0.0
    %1836 = vadd.xlane.f32.xlu0 %v1835
    %v1837 = vpop.xlane.xlu0 %1836
    %v1838 = vrcp.pop %v1834
    %v1839 = vmul.f32 %v1829, %v1838
    %v1840 = vrcp.pop %v1837
    %v1841 = vmul.f32 %v1831, %v1840
    %1844 = vrot.lane.b32.xlu0 %v1523, 96
    %v1845 = vpop.permute.xlu0 %1844
    %1846 = vrot.lane.b32.xlu0 %v1529, 96
    %v1847 = vpop.permute.xlu0 %1846
    %v1851 = vsel %vm1625, %v1839, 0
    %v1854 = vsel %vm1625, %v1841, 0
    %1856 = vmatprep.subr.mxu0 0.0
    %1857 = vmatpush1.msra.mxu0 %v1845
    %1858 = vmatprep.subr.mxu0 0.0
    %1859 = vmatpush1.msra.mxu0 %v1847
    %1860 = vmatprep.subr.mxu0 0.0
    %1861 = vmatpush1.msra.mxu0 0.0
    %1862 = vmatprep.subr.mxu0 0.0
    %1863 = vmatpush1.msra.mxu0 0.0
    %1864 = vmatprep.subr.mxu0 0.0
    %1865 = vmatpush1.msra.mxu0 0.0
    %1866 = vmatprep.subr.mxu0 0.0
    %1867 = vmatpush1.msra.mxu0 0.0
    %1868 = vmatprep.subr.mxu0 0.0
    %1869 = vmatpush1.msra.mxu0 0.0
    %1870 = vmatprep.subr.mxu0 0.0
    %1871 = vmatpush1.msra.mxu0 0.0
    %1872 = vmatprep.subr.mxu0 0.0
    %1873 = vmatpush1.msra.mxu0 0.0
    %1874 = vmatprep.subr.mxu0 0.0
    %1875 = vmatpush1.msra.mxu0 0.0
    %1876 = vmatprep.subr.mxu0 0.0
    %1877 = vmatpush1.msra.mxu0 0.0
    %1878 = vmatprep.subr.mxu0 0.0
    %1879 = vmatpush1.msra.mxu0 0.0
    %1880 = vmatprep.subr.mxu0 0.0
    %1881 = vmatpush1.msra.mxu0 0.0
    %1882 = vmatprep.subr.mxu0 0.0
    %1883 = vmatpush1.msra.mxu0 0.0
    %1884 = vmatprep.subr.mxu0 0.0
    %1885 = vmatpush1.msra.mxu0 0.0
    %1886 = vmatprep.subr.mxu0 0.0
    %1887 = vmatpush1.msra.mxu0 0.0
    %1888 = vmatprep.subr.mxu0 0.0
    %1889 = vmatpush1.msra.mxu0 0.0
    %1890 = vmatprep.subr.mxu0 0.0
    %1891 = vmatpush1.msra.mxu0 0.0
    %1892 = vmatprep.subr.mxu0 0.0
    %1893 = vmatpush1.msra.mxu0 0.0
    %1894 = vmatprep.subr.mxu0 0.0
    %1895 = vmatpush1.msra.mxu0 0.0
    %1896 = vmatprep.subr.mxu0 0.0
    %1897 = vmatpush1.msra.mxu0 0.0
    %1898 = vmatprep.subr.mxu0 0.0
    %1899 = vmatpush1.msra.mxu0 0.0
    %1900 = vmatprep.subr.mxu0 0.0
    %1901 = vmatpush1.msra.mxu0 0.0
    %1902 = vmatprep.subr.mxu0 0.0
    %1903 = vmatpush1.msra.mxu0 0.0
    %1904 = vmatprep.subr.mxu0 0.0
    %1905 = vmatpush1.msra.mxu0 0.0
    %1906 = vmatprep.subr.mxu0 0.0
    %1907 = vmatpush1.msra.mxu0 0.0
    %1908 = vmatprep.subr.mxu0 0.0
    %1909 = vmatpush1.msra.mxu0 0.0
    %1910 = vmatprep.subr.mxu0 0.0
    %1911 = vmatpush1.msra.mxu0 0.0
    %1912 = vmatprep.subr.mxu0 0.0
    %1913 = vmatpush1.msra.mxu0 0.0
    %1914 = vmatprep.subr.mxu0 0.0
    %1915 = vmatpush1.msra.mxu0 0.0
    %1916 = vmatprep.subr.mxu0 0.0
    %1917 = vmatpush1.msra.mxu0 0.0
    %1918 = vmatprep.subr.mxu0 0.0
    %1919 = vmatpush1.msra.mxu0 0.0
    %1920 = vmatprep.mubr.f32.mxu0 0.0
    %1921 = vmatmul.mubr.f32.gmra.mrb[0].mxu0 %v1851
    %v1922 = vpop.f32.mrb[0].mxu0
    %v1923 = vadd.f32 0.0, %v1922
    %v1924 = vpop.f32.mrb[0].mxu0
    %1925 = vmatprep.mubr.f32.mxu0 0.0
    %1926 = vmatmul.mubr.f32.gmra.mrb[0].mxu0 %v1854
    %v1927 = vpop.f32.mrb[0].mxu0
    %v1928 = vadd.f32 0.0, %v1927
    %v1929 = vpop.f32.mrb[0].mxu0
    %1930 = vdwg.mxu0
    %1933 = vrot.lane.b32.xlu0 %v1923, 32
    %v1934 = vpop.permute.xlu0 %1933
    %1935 = vrot.lane.b32.xlu0 %v1928, 32
    %v1936 = vpop.permute.xlu0 %1935
    %v1939 = vsel %vm1539, %v1721, %v1934
    %v1940 = vsel %vm1539, %v1726, %v1936
    %v1941 = vld [vmem:[%s3] sm:$0xff]
    %v1942 = vld [vmem:[%s3 + $0x8] sm:$0xff]
    %v1943 = vld [vmem:[%s3 + $0x10] sm:$0xff]
    %v1944 = vld [vmem:[%s3 + $0x18] sm:$0xff]
    %v1945 = vld [vmem:[%s3 + $0x20] sm:$0xff]
    %v1946 = vld [vmem:[%s3 + $0x28] sm:$0xff]
    %v1947 = vld [vmem:[%s3 + $0x30] sm:$0xff]
    %v1948 = vld [vmem:[%s3 + $0x38] sm:$0xff]
    %v1950 = vsel %vm1380, %v1939, 0
    %v1953 = vsel %vm1380, %v1940, 0
    %1955 = vmatprep.subr.mxu0 0.0
    %1956 = vmatpush1.msra.mxu0 %v1941
    %1957 = vmatprep.subr.mxu0 0.0
    %1958 = vmatpush1.msra.mxu0 %v1942
    %1959 = vmatprep.subr.mxu0 0.0
    %1960 = vmatpush1.msra.mxu0 %v1943
    %1961 = vmatprep.subr.mxu0 0.0
    %1962 = vmatpush1.msra.mxu0 %v1944
    %1963 = vmatprep.subr.mxu0 0.0
    %1964 = vmatpush1.msra.mxu0 %v1945
    %1965 = vmatprep.subr.mxu0 0.0
    %1966 = vmatpush1.msra.mxu0 %v1946
    %1967 = vmatprep.subr.mxu0 0.0
    %1968 = vmatpush1.msra.mxu0 %v1947
    %1969 = vmatprep.subr.mxu0 0.0
    %1970 = vmatpush1.msra.mxu0 %v1948
    %1971 = vmatprep.subr.mxu0 0.0
    %1972 = vmatpush1.msra.mxu0 0.0
    %1973 = vmatprep.subr.mxu0 0.0
    %1974 = vmatpush1.msra.mxu0 0.0
    %1975 = vmatprep.subr.mxu0 0.0
    %1976 = vmatpush1.msra.mxu0 0.0
    %1977 = vmatprep.subr.mxu0 0.0
    %1978 = vmatpush1.msra.mxu0 0.0
    %1979 = vmatprep.subr.mxu0 0.0
    %1980 = vmatpush1.msra.mxu0 0.0
    %1981 = vmatprep.subr.mxu0 0.0
    %1982 = vmatpush1.msra.mxu0 0.0
    %1983 = vmatprep.subr.mxu0 0.0
    %1984 = vmatpush1.msra.mxu0 0.0
    %1985 = vmatprep.subr.mxu0 0.0
    %1986 = vmatpush1.msra.mxu0 0.0
    %1987 = vmatprep.subr.mxu0 0.0
    %1988 = vmatpush1.msra.mxu0 0.0
    %1989 = vmatprep.subr.mxu0 0.0
    %1990 = vmatpush1.msra.mxu0 0.0
    %1991 = vmatprep.subr.mxu0 0.0
    %1992 = vmatpush1.msra.mxu0 0.0
    %1993 = vmatprep.subr.mxu0 0.0
    %1994 = vmatpush1.msra.mxu0 0.0
    %1995 = vmatprep.subr.mxu0 0.0
    %1996 = vmatpush1.msra.mxu0 0.0
    %1997 = vmatprep.subr.mxu0 0.0
    %1998 = vmatpush1.msra.mxu0 0.0
    %1999 = vmatprep.subr.mxu0 0.0
    %2000 = vmatpush1.msra.mxu0 0.0
    %2001 = vmatprep.subr.mxu0 0.0
    %2002 = vmatpush1.msra.mxu0 0.0
    %2003 = vmatprep.subr.mxu0 0.0
    %2004 = vmatpush1.msra.mxu0 0.0
    %2005 = vmatprep.subr.mxu0 0.0
    %2006 = vmatpush1.msra.mxu0 0.0
    %2007 = vmatprep.subr.mxu0 0.0
    %2008 = vmatpush1.msra.mxu0 0.0
    %2009 = vmatprep.subr.mxu0 0.0
    %2010 = vmatpush1.msra.mxu0 0.0
    %2011 = vmatprep.subr.mxu0 0.0
    %2012 = vmatpush1.msra.mxu0 0.0
    %2013 = vmatprep.subr.mxu0 0.0
    %2014 = vmatpush1.msra.mxu0 0.0
    %2015 = vmatprep.subr.mxu0 0.0
    %2016 = vmatpush1.msra.mxu0 0.0
    %2017 = vmatprep.subr.mxu0 0.0
    %2018 = vmatpush1.msra.mxu0 0.0
    %2019 = vmatprep.mubr.f32.mxu0 0.0
    %2020 = vmatmul.mubr.f32.gmra.mrb[0].mxu0 %v1950
    %v2021 = vpop.f32.mrb[0].mxu0
    %v2022 = vadd.f32 0.0, %v2021
    %v2023 = vpop.f32.mrb[0].mxu0
    %2024 = vmatprep.mubr.f32.mxu0 0.0
    %2025 = vmatmul.mubr.f32.gmra.mrb[0].mxu0 %v1953
    %v2026 = vpop.f32.mrb[0].mxu0
    %v2027 = vadd.f32 0.0, %v2026
    %v2028 = vpop.f32.mrb[0].mxu0
    %2029 = vdwg.mxu0
    %v2030 = vadd.f32 %v1355, %v2022
    %v2031 = vadd.f32 %v1360, %v2027
    %v2032 = vld [vmem:[%s6 + $0xa] sm:$0x1]
    %v2033 = vlaneseq
    %v2034 = vshrl.u32 %v2033, 7
    %v2035 = vsub.s32 0, %v2034
    %v2036 = vrot.slane %v2032, %v2035
    %v2037 = vadd.f32 %v2030, %v2036
    %v2038 = vadd.f32 %v2031, %v2036
    %v2039 = vld [vmem:[%s6 + $0xb] sm:$0x1]
    %v2040 = vld [vmem:[%s6 + $0xc] sm:$0x1]
    %v2041 = vsel %vm1380, %v2037, 0.0
    %2042 = vadd.xlane.f32.xlu0 %v2041
    %v2043 = vpop.xlane.xlu0 %2042
    %v2044 = vsel %vm1380, %v2038, 0.0
    %2045 = vadd.xlane.f32.xlu0 %v2044
    %v2046 = vpop.xlane.xlu0 %2045
    %v2047 = vmul.f32 %v2043, %v1387
    %v2048 = vmul.f32 %v2046, %v1387
    %v2049 = vsub.f32 %v2037, %v2047
    %v2050 = vsub.f32 %v2038, %v2048
    %v2051 = vmul.f32 %v2049, %v2049
    %v2052 = vmul.f32 %v2050, %v2050
    %v2053 = vsel %vm1380, %v2051, 0.0
    %2054 = vadd.xlane.f32.xlu0 %v2053
    %v2055 = vpop.xlane.xlu0 %2054
    %v2056 = vsel %vm1380, %v2052, 0.0
    %2057 = vadd.xlane.f32.xlu0 %v2056
    %v2058 = vpop.xlane.xlu0 %2057
    %v2059 = vmul.f32 %v2055, %v1387
    %v2060 = vmul.f32 %v2058, %v1387
    %v2061 = vadd.f32 %v2059, 1e-06
    %v2062 = vadd.f32 %v2060, 1e-06
    %v2063 = vrsqrt.pop %v2061
    %v2064 = vrsqrt.pop %v2062
    %v2065 = vmul.f32 %v2049, %v2063
    %v2066 = vmul.f32 %v2050, %v2064
    %v2067 = vlaneseq
    %v2068 = vshrl.u32 %v2067, 7
    %v2069 = vsub.s32 0, %v2068
    %v2070 = vrot.slane %v2039, %v2069
    %v2071 = vmul.f32 %v2065, %v2070
    %v2072 = vmul.f32 %v2066, %v2070
    %v2073 = vlaneseq
    %v2074 = vshrl.u32 %v2073, 7
    %v2075 = vsub.s32 0, %v2074
    %v2076 = vrot.slane %v2040, %v2075
    %v2077 = vadd.f32 %v2071, %v2076
    %v2078 = vadd.f32 %v2072, %v2076
    %s2079 = scalar_lea.vmem %s2, 256
    %v2080 = vld [vmem:[%s2079] sm:$0xff]
    %v2081 = vld [vmem:[%s2079 + $0x8] sm:$0xff]
    %v2082 = vld [vmem:[%s2079 + $0x10] sm:$0xff]
    %v2083 = vld [vmem:[%s2079 + $0x18] sm:$0xff]
    %v2084 = vld [vmem:[%s2079 + $0x20] sm:$0xff]
    %v2085 = vld [vmem:[%s2079 + $0x28] sm:$0xff]
    %v2086 = vld [vmem:[%s2079 + $0x30] sm:$0xff]
    %v2087 = vld [vmem:[%s2079 + $0x38] sm:$0xff]
    %v2088 = vld [vmem:[%s2079 + $0x40] sm:$0xff]
    %v2089 = vld [vmem:[%s2079 + $0x48] sm:$0xff]
    %v2090 = vld [vmem:[%s2079 + $0x50] sm:$0xff]
    %v2091 = vld [vmem:[%s2079 + $0x58] sm:$0xff]
    %v2092 = vld [vmem:[%s2079 + $0x60] sm:$0xff]
    %v2093 = vld [vmem:[%s2079 + $0x68] sm:$0xff]
    %v2094 = vld [vmem:[%s2079 + $0x70] sm:$0xff]
    %v2095 = vld [vmem:[%s2079 + $0x78] sm:$0xff]
    %s2096 = scalar_lea.vmem %s7, 2
    %v2097 = vld [vmem:[%s2096] ss:$8 sm:$0x3]
    %v2099 = vlaneseq
    %v2100 = vshrl.u32 %v2099, 7
    %v2101 = vsub.s32 0, %v2100
    %v2102 = vrot.slane %v2097, %v2101
    %v2103 = vlaneseq
    %v2104 = vshrl.u32 %v2103, 7
    %v2105 = vsub.s32 1, %v2104
    %v2106 = vrot.slane %v2097, %v2105
    %v2110 = vsel %vm1380, %v2077, 0
    %v2113 = vsel %vm1380, %v2078, 0
    %2115 = vmatprep.subr.mxu0 %v2081
    %2116 = vmatpush1.msra.mxu0 %v2080
    %2117 = vmatprep.subr.mxu0 %v2083
    %2118 = vmatpush1.msra.mxu0 %v2082
    %2119 = vmatprep.subr.mxu0 %v2085
    %2120 = vmatpush1.msra.mxu0 %v2084
    %2121 = vmatprep.subr.mxu0 %v2087
    %2122 = vmatpush1.msra.mxu0 %v2086
    %2123 = vmatprep.subr.mxu0 %v2089
    %2124 = vmatpush1.msra.mxu0 %v2088
    %2125 = vmatprep.subr.mxu0 %v2091
    %2126 = vmatpush1.msra.mxu0 %v2090
    %2127 = vmatprep.subr.mxu0 %v2093
    %2128 = vmatpush1.msra.mxu0 %v2092
    %2129 = vmatprep.subr.mxu0 %v2095
    %2130 = vmatpush1.msra.mxu0 %v2094
    %2131 = vmatprep.subr.mxu0 0.0
    %2132 = vmatpush1.msra.mxu0 0.0
    %2133 = vmatprep.subr.mxu0 0.0
    %2134 = vmatpush1.msra.mxu0 0.0
    %2135 = vmatprep.subr.mxu0 0.0
    %2136 = vmatpush1.msra.mxu0 0.0
    %2137 = vmatprep.subr.mxu0 0.0
    %2138 = vmatpush1.msra.mxu0 0.0
    %2139 = vmatprep.subr.mxu0 0.0
    %2140 = vmatpush1.msra.mxu0 0.0
    %2141 = vmatprep.subr.mxu0 0.0
    %2142 = vmatpush1.msra.mxu0 0.0
    %2143 = vmatprep.subr.mxu0 0.0
    %2144 = vmatpush1.msra.mxu0 0.0
    %2145 = vmatprep.subr.mxu0 0.0
    %2146 = vmatpush1.msra.mxu0 0.0
    %2147 = vmatprep.subr.mxu0 0.0
    %2148 = vmatpush1.msra.mxu0 0.0
    %2149 = vmatprep.subr.mxu0 0.0
    %2150 = vmatpush1.msra.mxu0 0.0
    %2151 = vmatprep.subr.mxu0 0.0
    %2152 = vmatpush1.msra.mxu0 0.0
    %2153 = vmatprep.subr.mxu0 0.0
    %2154 = vmatpush1.msra.mxu0 0.0
    %2155 = vmatprep.subr.mxu0 0.0
    %2156 = vmatpush1.msra.mxu0 0.0
    %2157 = vmatprep.subr.mxu0 0.0
    %2158 = vmatpush1.msra.mxu0 0.0
    %2159 = vmatprep.subr.mxu0 0.0
    %2160 = vmatpush1.msra.mxu0 0.0
    %2161 = vmatprep.subr.mxu0 0.0
    %2162 = vmatpush1.msra.mxu0 0.0
    %2163 = vmatprep.subr.mxu0 0.0
    %2164 = vmatpush1.msra.mxu0 0.0
    %2165 = vmatprep.subr.mxu0 0.0
    %2166 = vmatpush1.msra.mxu0 0.0
    %2167 = vmatprep.subr.mxu0 0.0
    %2168 = vmatpush1.msra.mxu0 0.0
    %2169 = vmatprep.subr.mxu0 0.0
    %2170 = vmatpush1.msra.mxu0 0.0
    %2171 = vmatprep.subr.mxu0 0.0
    %2172 = vmatpush1.msra.mxu0 0.0
    %2173 = vmatprep.subr.mxu0 0.0
    %2174 = vmatpush1.msra.mxu0 0.0
    %2175 = vmatprep.subr.mxu0 0.0
    %2176 = vmatpush1.msra.mxu0 0.0
    %2177 = vmatprep.subr.mxu0 0.0
    %2178 = vmatpush1.msra.mxu0 0.0
    %2179 = vmatprep.mubr.f32.mxu0 0.0
    %2180 = vmatmul.mubr.f32.gmra.mrb[0].mxu0 %v2110
    %v2181 = vpop.f32.mrb[0].mxu0
    %v2182 = vadd.f32 %v2102, %v2181
    %v2183 = vpop.f32.mrb[0].mxu0
    %v2184 = vadd.f32 %v2106, %v2183
    %2185 = vmatprep.mubr.f32.mxu0 0.0
    %2186 = vmatmul.mubr.f32.gmra.mrb[0].mxu0 %v2113
    %v2187 = vpop.f32.mrb[0].mxu0
    %v2188 = vadd.f32 %v2102, %v2187
    %v2189 = vpop.f32.mrb[0].mxu0
    %v2190 = vadd.f32 %v2106, %v2189
    %2191 = vdwg.mxu0
    %v2192 = vmul.f32 %v2182, 0.5
    %v2193 = vmul.f32 %v2184, 0.5
    %v2194 = vmul.f32 %v2188, 0.5
    %v2195 = vmul.f32 %v2190, 0.5
    %v2196 = vmul.f32 %v2182, 0.70710677
    %v2197 = vmul.f32 %v2184, 0.70710677
    %v2198 = vmul.f32 %v2188, 0.70710677
    %v2199 = vmul.f32 %v2190, 0.70710677
    %v2200 = vand.u32 2147483647, %v2196
    %v2201 = vand.u32 2147483647, %v2197
    %v2202 = vand.u32 2147483647, %v2198
    %v2203 = vand.u32 2147483647, %v2199
    %v2204 = vmul.f32 %v2200, 0.3275911
    %v2205 = vmul.f32 %v2201, 0.3275911
    %v2206 = vmul.f32 %v2202, 0.3275911
    %v2207 = vmul.f32 %v2203, 0.3275911
    %v2208 = vadd.f32 %v2204, 1.0
    %v2209 = vadd.f32 %v2205, 1.0
    %v2210 = vadd.f32 %v2206, 1.0
    %v2211 = vadd.f32 %v2207, 1.0
    %v2212 = vrcp.pop %v2208
    %v2213 = vmul.f32 1.0, %v2212
    %v2214 = vrcp.pop %v2209
    %v2215 = vmul.f32 1.0, %v2214
    %v2216 = vrcp.pop %v2210
    %v2217 = vmul.f32 1.0, %v2216
    %v2218 = vrcp.pop %v2211
    %v2219 = vmul.f32 1.0, %v2218
    %v2220 = vmul.f32 %v2213, 1.0614054
    %v2221 = vmul.f32 %v2215, 1.0614054
    %v2222 = vmul.f32 %v2217, 1.0614054
    %v2223 = vmul.f32 %v2219, 1.0614054
    %v2224 = vadd.f32 %v2220, -1.4531521
    %v2225 = vadd.f32 %v2221, -1.4531521
    %v2226 = vadd.f32 %v2222, -1.4531521
    %v2227 = vadd.f32 %v2223, -1.4531521
    %v2228 = vmul.f32 %v2224, %v2213
    %v2229 = vmul.f32 %v2225, %v2215
    %v2230 = vmul.f32 %v2226, %v2217
    %v2231 = vmul.f32 %v2227, %v2219
    %v2232 = vadd.f32 %v2228, 1.4214138
    %v2233 = vadd.f32 %v2229, 1.4214138
    %v2234 = vadd.f32 %v2230, 1.4214138
    %v2235 = vadd.f32 %v2231, 1.4214138
    %v2236 = vmul.f32 %v2232, %v2213
    %v2237 = vmul.f32 %v2233, %v2215
    %v2238 = vmul.f32 %v2234, %v2217
    %v2239 = vmul.f32 %v2235, %v2219
    %v2240 = vadd.f32 %v2236, -0.28449672
    %v2241 = vadd.f32 %v2237, -0.28449672
    %v2242 = vadd.f32 %v2238, -0.28449672
    %v2243 = vadd.f32 %v2239, -0.28449672
    %v2244 = vmul.f32 %v2240, %v2213
    %v2245 = vmul.f32 %v2241, %v2215
    %v2246 = vmul.f32 %v2242, %v2217
    %v2247 = vmul.f32 %v2243, %v2219
    %v2248 = vadd.f32 %v2244, 0.2548296
    %v2249 = vadd.f32 %v2245, 0.2548296
    %v2250 = vadd.f32 %v2246, 0.2548296
    %v2251 = vadd.f32 %v2247, 0.2548296
    %v2252 = vmul.f32 %v2248, %v2213
    %v2253 = vmul.f32 %v2249, %v2215
    %v2254 = vmul.f32 %v2250, %v2217
    %v2255 = vmul.f32 %v2251, %v2219
    %v2256 = vsub.f32 0.0, %v2200
    %v2257 = vsub.f32 0.0, %v2201
    %v2258 = vsub.f32 0.0, %v2202
    %v2259 = vsub.f32 0.0, %v2203
    %v2260 = vmul.f32 %v2256, %v2200
    %v2261 = vmul.f32 %v2257, %v2201
    %v2262 = vmul.f32 %v2258, %v2202
    %v2263 = vmul.f32 %v2259, %v2203
    %v2264 = vmul.f32 %v2260, 1.442695
    %v2265 = vpow.pop %v2264
    %v2266 = vmul.f32 %v2261, 1.442695
    %v2267 = vpow.pop %v2266
    %v2268 = vmul.f32 %v2262, 1.442695
    %v2269 = vpow.pop %v2268
    %v2270 = vmul.f32 %v2263, 1.442695
    %v2271 = vpow.pop %v2270
    %v2272 = vmul.f32 %v2252, %v2265
    %v2273 = vmul.f32 %v2253, %v2267
    %v2274 = vmul.f32 %v2254, %v2269
    %v2275 = vmul.f32 %v2255, %v2271
    %v2276 = vsub.f32 1.0, %v2272
    %v2277 = vsub.f32 1.0, %v2273
    %v2278 = vsub.f32 1.0, %v2274
    %v2279 = vsub.f32 1.0, %v2275
    %vm2280 = vcmp.ge.f32.partialorder %v2196, 0.0
    %vm2281 = vcmp.ge.f32.partialorder %v2197, 0.0
    %vm2282 = vcmp.ge.f32.partialorder %v2198, 0.0
    %vm2283 = vcmp.ge.f32.partialorder %v2199, 0.0
    %v2284 = vsub.f32 0.0, %v2276
    %v2285 = vsub.f32 0.0, %v2277
    %v2286 = vsub.f32 0.0, %v2278
    %v2287 = vsub.f32 0.0, %v2279
    %v2288 = vsel %vm2280, %v2276, %v2284
    %v2289 = vsel %vm2281, %v2277, %v2285
    %v2290 = vsel %vm2282, %v2278, %v2286
    %v2291 = vsel %vm2283, %v2279, %v2287
    %v2292 = vadd.f32 %v2288, 1.0
    %v2293 = vadd.f32 %v2289, 1.0
    %v2294 = vadd.f32 %v2290, 1.0
    %v2295 = vadd.f32 %v2291, 1.0
    %v2296 = vmul.f32 %v2192, %v2292
    %v2297 = vmul.f32 %v2193, %v2293
    %v2298 = vmul.f32 %v2194, %v2294
    %v2299 = vmul.f32 %v2195, %v2295
    %v2300 = vld [vmem:[%s4] sm:$0xff]
    %v2301 = vld [vmem:[%s4 + $0x8] sm:$0xff]
    %v2302 = vld [vmem:[%s4 + $0x10] sm:$0xff]
    %v2303 = vld [vmem:[%s4 + $0x18] sm:$0xff]
    %v2304 = vld [vmem:[%s4 + $0x20] sm:$0xff]
    %v2305 = vld [vmem:[%s4 + $0x28] sm:$0xff]
    %v2306 = vld [vmem:[%s4 + $0x30] sm:$0xff]
    %v2307 = vld [vmem:[%s4 + $0x38] sm:$0xff]
    %v2308 = vld [vmem:[%s4 + $0x40] sm:$0xff]
    %v2309 = vld [vmem:[%s4 + $0x48] sm:$0xff]
    %v2310 = vld [vmem:[%s4 + $0x50] sm:$0xff]
    %v2311 = vld [vmem:[%s4 + $0x58] sm:$0xff]
    %v2312 = vld [vmem:[%s4 + $0x60] sm:$0xff]
    %v2313 = vld [vmem:[%s4 + $0x68] sm:$0xff]
    %v2314 = vld [vmem:[%s4 + $0x70] sm:$0xff]
    %v2315 = vld [vmem:[%s4 + $0x78] sm:$0xff]
    %v2316 = vld [vmem:[%s4 + $0x80] sm:$0xff]
    %v2317 = vld [vmem:[%s4 + $0x88] sm:$0xff]
    %v2318 = vld [vmem:[%s4 + $0x90] sm:$0xff]
    %v2319 = vld [vmem:[%s4 + $0x98] sm:$0xff]
    %v2320 = vld [vmem:[%s4 + $0xa0] sm:$0xff]
    %v2321 = vld [vmem:[%s4 + $0xa8] sm:$0xff]
    %v2322 = vld [vmem:[%s4 + $0xb0] sm:$0xff]
    %v2323 = vld [vmem:[%s4 + $0xb8] sm:$0xff]
    %v2324 = vld [vmem:[%s4 + $0xc0] sm:$0xff]
    %v2325 = vld [vmem:[%s4 + $0xc8] sm:$0xff]
    %v2326 = vld [vmem:[%s4 + $0xd0] sm:$0xff]
    %v2327 = vld [vmem:[%s4 + $0xd8] sm:$0xff]
    %v2328 = vld [vmem:[%s4 + $0xe0] sm:$0xff]
    %v2329 = vld [vmem:[%s4 + $0xe8] sm:$0xff]
    %v2330 = vld [vmem:[%s4 + $0xf0] sm:$0xff]
    %v2331 = vld [vmem:[%s4 + $0xf8] sm:$0xff]
    %2332 = vmatprep.subr.mxu0 0.0
    %2333 = vmatpush1.msra.mxu0 %v2300
    %2334 = vmatprep.subr.mxu0 0.0
    %2335 = vmatpush1.msra.mxu0 %v2301
    %2336 = vmatprep.subr.mxu0 0.0
    %2337 = vmatpush1.msra.mxu0 %v2302
    %2338 = vmatprep.subr.mxu0 0.0
    %2339 = vmatpush1.msra.mxu0 %v2303
    %2340 = vmatprep.subr.mxu0 0.0
    %2341 = vmatpush1.msra.mxu0 %v2304
    %2342 = vmatprep.subr.mxu0 0.0
    %2343 = vmatpush1.msra.mxu0 %v2305
    %2344 = vmatprep.subr.mxu0 0.0
    %2345 = vmatpush1.msra.mxu0 %v2306
    %2346 = vmatprep.subr.mxu0 0.0
    %2347 = vmatpush1.msra.mxu0 %v2307
    %2348 = vmatprep.subr.mxu0 0.0
    %2349 = vmatpush1.msra.mxu0 %v2308
    %2350 = vmatprep.subr.mxu0 0.0
    %2351 = vmatpush1.msra.mxu0 %v2309
    %2352 = vmatprep.subr.mxu0 0.0
    %2353 = vmatpush1.msra.mxu0 %v2310
    %2354 = vmatprep.subr.mxu0 0.0
    %2355 = vmatpush1.msra.mxu0 %v2311
    %2356 = vmatprep.subr.mxu0 0.0
    %2357 = vmatpush1.msra.mxu0 %v2312
    %2358 = vmatprep.subr.mxu0 0.0
    %2359 = vmatpush1.msra.mxu0 %v2313
    %2360 = vmatprep.subr.mxu0 0.0
    %2361 = vmatpush1.msra.mxu0 %v2314
    %2362 = vmatprep.subr.mxu0 0.0
    %2363 = vmatpush1.msra.mxu0 %v2315
    %2364 = vmatprep.subr.mxu0 0.0
    %2365 = vmatpush1.msra.mxu0 %v2316
    %2366 = vmatprep.subr.mxu0 0.0
    %2367 = vmatpush1.msra.mxu0 %v2317
    %2368 = vmatprep.subr.mxu0 0.0
    %2369 = vmatpush1.msra.mxu0 %v2318
    %2370 = vmatprep.subr.mxu0 0.0
    %2371 = vmatpush1.msra.mxu0 %v2319
    %2372 = vmatprep.subr.mxu0 0.0
    %2373 = vmatpush1.msra.mxu0 %v2320
    %2374 = vmatprep.subr.mxu0 0.0
    %2375 = vmatpush1.msra.mxu0 %v2321
    %2376 = vmatprep.subr.mxu0 0.0
    %2377 = vmatpush1.msra.mxu0 %v2322
    %2378 = vmatprep.subr.mxu0 0.0
    %2379 = vmatpush1.msra.mxu0 %v2323
    %2380 = vmatprep.subr.mxu0 0.0
    %2381 = vmatpush1.msra.mxu0 %v2324
    %2382 = vmatprep.subr.mxu0 0.0
    %2383 = vmatpush1.msra.mxu0 %v2325
    %2384 = vmatprep.subr.mxu0 0.0
    %2385 = vmatpush1.msra.mxu0 %v2326
    %2386 = vmatprep.subr.mxu0 0.0
    %2387 = vmatpush1.msra.mxu0 %v2327
    %2388 = vmatprep.subr.mxu0 0.0
    %2389 = vmatpush1.msra.mxu0 %v2328
    %2390 = vmatprep.subr.mxu0 0.0
    %2391 = vmatpush1.msra.mxu0 %v2329
    %2392 = vmatprep.subr.mxu0 0.0
    %2393 = vmatpush1.msra.mxu0 %v2330
    %2394 = vmatprep.subr.mxu0 0.0
    %2395 = vmatpush1.msra.mxu0 %v2331
    %2396 = vmatprep.mubr.f32.mxu0 %v2297
    %2397 = vmatmul.mubr.f32.gmra.mrb[0].mxu0 %v2296
    %v2398 = vpop.f32.mrb[0].mxu0
    %v2399 = vadd.f32 0.0, %v2398
    %v2400 = vpop.f32.mrb[0].mxu0
    %2401 = vmatprep.mubr.f32.mxu0 %v2299
    %2402 = vmatmul.mubr.f32.gmra.mrb[0].mxu0 %v2298
    %v2403 = vpop.f32.mrb[0].mxu0
    %v2404 = vadd.f32 0.0, %v2403
    %v2405 = vpop.f32.mrb[0].mxu0
    %2406 = vdwg.mxu0
    %v2407 = vadd.f32 %v2037, %v2399
    %v2408 = vadd.f32 %v2038, %v2404
    %v2409 = vld [vmem:[%s6 + $0xd] sm:$0x1]
    %v2410 = vlaneseq
    %v2411 = vshrl.u32 %v2410, 7
    %v2412 = vsub.s32 0, %v2411
    %v2413 = vrot.slane %v2409, %v2412
    %v2414 = vadd.f32 %v2407, %v2413
    %v2415 = vadd.f32 %v2408, %v2413
    %v2416 = vld [vmem:[%s6 + $0xe] sm:$0x1]
    %v2417 = vld [vmem:[%s6 + $0xf] sm:$0x1]
    %v2418 = vsel %vm1380, %v2414, 0.0
    %2419 = vadd.xlane.f32.xlu0 %v2418
    %v2420 = vpop.xlane.xlu0 %2419
    %v2421 = vsel %vm1380, %v2415, 0.0
    %2422 = vadd.xlane.f32.xlu0 %v2421
    %v2423 = vpop.xlane.xlu0 %2422
    %v2424 = vmul.f32 %v2420, %v1387
    %v2425 = vmul.f32 %v2423, %v1387
    %v2426 = vsub.f32 %v2414, %v2424
    %v2427 = vsub.f32 %v2415, %v2425
    %v2428 = vmul.f32 %v2426, %v2426
    %v2429 = vmul.f32 %v2427, %v2427
    %v2430 = vsel %vm1380, %v2428, 0.0
    %2431 = vadd.xlane.f32.xlu0 %v2430
    %v2432 = vpop.xlane.xlu0 %2431
    %v2433 = vsel %vm1380, %v2429, 0.0
    %2434 = vadd.xlane.f32.xlu0 %v2433
    %v2435 = vpop.xlane.xlu0 %2434
    %v2436 = vmul.f32 %v2432, %v1387
    %v2437 = vmul.f32 %v2435, %v1387
    %v2438 = vadd.f32 %v2436, 1e-06
    %v2439 = vadd.f32 %v2437, 1e-06
    %v2440 = vrsqrt.pop %v2438
    %v2441 = vrsqrt.pop %v2439
    %v2442 = vmul.f32 %v2426, %v2440
    %v2443 = vmul.f32 %v2427, %v2441
    %v2444 = vlaneseq
    %v2445 = vshrl.u32 %v2444, 7
    %v2446 = vsub.s32 0, %v2445
    %v2447 = vrot.slane %v2416, %v2446
    %v2448 = vmul.f32 %v2442, %v2447
    %v2449 = vmul.f32 %v2443, %v2447
    %v2450 = vlaneseq
    %v2451 = vshrl.u32 %v2450, 7
    %v2452 = vsub.s32 0, %v2451
    %v2453 = vrot.slane %v2417, %v2452
    %v2454 = vadd.f32 %v2448, %v2453
    %v2455 = vadd.f32 %v2449, %v2453
    %s2456 = scalar_lea.vmem %s2, 128
    %v2457 = vld [vmem:[%s2456] sm:$0xff]
    %v2458 = vld [vmem:[%s2456 + $0x8] sm:$0xff]
    %v2459 = vld [vmem:[%s2456 + $0x10] sm:$0xff]
    %v2460 = vld [vmem:[%s2456 + $0x18] sm:$0xff]
    %v2461 = vld [vmem:[%s2456 + $0x20] sm:$0xff]
    %v2462 = vld [vmem:[%s2456 + $0x28] sm:$0xff]
    %v2463 = vld [vmem:[%s2456 + $0x30] sm:$0xff]
    %v2464 = vld [vmem:[%s2456 + $0x38] sm:$0xff]
    %v2465 = vld [vmem:[%s2456 + $0x40] sm:$0xff]
    %v2466 = vld [vmem:[%s2456 + $0x48] sm:$0xff]
    %v2467 = vld [vmem:[%s2456 + $0x50] sm:$0xff]
    %v2468 = vld [vmem:[%s2456 + $0x58] sm:$0xff]
    %v2469 = vld [vmem:[%s2456 + $0x60] sm:$0xff]
    %v2470 = vld [vmem:[%s2456 + $0x68] sm:$0xff]
    %v2471 = vld [vmem:[%s2456 + $0x70] sm:$0xff]
    %v2472 = vld [vmem:[%s2456 + $0x78] sm:$0xff]
    %s2473 = scalar_lea.vmem %s7, 1
    %v2474 = vld [vmem:[%s2473] ss:$8 sm:$0x3]
    %v2476 = vlaneseq
    %v2477 = vshrl.u32 %v2476, 7
    %v2478 = vsub.s32 0, %v2477
    %v2479 = vrot.slane %v2474, %v2478
    %v2480 = vlaneseq
    %v2481 = vshrl.u32 %v2480, 7
    %v2482 = vsub.s32 1, %v2481
    %v2483 = vrot.slane %v2474, %v2482
    %v2487 = vsel %vm1380, %v2454, 0
    %v2490 = vsel %vm1380, %v2455, 0
    %2492 = vmatprep.subr.mxu0 %v2458
    %2493 = vmatpush1.msra.mxu0 %v2457
    %2494 = vmatprep.subr.mxu0 %v2460
    %2495 = vmatpush1.msra.mxu0 %v2459
    %2496 = vmatprep.subr.mxu0 %v2462
    %2497 = vmatpush1.msra.mxu0 %v2461
    %2498 = vmatprep.subr.mxu0 %v2464
    %2499 = vmatpush1.msra.mxu0 %v2463
    %2500 = vmatprep.subr.mxu0 %v2466
    %2501 = vmatpush1.msra.mxu0 %v2465
    %2502 = vmatprep.subr.mxu0 %v2468
    %2503 = vmatpush1.msra.mxu0 %v2467
    %2504 = vmatprep.subr.mxu0 %v2470
    %2505 = vmatpush1.msra.mxu0 %v2469
    %2506 = vmatprep.subr.mxu0 %v2472
    %2507 = vmatpush1.msra.mxu0 %v2471
    %2508 = vmatprep.subr.mxu0 0.0
    %2509 = vmatpush1.msra.mxu0 0.0
    %2510 = vmatprep.subr.mxu0 0.0
    %2511 = vmatpush1.msra.mxu0 0.0
    %2512 = vmatprep.subr.mxu0 0.0
    %2513 = vmatpush1.msra.mxu0 0.0
    %2514 = vmatprep.subr.mxu0 0.0
    %2515 = vmatpush1.msra.mxu0 0.0
    %2516 = vmatprep.subr.mxu0 0.0
    %2517 = vmatpush1.msra.mxu0 0.0
    %2518 = vmatprep.subr.mxu0 0.0
    %2519 = vmatpush1.msra.mxu0 0.0
    %2520 = vmatprep.subr.mxu0 0.0
    %2521 = vmatpush1.msra.mxu0 0.0
    %2522 = vmatprep.subr.mxu0 0.0
    %2523 = vmatpush1.msra.mxu0 0.0
    %2524 = vmatprep.subr.mxu0 0.0
    %2525 = vmatpush1.msra.mxu0 0.0
    %2526 = vmatprep.subr.mxu0 0.0
    %2527 = vmatpush1.msra.mxu0 0.0
    %2528 = vmatprep.subr.mxu0 0.0
    %2529 = vmatpush1.msra.mxu0 0.0
    %2530 = vmatprep.subr.mxu0 0.0
    %2531 = vmatpush1.msra.mxu0 0.0
    %2532 = vmatprep.subr.mxu0 0.0
    %2533 = vmatpush1.msra.mxu0 0.0
    %2534 = vmatprep.subr.mxu0 0.0
    %2535 = vmatpush1.msra.mxu0 0.0
    %2536 = vmatprep.subr.mxu0 0.0
    %2537 = vmatpush1.msra.mxu0 0.0
    %2538 = vmatprep.subr.mxu0 0.0
    %2539 = vmatpush1.msra.mxu0 0.0
    %2540 = vmatprep.subr.mxu0 0.0
    %2541 = vmatpush1.msra.mxu0 0.0
    %2542 = vmatprep.subr.mxu0 0.0
    %2543 = vmatpush1.msra.mxu0 0.0
    %2544 = vmatprep.subr.mxu0 0.0
    %2545 = vmatpush1.msra.mxu0 0.0
    %2546 = vmatprep.subr.mxu0 0.0
    %2547 = vmatpush1.msra.mxu0 0.0
    %2548 = vmatprep.subr.mxu0 0.0
    %2549 = vmatpush1.msra.mxu0 0.0
    %2550 = vmatprep.subr.mxu0 0.0
    %2551 = vmatpush1.msra.mxu0 0.0
    %2552 = vmatprep.subr.mxu0 0.0
    %2553 = vmatpush1.msra.mxu0 0.0
    %2554 = vmatprep.subr.mxu0 0.0
    %2555 = vmatpush1.msra.mxu0 0.0
    %2556 = vmatprep.mubr.f32.mxu0 0.0
    %2557 = vmatmul.mubr.f32.gmra.mrb[0].mxu0 %v2487
    %v2558 = vpop.f32.mrb[0].mxu0
    %v2559 = vadd.f32 %v2479, %v2558
    %v2560 = vpop.f32.mrb[0].mxu0
    %v2561 = vadd.f32 %v2483, %v2560
    %2562 = vmatprep.mubr.f32.mxu0 0.0
    %2563 = vmatmul.mubr.f32.gmra.mrb[0].mxu0 %v2490
    %v2564 = vpop.f32.mrb[0].mxu0
    %v2565 = vadd.f32 %v2479, %v2564
    %v2566 = vpop.f32.mrb[0].mxu0
    %v2567 = vadd.f32 %v2483, %v2566
    %2568 = vdwg.mxu0
    %v2569 = vmul.f32 %v2559, 0.17677669
    %v2570 = vmul.f32 %v2565, 0.17677669
    %2573 = vrot.lane.b32.xlu0 %v2559, 64
    %v2574 = vpop.permute.xlu0 %2573
    %2575 = vrot.lane.b32.xlu0 %v2565, 64
    %v2576 = vpop.permute.xlu0 %2575
    %v2578 = vsel %vm1539, %v2569, 0
    %v2581 = vsel %vm1539, %v2570, 0
    %v2583 = vsel %vm1539, %v2574, 0
    %v2585 = vsel %vm1539, %v2576, 0
    %2587 = vmatprep.subr.mxu0 0.0
    %2588 = vmatpush1.xpose.msra.mxu0 %v2583
    %2589 = vmatprep.subr.mxu0 0.0
    %2590 = vmatpush1.xpose.msra.mxu0 %v2585
    %2591 = vmatprep.subr.mxu0 0.0
    %2592 = vmatpush1.xpose.msra.mxu0 0.0
    %2593 = vmatprep.subr.mxu0 0.0
    %2594 = vmatpush1.xpose.msra.mxu0 0.0
    %2595 = vmatprep.subr.mxu0 0.0
    %2596 = vmatpush1.xpose.msra.mxu0 0.0
    %2597 = vmatprep.subr.mxu0 0.0
    %2598 = vmatpush1.xpose.msra.mxu0 0.0
    %2599 = vmatprep.subr.mxu0 0.0
    %2600 = vmatpush1.xpose.msra.mxu0 0.0
    %2601 = vmatprep.subr.mxu0 0.0
    %2602 = vmatpush1.xpose.msra.mxu0 0.0
    %2603 = vmatprep.subr.mxu0 0.0
    %2604 = vmatpush1.xpose.msra.mxu0 0.0
    %2605 = vmatprep.subr.mxu0 0.0
    %2606 = vmatpush1.xpose.msra.mxu0 0.0
    %2607 = vmatprep.subr.mxu0 0.0
    %2608 = vmatpush1.xpose.msra.mxu0 0.0
    %2609 = vmatprep.subr.mxu0 0.0
    %2610 = vmatpush1.xpose.msra.mxu0 0.0
    %2611 = vmatprep.subr.mxu0 0.0
    %2612 = vmatpush1.xpose.msra.mxu0 0.0
    %2613 = vmatprep.subr.mxu0 0.0
    %2614 = vmatpush1.xpose.msra.mxu0 0.0
    %2615 = vmatprep.subr.mxu0 0.0
    %2616 = vmatpush1.xpose.msra.mxu0 0.0
    %2617 = vmatprep.subr.mxu0 0.0
    %2618 = vmatpush1.xpose.msra.mxu0 0.0
    %2619 = vmatprep.subr.mxu0 0.0
    %2620 = vmatpush1.xpose.msra.mxu0 0.0
    %2621 = vmatprep.subr.mxu0 0.0
    %2622 = vmatpush1.xpose.msra.mxu0 0.0
    %2623 = vmatprep.subr.mxu0 0.0
    %2624 = vmatpush1.xpose.msra.mxu0 0.0
    %2625 = vmatprep.subr.mxu0 0.0
    %2626 = vmatpush1.xpose.msra.mxu0 0.0
    %2627 = vmatprep.subr.mxu0 0.0
    %2628 = vmatpush1.xpose.msra.mxu0 0.0
    %2629 = vmatprep.subr.mxu0 0.0
    %2630 = vmatpush1.xpose.msra.mxu0 0.0
    %2631 = vmatprep.subr.mxu0 0.0
    %2632 = vmatpush1.xpose.msra.mxu0 0.0
    %2633 = vmatprep.subr.mxu0 0.0
    %2634 = vmatpush1.xpose.msra.mxu0 0.0
    %2635 = vmatprep.subr.mxu0 0.0
    %2636 = vmatpush1.xpose.msra.mxu0 0.0
    %2637 = vmatprep.subr.mxu0 0.0
    %2638 = vmatpush1.xpose.msra.mxu0 0.0
    %2639 = vmatprep.subr.mxu0 0.0
    %2640 = vmatpush1.xpose.msra.mxu0 0.0
    %2641 = vmatprep.subr.mxu0 0.0
    %2642 = vmatpush1.xpose.msra.mxu0 0.0
    %2643 = vmatprep.subr.mxu0 0.0
    %2644 = vmatpush1.xpose.msra.mxu0 0.0
    %2645 = vmatprep.subr.mxu0 0.0
    %2646 = vmatpush1.xpose.msra.mxu0 0.0
    %2647 = vmatprep.subr.mxu0 0.0
    %2648 = vmatpush1.xpose.msra.mxu0 0.0
    %2649 = vmatprep.subr.mxu0 0.0
    %2650 = vmatpush1.xpose.msra.mxu0 0.0
    %2651 = vmatprep.mubr.f32.mxu0 0.0
    %2652 = vmatmul.mubr.f32.gmra.mrb[0].mxu0 %v2578
    %v2653 = vpop.f32.mrb[0].mxu0
    %v2654 = vadd.f32 %v1376, %v2653
    %v2655 = vpop.f32.mrb[0].mxu0
    %2656 = vmatprep.mubr.f32.mxu0 0.0
    %2657 = vmatmul.mubr.f32.gmra.mrb[0].mxu0 %v2581
    %v2658 = vpop.f32.mrb[0].mxu0
    %v2659 = vadd.f32 %v1377, %v2658
    %v2660 = vpop.f32.mrb[0].mxu0
    %2661 = vdwg.mxu0
    %v2662 = vsel %vm1625, %v2654, -inf
    %2663 = vmax.xlane.f32.xlu0 %v2662
    %v2664 = vpop.xlane.xlu0 %2663
    %v2665 = vsel %vm1625, %v2659, -inf
    %2666 = vmax.xlane.f32.xlu0 %v2665
    %v2667 = vpop.xlane.xlu0 %2666
    %v2668 = vsub.f32 %v2654, %v2664
    %v2669 = vsub.f32 %v2659, %v2667
    %v2670 = vmul.f32 %v2668, 1.442695
    %v2671 = vpow.pop %v2670
    %v2672 = vmul.f32 %v2669, 1.442695
    %v2673 = vpow.pop %v2672
    %v2674 = vsel %vm1625, %v2671, 0.0
    %2675 = vadd.xlane.f32.xlu0 %v2674
    %v2676 = vpop.xlane.xlu0 %2675
    %v2677 = vsel %vm1625, %v2673, 0.0
    %2678 = vadd.xlane.f32.xlu0 %v2677
    %v2679 = vpop.xlane.xlu0 %2678
    %v2680 = vrcp.pop %v2676
    %v2681 = vmul.f32 %v2671, %v2680
    %v2682 = vrcp.pop %v2679
    %v2683 = vmul.f32 %v2673, %v2682
    %v2685 = vsel %vm1625, %v2681, 0
    %v2688 = vsel %vm1625, %v2683, 0
    %2690 = vmatprep.subr.mxu0 0.0
    %2691 = vmatpush1.msra.mxu0 %v2561
    %2692 = vmatprep.subr.mxu0 0.0
    %2693 = vmatpush1.msra.mxu0 %v2567
    %2694 = vmatprep.subr.mxu0 0.0
    %2695 = vmatpush1.msra.mxu0 0.0
    %2696 = vmatprep.subr.mxu0 0.0
    %2697 = vmatpush1.msra.mxu0 0.0
    %2698 = vmatprep.subr.mxu0 0.0
    %2699 = vmatpush1.msra.mxu0 0.0
    %2700 = vmatprep.subr.mxu0 0.0
    %2701 = vmatpush1.msra.mxu0 0.0
    %2702 = vmatprep.subr.mxu0 0.0
    %2703 = vmatpush1.msra.mxu0 0.0
    %2704 = vmatprep.subr.mxu0 0.0
    %2705 = vmatpush1.msra.mxu0 0.0
    %2706 = vmatprep.subr.mxu0 0.0
    %2707 = vmatpush1.msra.mxu0 0.0
    %2708 = vmatprep.subr.mxu0 0.0
    %2709 = vmatpush1.msra.mxu0 0.0
    %2710 = vmatprep.subr.mxu0 0.0
    %2711 = vmatpush1.msra.mxu0 0.0
    %2712 = vmatprep.subr.mxu0 0.0
    %2713 = vmatpush1.msra.mxu0 0.0
    %2714 = vmatprep.subr.mxu0 0.0
    %2715 = vmatpush1.msra.mxu0 0.0
    %2716 = vmatprep.subr.mxu0 0.0
    %2717 = vmatpush1.msra.mxu0 0.0
    %2718 = vmatprep.subr.mxu0 0.0
    %2719 = vmatpush1.msra.mxu0 0.0
    %2720 = vmatprep.subr.mxu0 0.0
    %2721 = vmatpush1.msra.mxu0 0.0
    %2722 = vmatprep.subr.mxu0 0.0
    %2723 = vmatpush1.msra.mxu0 0.0
    %2724 = vmatprep.subr.mxu0 0.0
    %2725 = vmatpush1.msra.mxu0 0.0
    %2726 = vmatprep.subr.mxu0 0.0
    %2727 = vmatpush1.msra.mxu0 0.0
    %2728 = vmatprep.subr.mxu0 0.0
    %2729 = vmatpush1.msra.mxu0 0.0
    %2730 = vmatprep.subr.mxu0 0.0
    %2731 = vmatpush1.msra.mxu0 0.0
    %2732 = vmatprep.subr.mxu0 0.0
    %2733 = vmatpush1.msra.mxu0 0.0
    %2734 = vmatprep.subr.mxu0 0.0
    %2735 = vmatpush1.msra.mxu0 0.0
    %2736 = vmatprep.subr.mxu0 0.0
    %2737 = vmatpush1.msra.mxu0 0.0
    %2738 = vmatprep.subr.mxu0 0.0
    %2739 = vmatpush1.msra.mxu0 0.0
    %2740 = vmatprep.subr.mxu0 0.0
    %2741 = vmatpush1.msra.mxu0 0.0
    %2742 = vmatprep.subr.mxu0 0.0
    %2743 = vmatpush1.msra.mxu0 0.0
    %2744 = vmatprep.subr.mxu0 0.0
    %2745 = vmatpush1.msra.mxu0 0.0
    %2746 = vmatprep.subr.mxu0 0.0
    %2747 = vmatpush1.msra.mxu0 0.0
    %2748 = vmatprep.subr.mxu0 0.0
    %2749 = vmatpush1.msra.mxu0 0.0
    %2750 = vmatprep.subr.mxu0 0.0
    %2751 = vmatpush1.msra.mxu0 0.0
    %2752 = vmatprep.subr.mxu0 0.0
    %2753 = vmatpush1.msra.mxu0 0.0
    %2754 = vmatprep.mubr.f32.mxu0 0.0
    %2755 = vmatmul.mubr.f32.gmra.mrb[0].mxu0 %v2685
    %v2756 = vpop.f32.mrb[0].mxu0
    %v2757 = vadd.f32 0.0, %v2756
    %v2758 = vpop.f32.mrb[0].mxu0
    %2759 = vmatprep.mubr.f32.mxu0 0.0
    %2760 = vmatmul.mubr.f32.gmra.mrb[0].mxu0 %v2688
    %v2761 = vpop.f32.mrb[0].mxu0
    %v2762 = vadd.f32 0.0, %v2761
    %v2763 = vpop.f32.mrb[0].mxu0
    %2764 = vdwg.mxu0
    %2765 = vrot.lane.b32.xlu0 %v2569, 96
    %v2766 = vpop.permute.xlu0 %2765
    %2767 = vrot.lane.b32.xlu0 %v2570, 96
    %v2768 = vpop.permute.xlu0 %2767
    %2769 = vrot.lane.b32.xlu0 %v2559, 32
    %v2770 = vpop.permute.xlu0 %2769
    %2771 = vrot.lane.b32.xlu0 %v2565, 32
    %v2772 = vpop.permute.xlu0 %2771
    %v2773 = vsel %vm1539, %v2766, 0
    %v2775 = vsel %vm1539, %v2768, 0
    %v2777 = vsel %vm1539, %v2770, 0
    %v2779 = vsel %vm1539, %v2772, 0
    %2781 = vmatprep.subr.mxu0 0.0
    %2782 = vmatpush1.xpose.msra.mxu0 %v2777
    %2783 = vmatprep.subr.mxu0 0.0
    %2784 = vmatpush1.xpose.msra.mxu0 %v2779
    %2785 = vmatprep.subr.mxu0 0.0
    %2786 = vmatpush1.xpose.msra.mxu0 0.0
    %2787 = vmatprep.subr.mxu0 0.0
    %2788 = vmatpush1.xpose.msra.mxu0 0.0
    %2789 = vmatprep.subr.mxu0 0.0
    %2790 = vmatpush1.xpose.msra.mxu0 0.0
    %2791 = vmatprep.subr.mxu0 0.0
    %2792 = vmatpush1.xpose.msra.mxu0 0.0
    %2793 = vmatprep.subr.mxu0 0.0
    %2794 = vmatpush1.xpose.msra.mxu0 0.0
    %2795 = vmatprep.subr.mxu0 0.0
    %2796 = vmatpush1.xpose.msra.mxu0 0.0
    %2797 = vmatprep.subr.mxu0 0.0
    %2798 = vmatpush1.xpose.msra.mxu0 0.0
    %2799 = vmatprep.subr.mxu0 0.0
    %2800 = vmatpush1.xpose.msra.mxu0 0.0
    %2801 = vmatprep.subr.mxu0 0.0
    %2802 = vmatpush1.xpose.msra.mxu0 0.0
    %2803 = vmatprep.subr.mxu0 0.0
    %2804 = vmatpush1.xpose.msra.mxu0 0.0
    %2805 = vmatprep.subr.mxu0 0.0
    %2806 = vmatpush1.xpose.msra.mxu0 0.0
    %2807 = vmatprep.subr.mxu0 0.0
    %2808 = vmatpush1.xpose.msra.mxu0 0.0
    %2809 = vmatprep.subr.mxu0 0.0
    %2810 = vmatpush1.xpose.msra.mxu0 0.0
    %2811 = vmatprep.subr.mxu0 0.0
    %2812 = vmatpush1.xpose.msra.mxu0 0.0
    %2813 = vmatprep.subr.mxu0 0.0
    %2814 = vmatpush1.xpose.msra.mxu0 0.0
    %2815 = vmatprep.subr.mxu0 0.0
    %2816 = vmatpush1.xpose.msra.mxu0 0.0
    %2817 = vmatprep.subr.mxu0 0.0
    %2818 = vmatpush1.xpose.msra.mxu0 0.0
    %2819 = vmatprep.subr.mxu0 0.0
    %2820 = vmatpush1.xpose.msra.mxu0 0.0
    %2821 = vmatprep.subr.mxu0 0.0
    %2822 = vmatpush1.xpose.msra.mxu0 0.0
    %2823 = vmatprep.subr.mxu0 0.0
    %2824 = vmatpush1.xpose.msra.mxu0 0.0
    %2825 = vmatprep.subr.mxu0 0.0
    %2826 = vmatpush1.xpose.msra.mxu0 0.0
    %2827 = vmatprep.subr.mxu0 0.0
    %2828 = vmatpush1.xpose.msra.mxu0 0.0
    %2829 = vmatprep.subr.mxu0 0.0
    %2830 = vmatpush1.xpose.msra.mxu0 0.0
    %2831 = vmatprep.subr.mxu0 0.0
    %2832 = vmatpush1.xpose.msra.mxu0 0.0
    %2833 = vmatprep.subr.mxu0 0.0
    %2834 = vmatpush1.xpose.msra.mxu0 0.0
    %2835 = vmatprep.subr.mxu0 0.0
    %2836 = vmatpush1.xpose.msra.mxu0 0.0
    %2837 = vmatprep.subr.mxu0 0.0
    %2838 = vmatpush1.xpose.msra.mxu0 0.0
    %2839 = vmatprep.subr.mxu0 0.0
    %2840 = vmatpush1.xpose.msra.mxu0 0.0
    %2841 = vmatprep.subr.mxu0 0.0
    %2842 = vmatpush1.xpose.msra.mxu0 0.0
    %2843 = vmatprep.subr.mxu0 0.0
    %2844 = vmatpush1.xpose.msra.mxu0 0.0
    %2845 = vmatprep.mubr.f32.mxu0 0.0
    %2846 = vmatmul.mubr.f32.gmra.mrb[0].mxu0 %v2773
    %v2847 = vpop.f32.mrb[0].mxu0
    %v2848 = vadd.f32 %v1376, %v2847
    %v2849 = vpop.f32.mrb[0].mxu0
    %2850 = vmatprep.mubr.f32.mxu0 0.0
    %2851 = vmatmul.mubr.f32.gmra.mrb[0].mxu0 %v2775
    %v2852 = vpop.f32.mrb[0].mxu0
    %v2853 = vadd.f32 %v1377, %v2852
    %v2854 = vpop.f32.mrb[0].mxu0
    %2855 = vdwg.mxu0
    %v2856 = vsel %vm1625, %v2848, -inf
    %2857 = vmax.xlane.f32.xlu0 %v2856
    %v2858 = vpop.xlane.xlu0 %2857
    %v2859 = vsel %vm1625, %v2853, -inf
    %2860 = vmax.xlane.f32.xlu0 %v2859
    %v2861 = vpop.xlane.xlu0 %2860
    %v2862 = vsub.f32 %v2848, %v2858
    %v2863 = vsub.f32 %v2853, %v2861
    %v2864 = vmul.f32 %v2862, 1.442695
    %v2865 = vpow.pop %v2864
    %v2866 = vmul.f32 %v2863, 1.442695
    %v2867 = vpow.pop %v2866
    %v2868 = vsel %vm1625, %v2865, 0.0
    %2869 = vadd.xlane.f32.xlu0 %v2868
    %v2870 = vpop.xlane.xlu0 %2869
    %v2871 = vsel %vm1625, %v2867, 0.0
    %2872 = vadd.xlane.f32.xlu0 %v2871
    %v2873 = vpop.xlane.xlu0 %2872
    %v2874 = vrcp.pop %v2870
    %v2875 = vmul.f32 %v2865, %v2874
    %v2876 = vrcp.pop %v2873
    %v2877 = vmul.f32 %v2867, %v2876
    %2880 = vrot.lane.b32.xlu0 %v2561, 96
    %v2881 = vpop.permute.xlu0 %2880
    %2882 = vrot.lane.b32.xlu0 %v2567, 96
    %v2883 = vpop.permute.xlu0 %2882
    %v2887 = vsel %vm1625, %v2875, 0
    %v2890 = vsel %vm1625, %v2877, 0
    %2892 = vmatprep.subr.mxu0 0.0
    %2893 = vmatpush1.msra.mxu0 %v2881
    %2894 = vmatprep.subr.mxu0 0.0
    %2895 = vmatpush1.msra.mxu0 %v2883
    %2896 = vmatprep.subr.mxu0 0.0
    %2897 = vmatpush1.msra.mxu0 0.0
    %2898 = vmatprep.subr.mxu0 0.0
    %2899 = vmatpush1.msra.mxu0 0.0
    %2900 = vmatprep.subr.mxu0 0.0
    %2901 = vmatpush1.msra.mxu0 0.0
    %2902 = vmatprep.subr.mxu0 0.0
    %2903 = vmatpush1.msra.mxu0 0.0
    %2904 = vmatprep.subr.mxu0 0.0
    %2905 = vmatpush1.msra.mxu0 0.0
    %2906 = vmatprep.subr.mxu0 0.0
    %2907 = vmatpush1.msra.mxu0 0.0
    %2908 = vmatprep.subr.mxu0 0.0
    %2909 = vmatpush1.msra.mxu0 0.0
    %2910 = vmatprep.subr.mxu0 0.0
    %2911 = vmatpush1.msra.mxu0 0.0
    %2912 = vmatprep.subr.mxu0 0.0
    %2913 = vmatpush1.msra.mxu0 0.0
    %2914 = vmatprep.subr.mxu0 0.0
    %2915 = vmatpush1.msra.mxu0 0.0
    %2916 = vmatprep.subr.mxu0 0.0
    %2917 = vmatpush1.msra.mxu0 0.0
    %2918 = vmatprep.subr.mxu0 0.0
    %2919 = vmatpush1.msra.mxu0 0.0
    %2920 = vmatprep.subr.mxu0 0.0
    %2921 = vmatpush1.msra.mxu0 0.0
    %2922 = vmatprep.subr.mxu0 0.0
    %2923 = vmatpush1.msra.mxu0 0.0
    %2924 = vmatprep.subr.mxu0 0.0
    %2925 = vmatpush1.msra.mxu0 0.0
    %2926 = vmatprep.subr.mxu0 0.0
    %2927 = vmatpush1.msra.mxu0 0.0
    %2928 = vmatprep.subr.mxu0 0.0
    %2929 = vmatpush1.msra.mxu0 0.0
    %2930 = vmatprep.subr.mxu0 0.0
    %2931 = vmatpush1.msra.mxu0 0.0
    %2932 = vmatprep.subr.mxu0 0.0
    %2933 = vmatpush1.msra.mxu0 0.0
    %2934 = vmatprep.subr.mxu0 0.0
    %2935 = vmatpush1.msra.mxu0 0.0
    %2936 = vmatprep.subr.mxu0 0.0
    %2937 = vmatpush1.msra.mxu0 0.0
    %2938 = vmatprep.subr.mxu0 0.0
    %2939 = vmatpush1.msra.mxu0 0.0
    %2940 = vmatprep.subr.mxu0 0.0
    %2941 = vmatpush1.msra.mxu0 0.0
    %2942 = vmatprep.subr.mxu0 0.0
    %2943 = vmatpush1.msra.mxu0 0.0
    %2944 = vmatprep.subr.mxu0 0.0
    %2945 = vmatpush1.msra.mxu0 0.0
    %2946 = vmatprep.subr.mxu0 0.0
    %2947 = vmatpush1.msra.mxu0 0.0
    %2948 = vmatprep.subr.mxu0 0.0
    %2949 = vmatpush1.msra.mxu0 0.0
    %2950 = vmatprep.subr.mxu0 0.0
    %2951 = vmatpush1.msra.mxu0 0.0
    %2952 = vmatprep.subr.mxu0 0.0
    %2953 = vmatpush1.msra.mxu0 0.0
    %2954 = vmatprep.subr.mxu0 0.0
    %2955 = vmatpush1.msra.mxu0 0.0
    %2956 = vmatprep.mubr.f32.mxu0 0.0
    %2957 = vmatmul.mubr.f32.gmra.mrb[0].mxu0 %v2887
    %v2958 = vpop.f32.mrb[0].mxu0
    %v2959 = vadd.f32 0.0, %v2958
    %v2960 = vpop.f32.mrb[0].mxu0
    %2961 = vmatprep.mubr.f32.mxu0 0.0
    %2962 = vmatmul.mubr.f32.gmra.mrb[0].mxu0 %v2890
    %v2963 = vpop.f32.mrb[0].mxu0
    %v2964 = vadd.f32 0.0, %v2963
    %v2965 = vpop.f32.mrb[0].mxu0
    %2966 = vdwg.mxu0
    %2969 = vrot.lane.b32.xlu0 %v2959, 32
    %v2970 = vpop.permute.xlu0 %2969
    %2971 = vrot.lane.b32.xlu0 %v2964, 32
    %v2972 = vpop.permute.xlu0 %2971
    %v2975 = vsel %vm1539, %v2757, %v2970
    %v2976 = vsel %vm1539, %v2762, %v2972
    %s2977 = scalar_lea.vmem %s3, 64
    %v2978 = vld [vmem:[%s2977] sm:$0xff]
    %v2979 = vld [vmem:[%s2977 + $0x8] sm:$0xff]
    %v2980 = vld [vmem:[%s2977 + $0x10] sm:$0xff]
    %v2981 = vld [vmem:[%s2977 + $0x18] sm:$0xff]
    %v2982 = vld [vmem:[%s2977 + $0x20] sm:$0xff]
    %v2983 = vld [vmem:[%s2977 + $0x28] sm:$0xff]
    %v2984 = vld [vmem:[%s2977 + $0x30] sm:$0xff]
    %v2985 = vld [vmem:[%s2977 + $0x38] sm:$0xff]
    %v2987 = vsel %vm1380, %v2975, 0
    %v2990 = vsel %vm1380, %v2976, 0
    %2992 = vmatprep.subr.mxu0 0.0
    %2993 = vmatpush1.msra.mxu0 %v2978
    %2994 = vmatprep.subr.mxu0 0.0
    %2995 = vmatpush1.msra.mxu0 %v2979
    %2996 = vmatprep.subr.mxu0 0.0
    %2997 = vmatpush1.msra.mxu0 %v2980
    %2998 = vmatprep.subr.mxu0 0.0
    %2999 = vmatpush1.msra.mxu0 %v2981
    %3000 = vmatprep.subr.mxu0 0.0
    %3001 = vmatpush1.msra.mxu0 %v2982
    %3002 = vmatprep.subr.mxu0 0.0
    %3003 = vmatpush1.msra.mxu0 %v2983
    %3004 = vmatprep.subr.mxu0 0.0
    %3005 = vmatpush1.msra.mxu0 %v2984
    %3006 = vmatprep.subr.mxu0 0.0
    %3007 = vmatpush1.msra.mxu0 %v2985
    %3008 = vmatprep.subr.mxu0 0.0
    %3009 = vmatpush1.msra.mxu0 0.0
    %3010 = vmatprep.subr.mxu0 0.0
    %3011 = vmatpush1.msra.mxu0 0.0
    %3012 = vmatprep.subr.mxu0 0.0
    %3013 = vmatpush1.msra.mxu0 0.0
    %3014 = vmatprep.subr.mxu0 0.0
    %3015 = vmatpush1.msra.mxu0 0.0
    %3016 = vmatprep.subr.mxu0 0.0
    %3017 = vmatpush1.msra.mxu0 0.0
    %3018 = vmatprep.subr.mxu0 0.0
    %3019 = vmatpush1.msra.mxu0 0.0
    %3020 = vmatprep.subr.mxu0 0.0
    %3021 = vmatpush1.msra.mxu0 0.0
    %3022 = vmatprep.subr.mxu0 0.0
    %3023 = vmatpush1.msra.mxu0 0.0
    %3024 = vmatprep.subr.mxu0 0.0
    %3025 = vmatpush1.msra.mxu0 0.0
    %3026 = vmatprep.subr.mxu0 0.0
    %3027 = vmatpush1.msra.mxu0 0.0
    %3028 = vmatprep.subr.mxu0 0.0
    %3029 = vmatpush1.msra.mxu0 0.0
    %3030 = vmatprep.subr.mxu0 0.0
    %3031 = vmatpush1.msra.mxu0 0.0
    %3032 = vmatprep.subr.mxu0 0.0
    %3033 = vmatpush1.msra.mxu0 0.0
    %3034 = vmatprep.subr.mxu0 0.0
    %3035 = vmatpush1.msra.mxu0 0.0
    %3036 = vmatprep.subr.mxu0 0.0
    %3037 = vmatpush1.msra.mxu0 0.0
    %3038 = vmatprep.subr.mxu0 0.0
    %3039 = vmatpush1.msra.mxu0 0.0
    %3040 = vmatprep.subr.mxu0 0.0
    %3041 = vmatpush1.msra.mxu0 0.0
    %3042 = vmatprep.subr.mxu0 0.0
    %3043 = vmatpush1.msra.mxu0 0.0
    %3044 = vmatprep.subr.mxu0 0.0
    %3045 = vmatpush1.msra.mxu0 0.0
    %3046 = vmatprep.subr.mxu0 0.0
    %3047 = vmatpush1.msra.mxu0 0.0
    %3048 = vmatprep.subr.mxu0 0.0
    %3049 = vmatpush1.msra.mxu0 0.0
    %3050 = vmatprep.subr.mxu0 0.0
    %3051 = vmatpush1.msra.mxu0 0.0
    %3052 = vmatprep.subr.mxu0 0.0
    %3053 = vmatpush1.msra.mxu0 0.0
    %3054 = vmatprep.subr.mxu0 0.0
    %3055 = vmatpush1.msra.mxu0 0.0
    %3056 = vmatprep.mubr.f32.mxu0 0.0
    %3057 = vmatmul.mubr.f32.gmra.mrb[0].mxu0 %v2987
    %v3058 = vpop.f32.mrb[0].mxu0
    %v3059 = vadd.f32 0.0, %v3058
    %v3060 = vpop.f32.mrb[0].mxu0
    %3061 = vmatprep.mubr.f32.mxu0 0.0
    %3062 = vmatmul.mubr.f32.gmra.mrb[0].mxu0 %v2990
    %v3063 = vpop.f32.mrb[0].mxu0
    %v3064 = vadd.f32 0.0, %v3063
    %v3065 = vpop.f32.mrb[0].mxu0
    %3066 = vdwg.mxu0
    %v3067 = vadd.f32 %v2414, %v3059
    %v3068 = vadd.f32 %v2415, %v3064
    %v3069 = vld [vmem:[%s6 + $0x10] sm:$0x1]
    %v3070 = vlaneseq
    %v3071 = vshrl.u32 %v3070, 7
    %v3072 = vsub.s32 0, %v3071
    %v3073 = vrot.slane %v3069, %v3072
    %v3074 = vadd.f32 %v3067, %v3073
    %v3075 = vadd.f32 %v3068, %v3073
    %v3076 = vld [vmem:[%s6 + $0x11] sm:$0x1]
    %v3077 = vld [vmem:[%s6 + $0x12] sm:$0x1]
    %v3078 = vsel %vm1380, %v3074, 0.0
    %3079 = vadd.xlane.f32.xlu0 %v3078
    %v3080 = vpop.xlane.xlu0 %3079
    %v3081 = vsel %vm1380, %v3075, 0.0
    %3082 = vadd.xlane.f32.xlu0 %v3081
    %v3083 = vpop.xlane.xlu0 %3082
    %v3084 = vmul.f32 %v3080, %v1387
    %v3085 = vmul.f32 %v3083, %v1387
    %v3086 = vsub.f32 %v3074, %v3084
    %v3087 = vsub.f32 %v3075, %v3085
    %v3088 = vmul.f32 %v3086, %v3086
    %v3089 = vmul.f32 %v3087, %v3087
    %v3090 = vsel %vm1380, %v3088, 0.0
    %3091 = vadd.xlane.f32.xlu0 %v3090
    %v3092 = vpop.xlane.xlu0 %3091
    %v3093 = vsel %vm1380, %v3089, 0.0
    %3094 = vadd.xlane.f32.xlu0 %v3093
    %v3095 = vpop.xlane.xlu0 %3094
    %v3096 = vmul.f32 %v3092, %v1387
    %v3097 = vmul.f32 %v3095, %v1387
    %v3098 = vadd.f32 %v3096, 1e-06
    %v3099 = vadd.f32 %v3097, 1e-06
    %v3100 = vrsqrt.pop %v3098
    %v3101 = vrsqrt.pop %v3099
    %v3102 = vmul.f32 %v3086, %v3100
    %v3103 = vmul.f32 %v3087, %v3101
    %v3104 = vlaneseq
    %v3105 = vshrl.u32 %v3104, 7
    %v3106 = vsub.s32 0, %v3105
    %v3107 = vrot.slane %v3076, %v3106
    %v3108 = vmul.f32 %v3102, %v3107
    %v3109 = vmul.f32 %v3103, %v3107
    %v3110 = vlaneseq
    %v3111 = vshrl.u32 %v3110, 7
    %v3112 = vsub.s32 0, %v3111
    %v3113 = vrot.slane %v3077, %v3112
    %v3114 = vadd.f32 %v3108, %v3113
    %v3115 = vadd.f32 %v3109, %v3113
    %s3116 = scalar_lea.vmem %s2, 384
    %v3117 = vld [vmem:[%s3116] sm:$0xff]
    %v3118 = vld [vmem:[%s3116 + $0x8] sm:$0xff]
    %v3119 = vld [vmem:[%s3116 + $0x10] sm:$0xff]
    %v3120 = vld [vmem:[%s3116 + $0x18] sm:$0xff]
    %v3121 = vld [vmem:[%s3116 + $0x20] sm:$0xff]
    %v3122 = vld [vmem:[%s3116 + $0x28] sm:$0xff]
    %v3123 = vld [vmem:[%s3116 + $0x30] sm:$0xff]
    %v3124 = vld [vmem:[%s3116 + $0x38] sm:$0xff]
    %v3125 = vld [vmem:[%s3116 + $0x40] sm:$0xff]
    %v3126 = vld [vmem:[%s3116 + $0x48] sm:$0xff]
    %v3127 = vld [vmem:[%s3116 + $0x50] sm:$0xff]
    %v3128 = vld [vmem:[%s3116 + $0x58] sm:$0xff]
    %v3129 = vld [vmem:[%s3116 + $0x60] sm:$0xff]
    %v3130 = vld [vmem:[%s3116 + $0x68] sm:$0xff]
    %v3131 = vld [vmem:[%s3116 + $0x70] sm:$0xff]
    %v3132 = vld [vmem:[%s3116 + $0x78] sm:$0xff]
    %s3133 = scalar_lea.vmem %s7, 3
    %v3134 = vld [vmem:[%s3133] ss:$8 sm:$0x3]
    %v3136 = vlaneseq
    %v3137 = vshrl.u32 %v3136, 7
    %v3138 = vsub.s32 0, %v3137
    %v3139 = vrot.slane %v3134, %v3138
    %v3140 = vlaneseq
    %v3141 = vshrl.u32 %v3140, 7
    %v3142 = vsub.s32 1, %v3141
    %v3143 = vrot.slane %v3134, %v3142
    %v3147 = vsel %vm1380, %v3114, 0
    %v3150 = vsel %vm1380, %v3115, 0
    %3152 = vmatprep.subr.mxu0 %v3118
    %3153 = vmatpush1.msra.mxu0 %v3117
    %3154 = vmatprep.subr.mxu0 %v3120
    %3155 = vmatpush1.msra.mxu0 %v3119
    %3156 = vmatprep.subr.mxu0 %v3122
    %3157 = vmatpush1.msra.mxu0 %v3121
    %3158 = vmatprep.subr.mxu0 %v3124
    %3159 = vmatpush1.msra.mxu0 %v3123
    %3160 = vmatprep.subr.mxu0 %v3126
    %3161 = vmatpush1.msra.mxu0 %v3125
    %3162 = vmatprep.subr.mxu0 %v3128
    %3163 = vmatpush1.msra.mxu0 %v3127
    %3164 = vmatprep.subr.mxu0 %v3130
    %3165 = vmatpush1.msra.mxu0 %v3129
    %3166 = vmatprep.subr.mxu0 %v3132
    %3167 = vmatpush1.msra.mxu0 %v3131
    %3168 = vmatprep.subr.mxu0 0.0
    %3169 = vmatpush1.msra.mxu0 0.0
    %3170 = vmatprep.subr.mxu0 0.0
    %3171 = vmatpush1.msra.mxu0 0.0
    %3172 = vmatprep.subr.mxu0 0.0
    %3173 = vmatpush1.msra.mxu0 0.0
    %3174 = vmatprep.subr.mxu0 0.0
    %3175 = vmatpush1.msra.mxu0 0.0
    %3176 = vmatprep.subr.mxu0 0.0
    %3177 = vmatpush1.msra.mxu0 0.0
    %3178 = vmatprep.subr.mxu0 0.0
    %3179 = vmatpush1.msra.mxu0 0.0
    %3180 = vmatprep.subr.mxu0 0.0
    %3181 = vmatpush1.msra.mxu0 0.0
    %3182 = vmatprep.subr.mxu0 0.0
    %3183 = vmatpush1.msra.mxu0 0.0
    %3184 = vmatprep.subr.mxu0 0.0
    %3185 = vmatpush1.msra.mxu0 0.0
    %3186 = vmatprep.subr.mxu0 0.0
    %3187 = vmatpush1.msra.mxu0 0.0
    %3188 = vmatprep.subr.mxu0 0.0
    %3189 = vmatpush1.msra.mxu0 0.0
    %3190 = vmatprep.subr.mxu0 0.0
    %3191 = vmatpush1.msra.mxu0 0.0
    %3192 = vmatprep.subr.mxu0 0.0
    %3193 = vmatpush1.msra.mxu0 0.0
    %3194 = vmatprep.subr.mxu0 0.0
    %3195 = vmatpush1.msra.mxu0 0.0
    %3196 = vmatprep.subr.mxu0 0.0
    %3197 = vmatpush1.msra.mxu0 0.0
    %3198 = vmatprep.subr.mxu0 0.0
    %3199 = vmatpush1.msra.mxu0 0.0
    %3200 = vmatprep.subr.mxu0 0.0
    %3201 = vmatpush1.msra.mxu0 0.0
    %3202 = vmatprep.subr.mxu0 0.0
    %3203 = vmatpush1.msra.mxu0 0.0
    %3204 = vmatprep.subr.mxu0 0.0
    %3205 = vmatpush1.msra.mxu0 0.0
    %3206 = vmatprep.subr.mxu0 0.0
    %3207 = vmatpush1.msra.mxu0 0.0
    %3208 = vmatprep.subr.mxu0 0.0
    %3209 = vmatpush1.msra.mxu0 0.0
    %3210 = vmatprep.subr.mxu0 0.0
    %3211 = vmatpush1.msra.mxu0 0.0
    %3212 = vmatprep.subr.mxu0 0.0
    %3213 = vmatpush1.msra.mxu0 0.0
    %3214 = vmatprep.subr.mxu0 0.0
    %3215 = vmatpush1.msra.mxu0 0.0
    %3216 = vmatprep.mubr.f32.mxu0 0.0
    %3217 = vmatmul.mubr.f32.gmra.mrb[0].mxu0 %v3147
    %v3218 = vpop.f32.mrb[0].mxu0
    %v3219 = vadd.f32 %v3139, %v3218
    %v3220 = vpop.f32.mrb[0].mxu0
    %v3221 = vadd.f32 %v3143, %v3220
    %3222 = vmatprep.mubr.f32.mxu0 0.0
    %3223 = vmatmul.mubr.f32.gmra.mrb[0].mxu0 %v3150
    %v3224 = vpop.f32.mrb[0].mxu0
    %v3225 = vadd.f32 %v3139, %v3224
    %v3226 = vpop.f32.mrb[0].mxu0
    %v3227 = vadd.f32 %v3143, %v3226
    %3228 = vdwg.mxu0
    %v3229 = vmul.f32 %v3219, 0.5
    %v3230 = vmul.f32 %v3221, 0.5
    %v3231 = vmul.f32 %v3225, 0.5
    %v3232 = vmul.f32 %v3227, 0.5
    %v3233 = vmul.f32 %v3219, 0.70710677
    %v3234 = vmul.f32 %v3221, 0.70710677
    %v3235 = vmul.f32 %v3225, 0.70710677
    %v3236 = vmul.f32 %v3227, 0.70710677
    %v3237 = vand.u32 2147483647, %v3233
    %v3238 = vand.u32 2147483647, %v3234
    %v3239 = vand.u32 2147483647, %v3235
    %v3240 = vand.u32 2147483647, %v3236
    %v3241 = vmul.f32 %v3237, 0.3275911
    %v3242 = vmul.f32 %v3238, 0.3275911
    %v3243 = vmul.f32 %v3239, 0.3275911
    %v3244 = vmul.f32 %v3240, 0.3275911
    %v3245 = vadd.f32 %v3241, 1.0
    %v3246 = vadd.f32 %v3242, 1.0
    %v3247 = vadd.f32 %v3243, 1.0
    %v3248 = vadd.f32 %v3244, 1.0
    %v3249 = vrcp.pop %v3245
    %v3250 = vmul.f32 1.0, %v3249
    %v3251 = vrcp.pop %v3246
    %v3252 = vmul.f32 1.0, %v3251
    %v3253 = vrcp.pop %v3247
    %v3254 = vmul.f32 1.0, %v3253
    %v3255 = vrcp.pop %v3248
    %v3256 = vmul.f32 1.0, %v3255
    %v3257 = vmul.f32 %v3250, 1.0614054
    %v3258 = vmul.f32 %v3252, 1.0614054
    %v3259 = vmul.f32 %v3254, 1.0614054
    %v3260 = vmul.f32 %v3256, 1.0614054
    %v3261 = vadd.f32 %v3257, -1.4531521
    %v3262 = vadd.f32 %v3258, -1.4531521
    %v3263 = vadd.f32 %v3259, -1.4531521
    %v3264 = vadd.f32 %v3260, -1.4531521
    %v3265 = vmul.f32 %v3261, %v3250
    %v3266 = vmul.f32 %v3262, %v3252
    %v3267 = vmul.f32 %v3263, %v3254
    %v3268 = vmul.f32 %v3264, %v3256
    %v3269 = vadd.f32 %v3265, 1.4214138
    %v3270 = vadd.f32 %v3266, 1.4214138
    %v3271 = vadd.f32 %v3267, 1.4214138
    %v3272 = vadd.f32 %v3268, 1.4214138
    %v3273 = vmul.f32 %v3269, %v3250
    %v3274 = vmul.f32 %v3270, %v3252
    %v3275 = vmul.f32 %v3271, %v3254
    %v3276 = vmul.f32 %v3272, %v3256
    %v3277 = vadd.f32 %v3273, -0.28449672
    %v3278 = vadd.f32 %v3274, -0.28449672
    %v3279 = vadd.f32 %v3275, -0.28449672
    %v3280 = vadd.f32 %v3276, -0.28449672
    %v3281 = vmul.f32 %v3277, %v3250
    %v3282 = vmul.f32 %v3278, %v3252
    %v3283 = vmul.f32 %v3279, %v3254
    %v3284 = vmul.f32 %v3280, %v3256
    %v3285 = vadd.f32 %v3281, 0.2548296
    %v3286 = vadd.f32 %v3282, 0.2548296
    %v3287 = vadd.f32 %v3283, 0.2548296
    %v3288 = vadd.f32 %v3284, 0.2548296
    %v3289 = vmul.f32 %v3285, %v3250
    %v3290 = vmul.f32 %v3286, %v3252
    %v3291 = vmul.f32 %v3287, %v3254
    %v3292 = vmul.f32 %v3288, %v3256
    %v3293 = vsub.f32 0.0, %v3237
    %v3294 = vsub.f32 0.0, %v3238
    %v3295 = vsub.f32 0.0, %v3239
    %v3296 = vsub.f32 0.0, %v3240
    %v3297 = vmul.f32 %v3293, %v3237
    %v3298 = vmul.f32 %v3294, %v3238
    %v3299 = vmul.f32 %v3295, %v3239
    %v3300 = vmul.f32 %v3296, %v3240
    %v3301 = vmul.f32 %v3297, 1.442695
    %v3302 = vpow.pop %v3301
    %v3303 = vmul.f32 %v3298, 1.442695
    %v3304 = vpow.pop %v3303
    %v3305 = vmul.f32 %v3299, 1.442695
    %v3306 = vpow.pop %v3305
    %v3307 = vmul.f32 %v3300, 1.442695
    %v3308 = vpow.pop %v3307
    %v3309 = vmul.f32 %v3289, %v3302
    %v3310 = vmul.f32 %v3290, %v3304
    %v3311 = vmul.f32 %v3291, %v3306
    %v3312 = vmul.f32 %v3292, %v3308
    %v3313 = vsub.f32 1.0, %v3309
    %v3314 = vsub.f32 1.0, %v3310
    %v3315 = vsub.f32 1.0, %v3311
    %v3316 = vsub.f32 1.0, %v3312
    %vm3317 = vcmp.ge.f32.partialorder %v3233, 0.0
    %vm3318 = vcmp.ge.f32.partialorder %v3234, 0.0
    %vm3319 = vcmp.ge.f32.partialorder %v3235, 0.0
    %vm3320 = vcmp.ge.f32.partialorder %v3236, 0.0
    %v3321 = vsub.f32 0.0, %v3313
    %v3322 = vsub.f32 0.0, %v3314
    %v3323 = vsub.f32 0.0, %v3315
    %v3324 = vsub.f32 0.0, %v3316
    %v3325 = vsel %vm3317, %v3313, %v3321
    %v3326 = vsel %vm3318, %v3314, %v3322
    %v3327 = vsel %vm3319, %v3315, %v3323
    %v3328 = vsel %vm3320, %v3316, %v3324
    %v3329 = vadd.f32 %v3325, 1.0
    %v3330 = vadd.f32 %v3326, 1.0
    %v3331 = vadd.f32 %v3327, 1.0
    %v3332 = vadd.f32 %v3328, 1.0
    %v3333 = vmul.f32 %v3229, %v3329
    %v3334 = vmul.f32 %v3230, %v3330
    %v3335 = vmul.f32 %v3231, %v3331
    %v3336 = vmul.f32 %v3232, %v3332
    %s3337 = scalar_lea.vmem %s4, 256
    %v3338 = vld [vmem:[%s3337] sm:$0xff]
    %v3339 = vld [vmem:[%s3337 + $0x8] sm:$0xff]
    %v3340 = vld [vmem:[%s3337 + $0x10] sm:$0xff]
    %v3341 = vld [vmem:[%s3337 + $0x18] sm:$0xff]
    %v3342 = vld [vmem:[%s3337 + $0x20] sm:$0xff]
    %v3343 = vld [vmem:[%s3337 + $0x28] sm:$0xff]
    %v3344 = vld [vmem:[%s3337 + $0x30] sm:$0xff]
    %v3345 = vld [vmem:[%s3337 + $0x38] sm:$0xff]
    %v3346 = vld [vmem:[%s3337 + $0x40] sm:$0xff]
    %v3347 = vld [vmem:[%s3337 + $0x48] sm:$0xff]
    %v3348 = vld [vmem:[%s3337 + $0x50] sm:$0xff]
    %v3349 = vld [vmem:[%s3337 + $0x58] sm:$0xff]
    %v3350 = vld [vmem:[%s3337 + $0x60] sm:$0xff]
    %v3351 = vld [vmem:[%s3337 + $0x68] sm:$0xff]
    %v3352 = vld [vmem:[%s3337 + $0x70] sm:$0xff]
    %v3353 = vld [vmem:[%s3337 + $0x78] sm:$0xff]
    %v3354 = vld [vmem:[%s3337 + $0x80] sm:$0xff]
    %v3355 = vld [vmem:[%s3337 + $0x88] sm:$0xff]
    %v3356 = vld [vmem:[%s3337 + $0x90] sm:$0xff]
    %v3357 = vld [vmem:[%s3337 + $0x98] sm:$0xff]
    %v3358 = vld [vmem:[%s3337 + $0xa0] sm:$0xff]
    %v3359 = vld [vmem:[%s3337 + $0xa8] sm:$0xff]
    %v3360 = vld [vmem:[%s3337 + $0xb0] sm:$0xff]
    %v3361 = vld [vmem:[%s3337 + $0xb8] sm:$0xff]
    %v3362 = vld [vmem:[%s3337 + $0xc0] sm:$0xff]
    %v3363 = vld [vmem:[%s3337 + $0xc8] sm:$0xff]
    %v3364 = vld [vmem:[%s3337 + $0xd0] sm:$0xff]
    %v3365 = vld [vmem:[%s3337 + $0xd8] sm:$0xff]
    %v3366 = vld [vmem:[%s3337 + $0xe0] sm:$0xff]
    %v3367 = vld [vmem:[%s3337 + $0xe8] sm:$0xff]
    %v3368 = vld [vmem:[%s3337 + $0xf0] sm:$0xff]
    %v3369 = vld [vmem:[%s3337 + $0xf8] sm:$0xff]
    %3370 = vmatprep.subr.mxu0 0.0
    %3371 = vmatpush1.msra.mxu0 %v3338
    %3372 = vmatprep.subr.mxu0 0.0
    %3373 = vmatpush1.msra.mxu0 %v3339
    %3374 = vmatprep.subr.mxu0 0.0
    %3375 = vmatpush1.msra.mxu0 %v3340
    %3376 = vmatprep.subr.mxu0 0.0
    %3377 = vmatpush1.msra.mxu0 %v3341
    %3378 = vmatprep.subr.mxu0 0.0
    %3379 = vmatpush1.msra.mxu0 %v3342
    %3380 = vmatprep.subr.mxu0 0.0
    %3381 = vmatpush1.msra.mxu0 %v3343
    %3382 = vmatprep.subr.mxu0 0.0
    %3383 = vmatpush1.msra.mxu0 %v3344
    %3384 = vmatprep.subr.mxu0 0.0
    %3385 = vmatpush1.msra.mxu0 %v3345
    %3386 = vmatprep.subr.mxu0 0.0
    %3387 = vmatpush1.msra.mxu0 %v3346
    %3388 = vmatprep.subr.mxu0 0.0
    %3389 = vmatpush1.msra.mxu0 %v3347
    %3390 = vmatprep.subr.mxu0 0.0
    %3391 = vmatpush1.msra.mxu0 %v3348
    %3392 = vmatprep.subr.mxu0 0.0
    %3393 = vmatpush1.msra.mxu0 %v3349
    %3394 = vmatprep.subr.mxu0 0.0
    %3395 = vmatpush1.msra.mxu0 %v3350
    %3396 = vmatprep.subr.mxu0 0.0
    %3397 = vmatpush1.msra.mxu0 %v3351
    %3398 = vmatprep.subr.mxu0 0.0
    %3399 = vmatpush1.msra.mxu0 %v3352
    %3400 = vmatprep.subr.mxu0 0.0
    %3401 = vmatpush1.msra.mxu0 %v3353
    %3402 = vmatprep.subr.mxu0 0.0
    %3403 = vmatpush1.msra.mxu0 %v3354
    %3404 = vmatprep.subr.mxu0 0.0
    %3405 = vmatpush1.msra.mxu0 %v3355
    %3406 = vmatprep.subr.mxu0 0.0
    %3407 = vmatpush1.msra.mxu0 %v3356
    %3408 = vmatprep.subr.mxu0 0.0
    %3409 = vmatpush1.msra.mxu0 %v3357
    %3410 = vmatprep.subr.mxu0 0.0
    %3411 = vmatpush1.msra.mxu0 %v3358
    %3412 = vmatprep.subr.mxu0 0.0
    %3413 = vmatpush1.msra.mxu0 %v3359
    %3414 = vmatprep.subr.mxu0 0.0
    %3415 = vmatpush1.msra.mxu0 %v3360
    %3416 = vmatprep.subr.mxu0 0.0
    %3417 = vmatpush1.msra.mxu0 %v3361
    %3418 = vmatprep.subr.mxu0 0.0
    %3419 = vmatpush1.msra.mxu0 %v3362
    %3420 = vmatprep.subr.mxu0 0.0
    %3421 = vmatpush1.msra.mxu0 %v3363
    %3422 = vmatprep.subr.mxu0 0.0
    %3423 = vmatpush1.msra.mxu0 %v3364
    %3424 = vmatprep.subr.mxu0 0.0
    %3425 = vmatpush1.msra.mxu0 %v3365
    %3426 = vmatprep.subr.mxu0 0.0
    %3427 = vmatpush1.msra.mxu0 %v3366
    %3428 = vmatprep.subr.mxu0 0.0
    %3429 = vmatpush1.msra.mxu0 %v3367
    %3430 = vmatprep.subr.mxu0 0.0
    %3431 = vmatpush1.msra.mxu0 %v3368
    %3432 = vmatprep.subr.mxu0 0.0
    %3433 = vmatpush1.msra.mxu0 %v3369
    %3434 = vmatprep.mubr.f32.mxu0 %v3334
    %3435 = vmatmul.mubr.f32.gmra.mrb[0].mxu0 %v3333
    %v3436 = vpop.f32.mrb[0].mxu0
    %v3437 = vadd.f32 0.0, %v3436
    %v3438 = vpop.f32.mrb[0].mxu0
    %3439 = vmatprep.mubr.f32.mxu0 %v3336
    %3440 = vmatmul.mubr.f32.gmra.mrb[0].mxu0 %v3335
    %v3441 = vpop.f32.mrb[0].mxu0
    %v3442 = vadd.f32 0.0, %v3441
    %v3443 = vpop.f32.mrb[0].mxu0
    %3444 = vdwg.mxu0
    %v3445 = vadd.f32 %v3074, %v3437
    %v3446 = vadd.f32 %v3075, %v3442
    %v3447 = vld [vmem:[%s6 + $0x13] sm:$0x1]
    %v3448 = vlaneseq
    %v3449 = vshrl.u32 %v3448, 7
    %v3450 = vsub.s32 0, %v3449
    %v3451 = vrot.slane %v3447, %v3450
    %v3452 = vadd.f32 %v3445, %v3451
    %v3453 = vadd.f32 %v3446, %v3451
    %v3455 = vrot.slane %v3453, 7
    %vm3457 = vcmask 1040384
    %v3458 = vsel %vm3457, %v3452, %v3455
    %v3459 = vld [vmem:[%s6 + $0x14] sm:$0x1]
    %v3460 = vld [vmem:[%s6 + $0x15] sm:$0x1]
    %vm3461 = vcmask 517120
    %v3462 = vsel %vm3461, %v3458, 0.0
    %3463 = vadd.xlane.f32.xlu0 %v3462
    %v3464 = vpop.xlane.xlu0 %3463
    %v3465 = vmul.f32 %v3464, %v1387
    %v3466 = vsub.f32 %v3458, %v3465
    %v3467 = vmul.f32 %v3466, %v3466
    %v3468 = vsel %vm3461, %v3467, 0.0
    %3469 = vadd.xlane.f32.xlu0 %v3468
    %v3470 = vpop.xlane.xlu0 %3469
    %v3471 = vmul.f32 %v3470, %v1387
    %v3472 = vadd.f32 %v3471, 1e-06
    %v3473 = vrsqrt.pop %v3472
    %v3474 = vmul.f32 %v3466, %v3473
    %v3475 = vlaneseq
    %v3476 = vshrl.u32 %v3475, 7
    %v3477 = vsub.s32 0, %v3476
    %v3478 = vrot.slane %v3459, %v3477
    %v3479 = vmul.f32 %v3474, %v3478
    %v3480 = vlaneseq
    %v3481 = vshrl.u32 %v3480, 7
    %v3482 = vsub.s32 0, %v3481
    %v3483 = vrot.slane %v3460, %v3482
    %v3484 = vadd.f32 %v3479, %v3483
    %v3485 = vld [vmem:[%s7 + $0x4] ss:$0 sm:$0xff]
    %v3486 = vld [vmem:[%s5] sm:$0xff]
    %v3487 = vld [vmem:[%s5 + $0x8] sm:$0xff]
    %v3488 = vld [vmem:[%s5 + $0x10] sm:$0xff]
    %v3489 = vld [vmem:[%s5 + $0x18] sm:$0xff]
    %v3490 = vld [vmem:[%s5 + $0x20] sm:$0xff]
    %v3491 = vld [vmem:[%s5 + $0x28] sm:$0xff]
    %v3492 = vld [vmem:[%s5 + $0x30] sm:$0xff]
    %v3493 = vld [vmem:[%s5 + $0x38] sm:$0xff]
    %v3495 = vsel %vm1380, %v3484, 0
    %3497 = vmatprep.subr.mxu0 0.0
    %3498 = vmatpush1.msra.mxu0 %v3486
    %3499 = vmatprep.subr.mxu0 0.0
    %3500 = vmatpush1.msra.mxu0 %v3487
    %3501 = vmatprep.subr.mxu0 0.0
    %3502 = vmatpush1.msra.mxu0 %v3488
    %3503 = vmatprep.subr.mxu0 0.0
    %3504 = vmatpush1.msra.mxu0 %v3489
    %3505 = vmatprep.subr.mxu0 0.0
    %3506 = vmatpush1.msra.mxu0 %v3490
    %3507 = vmatprep.subr.mxu0 0.0
    %3508 = vmatpush1.msra.mxu0 %v3491
    %3509 = vmatprep.subr.mxu0 0.0
    %3510 = vmatpush1.msra.mxu0 %v3492
    %3511 = vmatprep.subr.mxu0 0.0
    %3512 = vmatpush1.msra.mxu0 %v3493
    %3513 = vmatprep.subr.mxu0 0.0
    %3514 = vmatpush1.msra.mxu0 0.0
    %3515 = vmatprep.subr.mxu0 0.0
    %3516 = vmatpush1.msra.mxu0 0.0
    %3517 = vmatprep.subr.mxu0 0.0
    %3518 = vmatpush1.msra.mxu0 0.0
    %3519 = vmatprep.subr.mxu0 0.0
    %3520 = vmatpush1.msra.mxu0 0.0
    %3521 = vmatprep.subr.mxu0 0.0
    %3522 = vmatpush1.msra.mxu0 0.0
    %3523 = vmatprep.subr.mxu0 0.0
    %3524 = vmatpush1.msra.mxu0 0.0
    %3525 = vmatprep.subr.mxu0 0.0
    %3526 = vmatpush1.msra.mxu0 0.0
    %3527 = vmatprep.subr.mxu0 0.0
    %3528 = vmatpush1.msra.mxu0 0.0
    %3529 = vmatprep.subr.mxu0 0.0
    %3530 = vmatpush1.msra.mxu0 0.0
    %3531 = vmatprep.subr.mxu0 0.0
    %3532 = vmatpush1.msra.mxu0 0.0
    %3533 = vmatprep.subr.mxu0 0.0
    %3534 = vmatpush1.msra.mxu0 0.0
    %3535 = vmatprep.subr.mxu0 0.0
    %3536 = vmatpush1.msra.mxu0 0.0
    %3537 = vmatprep.subr.mxu0 0.0
    %3538 = vmatpush1.msra.mxu0 0.0
    %3539 = vmatprep.subr.mxu0 0.0
    %3540 = vmatpush1.msra.mxu0 0.0
    %3541 = vmatprep.subr.mxu0 0.0
    %3542 = vmatpush1.msra.mxu0 0.0
    %3543 = vmatprep.subr.mxu0 0.0
    %3544 = vmatpush1.msra.mxu0 0.0
    %3545 = vmatprep.subr.mxu0 0.0
    %3546 = vmatpush1.msra.mxu0 0.0
    %3547 = vmatprep.subr.mxu0 0.0
    %3548 = vmatpush1.msra.mxu0 0.0
    %3549 = vmatprep.subr.mxu0 0.0
    %3550 = vmatpush1.msra.mxu0 0.0
    %3551 = vmatprep.subr.mxu0 0.0
    %3552 = vmatpush1.msra.mxu0 0.0
    %3553 = vmatprep.subr.mxu0 0.0
    %3554 = vmatpush1.msra.mxu0 0.0
    %3555 = vmatprep.subr.mxu0 0.0
    %3556 = vmatpush1.msra.mxu0 0.0
    %3557 = vmatprep.subr.mxu0 0.0
    %3558 = vmatpush1.msra.mxu0 0.0
    %3559 = vmatprep.subr.mxu0 0.0
    %3560 = vmatpush1.msra.mxu0 0.0
    %3561 = vmatprep.mubr.f32.mxu0 0.0
    %3562 = vmatmul.mubr.f32.gmra.mrb[0].mxu0 %v3495
    %v3563 = vpop.f32.mrb[0].mxu0
    %v3564 = vadd.f32 %v3485, %v3563
    %v3565 = vpop.f32.mrb[0].mxu0
    %3566 = vdwg.mxu0
    %3567 = vst [vmem:[#allocation2] sm:$0x3] %v3564
    // Predicated region
    $region34: #{tiny_vit_forward.1} parent=1 // pred_check
      _
    $region35: #{tiny_vit_forward.1} parent=1 // pred_check_branch
      %3569 = sbr.rel (0) target = $region37
    $region36: #{tiny_vit_forward.1} parent=1 // pred_region
      %s3571 = ssub.s32 32, 32
      %3572 = vsyncadd [#allocation3], %s3571
      %s3574 = sshll.u32 [#allocation2], 4
      %s3575 = int_to_ptr.vmem [resolvable:$true] %s3574
      %3577 = dma.vmem_to_hbm [thread:$0]  %s3575, 32, %s8, [#allocation3]
    $region37: #{tiny_vit_forward.1} parent=1 // pred_fallthru
      _
    // Predicated region
    $region38: #{tiny_vit_forward.1} parent=1 // pred_check
      _
    $region39: #{tiny_vit_forward.1} parent=1 // pred_check_branch
      %3579 = sbr.rel (0) target = $region41
    $region40: #{tiny_vit_forward.1} parent=1 // pred_region
      %3580 = dma.done [#allocation3], 32
    $region41: #{tiny_vit_forward.1} parent=1 // pred_fallthru
      _
    %3581 = vsyncpa [#allocation3], 1

</llo_original>
